<compile_context>
chip_gen: v6e
topology: v6e:2x2x1
jax: 0.10.0
libtpu: 0.0.40
codegen_flags: <defaults>
</compile_context>

<pallas_src>
import functools

import jax
import jax.numpy as jnp
from jax import lax
from jax.experimental import pallas as pl
from jax.experimental.pallas import tpu as pltpu

EPS = 1e-5
LANE = 128
CONV_ROW_TILE = 4     # output rows per conv grid step (small to exercise the
                      # accumulation path at toy sizes; tune up for real sizes)
ELEM_ROW_TILE = 512   # rows per elementwise grid step
POOL_ROW_TILE = 8


# ----------------------------- small helpers -----------------------------

def _round_up(x, m):
    return ((x + m - 1) // m) * m


def _largest_divisor_leq(x, target):
    for d in range(min(x, target), 0, -1):
        if x % d == 0:
            return d
    return 1


def _pad_vec(v, cp):
    return jnp.pad(v.astype(jnp.float32), (0, cp - v.shape[0])).reshape(1, cp)


def _space_to_depth(x_nhwc, sh, sw):
    n, h, w, c = x_nhwc.shape
    hq, wq = h // sh, w // sw
    x = x_nhwc.reshape(n, hq, sh, wq, sw, c)
    x = jnp.transpose(x, (0, 1, 3, 2, 4, 5))
    return x.reshape(n, hq, wq, sh * sw * c)


def _w_macro_taps(w_oihw, sh, sw, cin_phase, cout_pad):
    """(Cout,Cin,kh,kw) -> (khq*kwq, sh*sw*cin_phase, cout_pad) macro-tap mats."""
    co, ci, kh, kw = w_oihw.shape
    khq, kwq = (kh + sh - 1) // sh, (kw + sw - 1) // sw
    wt = jnp.transpose(w_oihw, (2, 3, 1, 0)).astype(jnp.float32)   # (kh,kw,ci,co)
    wq = jnp.zeros((khq, kwq, sh, sw, cin_phase, cout_pad), jnp.float32)
    for di in range(kh):
        for dj in range(kw):
            qi, pi = divmod(di, sh)
            qj, pj = divmod(dj, sw)
            wq = wq.at[qi, qj, pi, pj, :ci, :co].set(wt[di, dj])
    return wq.reshape(khq * kwq, sh * sw * cin_phase, cout_pad)


# ----------------------------- Pallas kernels -----------------------------

def _conv_stats_kernel(xq_ref, w_ref, out_ref, sum_ref, ssq_ref, *,
                       khq, kwq, th_o, wo, cp):
    # Fused conv (macro-tap matmuls on the MXU) + per-channel partial stats.
    m = pl.program_id(1)

    @pl.when(m == 0)
    def _():
        sum_ref[...] = jnp.zeros_like(sum_ref)
        ssq_ref[...] = jnp.zeros_like(ssq_ref)

    h_base = m * th_o
    acc = jnp.zeros((th_o * wo, cp), jnp.float32)
    for qi in range(khq):
        for qj in range(kwq):
            patch = xq_ref[0, pl.ds(h_base + qi, th_o), pl.ds(qj, wo), :]
            patch = patch.reshape(th_o * wo, patch.shape[-1])
            acc = acc + jnp.dot(patch, w_ref[qi * kwq + qj],
                                preferred_element_type=jnp.float32)

    out_ref[...] = acc.reshape(1, th_o, wo, cp)
    sum_ref[...] += jnp.sum(acc, axis=0, keepdims=True)[None]
    ssq_ref[...] += jnp.sum(acc * acc, axis=0, keepdims=True)[None]


def _bn_act_kernel(x_ref, mean_ref, var_ref, gamma_ref, beta_ref, o_ref, *, relu):
    inv = lax.rsqrt(var_ref[...] + EPS)
    y = (x_ref[...] - mean_ref[...]) * inv * gamma_ref[...] + beta_ref[...]
    if relu:
        y = jnp.maximum(y, 0.0)
    o_ref[...] = y.astype(o_ref.dtype)


def _res_fuse_kernel(o2_ref, m2_ref, v2_ref, g2_ref, b2_ref,
                     res_ref, md_ref, vd_ref, gd_ref, bd_ref,
                     y_ref, sum_ref, ssq_ref, *, identity_res):
    # bn2(o2) + [bn_d(res) or identity] -> add -> relu, plus stats of the
    # result (partial sum / sumsq) for the outer BatchNorm.
    i = pl.program_id(0)

    @pl.when(i == 0)
    def _():
        sum_ref[...] = jnp.zeros_like(sum_ref)
        ssq_ref[...] = jnp.zeros_like(ssq_ref)

    y = (o2_ref[...] - m2_ref[...]) * lax.rsqrt(v2_ref[...] + EPS) \
        * g2_ref[...] + b2_ref[...]
    if identity_res:
        r = res_ref[...].astype(jnp.float32)
    else:
        r = (res_ref[...] - md_ref[...]) * lax.rsqrt(vd_ref[...] + EPS) \
            * gd_ref[...] + bd_ref[...]
    y = jnp.maximum(y + r, 0.0)
    y_ref[...] = y
    sum_ref[...] += jnp.sum(y, axis=0, keepdims=True)
    ssq_ref[...] += jnp.sum(y * y, axis=0, keepdims=True)


def _bn_relu_pool_kernel(yq_ref, mean_ref, var_ref, gamma_ref, beta_ref, o_ref, *,
                         n_phase, cp, pool_type):
    # Outer bn + relu, then non-overlapping pooling over the space-to-depth
    # phase blocks (128-aligned lane slices only).
    inv = lax.rsqrt(var_ref[...] + EPS)
    mu, g, b = mean_ref[...], gamma_ref[...], beta_ref[...]
    acc = None
    for p in range(n_phase):
        v = yq_ref[0, :, :, p * cp:(p + 1) * cp]
        v = jnp.maximum((v - mu) * inv * g + b, 0.0)
        if acc is None:
            acc = v
        elif pool_type == "max2d":
            acc = jnp.maximum(acc, v)
        else:
            acc = acc + v
    if pool_type == "ave2d":
        acc = acc / n_phase
    o_ref[...] = acc[None]


# ----------------------------- pallas_call wrappers -----------------------------

def conv_bn_stats(xq, w_taps, *, khq, kwq, ho, wo, row_tile=CONV_ROW_TILE):
    """Fused conv + per-channel batch-stat partials. Returns (out, mean, var)."""
    n, hq, wq_, kc = xq.shape
    ntap, kc2, cp = w_taps.shape
    assert ntap == khq * kwq and kc2 == kc
    th_o = _largest_divisor_leq(ho, row_tile)
    n_m = ho // th_o

    flops = 2 * n * ho * wo * ntap * kc * cp
    bytes_accessed = (xq.size * xq.dtype.itemsize
                      + w_taps.size * w_taps.dtype.itemsize
                      + n * ho * wo * cp * 4)

    kernel = functools.partial(_conv_stats_kernel, khq=khq, kwq=kwq,
                               th_o=th_o, wo=wo, cp=cp)
    out, s, q = pl.pallas_call(
        kernel,
        grid=(n, n_m),
        in_specs=[
            pl.BlockSpec((1, hq, wq_, kc), lambda b, m: (b, 0, 0, 0)),
            pl.BlockSpec((ntap, kc, cp), lambda b, m: (0, 0, 0)),
        ],
        out_specs=(
            pl.BlockSpec((1, th_o, wo, cp), lambda b, m: (b, m, 0, 0)),
            pl.BlockSpec((1, 8, cp), lambda b, m: (b, 0, 0)),
            pl.BlockSpec((1, 8, cp), lambda b, m: (b, 0, 0)),
        ),
        out_shape=(
            jax.ShapeDtypeStruct((n, ho, wo, cp), jnp.float32),
            jax.ShapeDtypeStruct((n, 8, cp), jnp.float32),
            jax.ShapeDtypeStruct((n, 8, cp), jnp.float32),
        ),
        compiler_params=pltpu.CompilerParams(
            dimension_semantics=("parallel", "arbitrary"),
            vmem_limit_bytes=32 * 1024 * 1024),
        cost_estimate=pl.CostEstimate(flops=flops, transcendentals=0,
                                      bytes_accessed=bytes_accessed),
    )(xq, w_taps)

    count = jnp.float32(n * ho * wo)
    mean = jnp.sum(s[:, 0, :], axis=0) / count
    var = jnp.sum(q[:, 0, :], axis=0) / count - mean * mean
    return out, mean.reshape(1, cp), var.reshape(1, cp)


def bn_act(x2d, mean, var, gamma, beta, *, relu, out_dtype,
           row_tile=ELEM_ROW_TILE):
    m, cp = x2d.shape
    tm = _largest_divisor_leq(m, row_tile)
    return pl.pallas_call(
        functools.partial(_bn_act_kernel, relu=relu),
        grid=(m // tm,),
        in_specs=[pl.BlockSpec((tm, cp), lambda i: (i, 0))]
        + [pl.BlockSpec((1, cp), lambda i: (0, 0))] * 4,
        out_specs=pl.BlockSpec((tm, cp), lambda i: (i, 0)),
        out_shape=jax.ShapeDtypeStruct((m, cp), out_dtype),
        compiler_params=pltpu.CompilerParams(dimension_semantics=("parallel",)),
    )(x2d, mean, var, gamma, beta)


def res_fuse(o2, m2, v2, g2, b2, res, md, vd, gd, bd, *, identity_res,
             row_tile=ELEM_ROW_TILE):
    m, cp = o2.shape
    tm = _largest_divisor_leq(m, row_tile)
    y, s, q = pl.pallas_call(
        functools.partial(_res_fuse_kernel, identity_res=identity_res),
        grid=(m // tm,),
        in_specs=[pl.BlockSpec((tm, cp), lambda i: (i, 0))]
        + [pl.BlockSpec((1, cp), lambda i: (0, 0))] * 4
        + [pl.BlockSpec((tm, cp), lambda i: (i, 0))]
        + [pl.BlockSpec((1, cp), lambda i: (0, 0))] * 4,
        out_specs=(pl.BlockSpec((tm, cp), lambda i: (i, 0)),
                   pl.BlockSpec((8, cp), lambda i: (0, 0)),
                   pl.BlockSpec((8, cp), lambda i: (0, 0))),
        out_shape=(jax.ShapeDtypeStruct((m, cp), jnp.float32),
                   jax.ShapeDtypeStruct((8, cp), jnp.float32),
                   jax.ShapeDtypeStruct((8, cp), jnp.float32)),
        compiler_params=pltpu.CompilerParams(dimension_semantics=("arbitrary",)),
    )(o2, m2, v2, g2, b2, res, md, vd, gd, bd)
    count = jnp.float32(m)
    mean = s[0] / count
    var = q[0] / count - mean * mean
    return y, mean.reshape(1, cp), var.reshape(1, cp)


def bn_relu_pool(y_nhwc, mean, var, gamma, beta, *, pool_type, pool_kernel,
                 pool_stride, row_tile=POOL_ROW_TILE):
    # TODO(synk): overlapping pooling (stride != kernel) not implemented.
    assert tuple(pool_kernel) == tuple(pool_stride), \
        "only non-overlapping pooling (kernel == stride) is implemented"
    n, ho, wo, cp = y_nhwc.shape
    pkh, pkw = pool_kernel
    hpo, wpo = (ho - pkh) // pkh + 1, (wo - pkw) // pkw + 1
    yq = _space_to_depth(y_nhwc[:, :hpo * pkh, :wpo * pkw, :], pkh, pkw)
    n_phase = pkh * pkw
    thp = _largest_divisor_leq(hpo, row_tile)
    kernel = functools.partial(_bn_relu_pool_kernel, n_phase=n_phase, cp=cp,
                               pool_type=pool_type)
    return pl.pallas_call(
        kernel,
        grid=(n, hpo // thp),
        in_specs=[pl.BlockSpec((1, thp, wpo, n_phase * cp),
                               lambda b, r: (b, r, 0, 0))]
        + [pl.BlockSpec((1, cp), lambda b, r: (0, 0))] * 4,
        out_specs=pl.BlockSpec((1, thp, wpo, cp), lambda b, r: (b, r, 0, 0)),
        out_shape=jax.ShapeDtypeStruct((n, hpo, wpo, cp), jnp.float32),
        compiler_params=pltpu.CompilerParams(
            dimension_semantics=("parallel", "parallel")),
    )(yq, mean, var, gamma, beta)


# ----------------------------- full forward -----------------------------

def resnet_block_forward(x_nchw, params, *, kernel_size, stride, padding,
                         pool_type, pool_kernel, pool_stride, drop_rate,
                         block_type="ResNetV1"):
    if block_type != "ResNetV1":
        # TODO(synk): ResNetV2 variant not implemented.
        raise NotImplementedError("only block_type='ResNetV1' is implemented")
    del drop_rate  # TODO(synk): train-mode dropout not implemented (eval-mode identity).

    kh, kw = kernel_size
    sh, sw = stride
    ph, pw = padding

    x = jnp.transpose(x_nchw, (0, 2, 3, 1)).astype(jnp.float32)   # NHWC
    n, h, w, cin = x.shape
    cout = params["w1"].shape[0]
    cp = _round_up(cout, LANE)

    # ---- conv1 (kh x kw, stride s, pad p) + bn1 batch stats ----------------
    ho = (h + 2 * ph - kh) // sh + 1
    wo = (w + 2 * pw - kw) // sw + 1
    hp = _round_up(h + 2 * ph, sh)
    wp = _round_up(w + 2 * pw, sw)
    xp = jnp.pad(x, ((0, 0), (ph, hp - h - ph), (pw, wp - w - pw), (0, 0)))
    xq1 = _space_to_depth(xp, sh, sw).astype(jnp.bfloat16)
    w1 = _w_macro_taps(params["w1"], sh, sw, cin, cp).astype(jnp.bfloat16)
    khq, kwq = (kh + sh - 1) // sh, (kw + sw - 1) // sw
    o1, m1, v1 = conv_bn_stats(xq1, w1, khq=khq, kwq=kwq, ho=ho, wo=wo)

    # ---- bn1 + relu (tiled lane-dense pass); bf16 output feeds conv2 -------
    a1 = bn_act(o1.reshape(n * ho * wo, cp), m1, v1,
                _pad_vec(params["g1"], cp), _pad_vec(params["b1"], cp),
                relu=True, out_dtype=jnp.bfloat16)
    a1 = a1.reshape(n, ho, wo, cp)

    # ---- conv2 (kh x kw, stride 1, pad p) + bn2 batch stats ----------------
    ho2 = ho + 2 * ph - kh + 1
    wo2 = wo + 2 * pw - kw + 1
    a1p = jnp.pad(a1, ((0, 0), (ph, ph), (pw, pw), (0, 0)))
    w2 = _w_macro_taps(params["w2"], 1, 1, cp, cp).astype(jnp.bfloat16)
    o2, m2, v2 = conv_bn_stats(a1p, w2, khq=kh, kwq=kw, ho=ho2, wo=wo2)

    # ---- downsample path (1x1 conv stride s + bn) or identity --------------
    has_downsample = (sh, sw) != (1, 1) or cin != cout
    if has_downsample:
        xs = x[:, ::sh, ::sw, :][:, :ho, :wo, :].astype(jnp.bfloat16)
        wd = _w_macro_taps(params["wd"], 1, 1, cin, cp).astype(jnp.bfloat16)
        od, md, vd = conv_bn_stats(xs, wd, khq=1, kwq=1, ho=ho, wo=wo)
        res = od.reshape(n * ho * wo, cp)
        gd, bd = _pad_vec(params["gd"], cp), _pad_vec(params["bd"], cp)
    else:
        res = jnp.pad(x, ((0, 0), (0, 0), (0, 0), (0, cp - cin)))
        res = res.reshape(n * h * w, cp)
        md = jnp.zeros((1, cp), jnp.float32)
        vd = jnp.ones((1, cp), jnp.float32)
        gd = jnp.ones((1, cp), jnp.float32)
        bd = jnp.zeros((1, cp), jnp.float32)

    assert (ho2, wo2) == (ho, wo), "residual / conv2 spatial shapes must match"

    # ---- fused: bn2 + (downsample bn) + residual add + relu + bn3 stats ----
    y1, m3, v3 = res_fuse(o2.reshape(n * ho2 * wo2, cp), m2, v2,
                          _pad_vec(params["g2"], cp), _pad_vec(params["b2"], cp),
                          res, md, vd, gd, bd,
                          identity_res=not has_downsample)
    y1 = y1.reshape(n, ho2, wo2, cp)

    # ---- outer bn + relu + pooling (+ eval-mode dropout = identity) --------
    pooled = bn_relu_pool(y1, m3, v3,
                          _pad_vec(params["g3"], cp), _pad_vec(params["b3"], cp),
                          pool_type=pool_type, pool_kernel=pool_kernel,
                          pool_stride=pool_stride)

    out = pooled[..., :cout]
    return jnp.transpose(out, (0, 3, 1, 2))   # back to NCHW


# ----------------------------- pure-JAX reference -----------------------------

def ref_forward(x, params, *, stride, padding, pool_type, pool_kernel, pool_stride):
    def conv(y, wgt, s, p):
        return lax.conv_general_dilated(
            y.astype(jnp.bfloat16), wgt.astype(jnp.bfloat16),
            window_strides=s, padding=[(p[0], p[0]), (p[1], p[1])],
            dimension_numbers=("NCHW", "OIHW", "NCHW"),
            preferred_element_type=jnp.float32)

    def bn(y, g, b):
        mean = jnp.mean(y, axis=(0, 2, 3), keepdims=True)
        var = jnp.mean((y - mean) ** 2, axis=(0, 2, 3), keepdims=True)
        return ((y - mean) * lax.rsqrt(var + EPS) * g.reshape(1, -1, 1, 1)
                + b.reshape(1, -1, 1, 1))

    out = jax.nn.relu(bn(conv(x, params["w1"], stride, padding),
                         params["g1"], params["b1"]))
    out = bn(conv(out, params["w2"], (1, 1), padding), params["g2"], params["b2"])
    ident = bn(conv(x, params["wd"], stride, (0, 0)), params["gd"], params["bd"])
    y = jax.nn.relu(out + ident)
    y = jax.nn.relu(bn(y, params["g3"], params["b3"]))

    n, c, h, w = y.shape
    pkh, pkw = pool_kernel
    psh, psw = pool_stride
    hpo, wpo = (h - pkh) // psh + 1, (w - pkw) // psw + 1
    yc = y[:, :, :hpo * psh, :wpo * psw].reshape(n, c, hpo, psh, wpo, psw)
    y = yc.max(axis=(3, 5)) if pool_type == "max2d" else yc.mean(axis=(3, 5))
    return y   # dropout: eval-mode identity


# ----------------------------- main -----------------------------

if __name__ == "__main__":
    key = jax.random.PRNGKey(0)
    keys = jax.random.split(key, 11)

    resnet_dict = {"in_channels": 4, "out_channels": 8, "kernel": (3, 3),
                   "stride": (2, 2), "padding": (1, 1)}
    pooling_dict = {"pooling_type": "max2d", "pooling_kernel": (2, 2),
                    "pooling_stride": (2, 2)}
    dropout_dict = {"drop_rate": 0.1}

    cin, cout = resnet_dict["in_channels"], resnet_dict["out_channels"]
    x = jax.random.normal(keys[10], (2, cin, 16, 16), dtype=jnp.float32)

    params = {
        "w1": 0.1 * jax.random.normal(keys[0], (cout, cin, 3, 3), jnp.float32),
        "w2": 0.1 * jax.random.normal(keys[1], (cout, cout, 3, 3), jnp.float32),
        "wd": 0.1 * jax.random.normal(keys[2], (cout, cin, 1, 1), jnp.float32),
        "g1": 1.0 + 0.1 * jax.random.normal(keys[3], (cout,), jnp.float32),
        "b1": 0.1 * jax.random.normal(keys[4], (cout,), jnp.float32),
        "g2": 1.0 + 0.1 * jax.random.normal(keys[5], (cout,), jnp.float32),
        "b2": 0.1 * jax.random.normal(keys[6], (cout,), jnp.float32),
        "gd": 1.0 + 0.1 * jax.random.normal(keys[7], (cout,), jnp.float32),
        "bd": 0.1 * jax.random.normal(keys[8], (cout,), jnp.float32),
        "g3": 1.0 + 0.1 * jax.random.normal(keys[9], (cout,), jnp.float32),
        "b3": jnp.zeros((cout,), jnp.float32),
    }

    fwd = jax.jit(functools.partial(
        resnet_block_forward,
        kernel_size=resnet_dict["kernel"], stride=resnet_dict["stride"],
        padding=resnet_dict["padding"],
        pool_type=pooling_dict["pooling_type"],
        pool_kernel=pooling_dict["pooling_kernel"],
        pool_stride=pooling_dict["pooling_stride"],
        drop_rate=dropout_dict["drop_rate"]))

    out = jax.block_until_ready(fwd(x, params))

    ref = ref_forward(x, params, stride=resnet_dict["stride"],
                      padding=resnet_dict["padding"],
                      pool_type=pooling_dict["pooling_type"],
                      pool_kernel=pooling_dict["pooling_kernel"],
                      pool_stride=pooling_dict["pooling_stride"])

    assert out.shape == ref.shape == (2, cout, 4, 4), (out.shape, ref.shape)
    max_err = float(jnp.max(jnp.abs(out - ref)))
    assert jnp.allclose(out, ref, atol=1e-2, rtol=1e-2), max_err

    print("KERNEL_OK")
</pallas_src>

<mosaic_0001>
module attributes {stable_mosaic.version = 11 : i64} {
  func.func @_conv_stats_kernel(%arg0: i32, %arg1: i32, %arg2: memref<1x9x9x16xbf16, #tpu.memory_space<vmem>>, %arg3: memref<4x16x128xbf16, #tpu.memory_space<vmem>>, %arg4: memref<1x4x8x128xf32, #tpu.memory_space<vmem>>, %arg5: memref<1x8x128xf32, #tpu.memory_space<vmem>>, %arg6: memref<1x8x128xf32, #tpu.memory_space<vmem>>) attributes {dimension_semantics = [#tpu.dimension_semantics<parallel>, #tpu.dimension_semantics<arbitrary>], iteration_bounds = array<i64: 2, 2>, scalar_prefetch = 0 : i64, scratch_operands = 0 : i64, tpu.core_type = #tpu.core_type<tc>, window_params = [{transform_indices = @transform_0, window_bounds = array<i64: 1, 9, 9, 16>}, {pipeline_mode = #tpu.pipeline_mode<synchronous>, transform_indices = @transform_1, window_bounds = array<i64: 4, 16, 128>}, {transform_indices = @transform_2, window_bounds = array<i64: 1, 4, 8, 128>}, {transform_indices = @transform_3, window_bounds = array<i64: 1, 8, 128>}, {transform_indices = @transform_4, window_bounds = array<i64: 1, 8, 128>}]} {
    %c0_i32 = arith.constant 0 : i32
    %0 = arith.cmpi eq, %arg1, %c0_i32 : i32
    %1 = arith.extui %0 : i1 to i32
    %c0_i32_0 = arith.constant 0 : i32
    %2 = arith.cmpi ne, %1, %c0_i32_0 : i32
    scf.if %2 {
      %cst_46 = arith.constant 0.000000e+00 : f32
      %58 = vector.broadcast %cst_46 : f32 to vector<1x8x128xf32>
      %c0_47 = arith.constant 0 : index
      %c0_48 = arith.constant 0 : index
      %c0_49 = arith.constant 0 : index
      %59 = vector.load %arg5[%c0_47, %c0_48, %c0_49] : memref<1x8x128xf32, #tpu.memory_space<vmem>>, vector<1x8x128xf32>
      tpu.vector_store %arg5[%c0_47, %c0_48, %c0_49], %58 {strides = array<i32>} : memref<1x8x128xf32, #tpu.memory_space<vmem>>, vector<1x8x128xf32>,
      %cst_50 = arith.constant 0.000000e+00 : f32
      %60 = vector.broadcast %cst_50 : f32 to vector<1x8x128xf32>
      %c0_51 = arith.constant 0 : index
      %c0_52 = arith.constant 0 : index
      %c0_53 = arith.constant 0 : index
      %61 = vector.load %arg6[%c0_51, %c0_52, %c0_53] : memref<1x8x128xf32, #tpu.memory_space<vmem>>, vector<1x8x128xf32>
      tpu.vector_store %arg6[%c0_51, %c0_52, %c0_53], %60 {strides = array<i32>} : memref<1x8x128xf32, #tpu.memory_space<vmem>>, vector<1x8x128xf32>,
    } else {
    }
    %c4_i32 = arith.constant 4 : i32
    %3 = arith.muli %arg1, %c4_i32 : i32
    %cst = arith.constant 0.000000e+00 : f32
    %4 = vector.broadcast %cst : f32 to vector<32x128xf32>
    %c0_i32_1 = arith.constant 0 : i32
    %5 = arith.addi %3, %c0_i32_1 : i32
    %c0 = arith.constant 0 : index
    %6 = arith.index_cast %5 : i32 to index
    %c0_2 = arith.constant 0 : index
    %c0_3 = arith.constant 0 : index
    %7 = vector.load %arg2[%c0, %6, %c0_2, %c0_3] : memref<1x9x9x16xbf16, #tpu.memory_space<vmem>>, vector<1x4x8x16xbf16>
    %8 = vector.shape_cast %7 : vector<1x4x8x16xbf16> to vector<4x8x16xbf16>
    %9 = vector.shape_cast %8 : vector<4x8x16xbf16> to vector<32x16xbf16>
    %c0_4 = arith.constant 0 : index
    %c0_5 = arith.constant 0 : index
    %c0_6 = arith.constant 0 : index
    %10 = vector.load %arg3[%c0_4, %c0_5, %c0_6] : memref<4x16x128xbf16, #tpu.memory_space<vmem>>, vector<1x16x128xbf16>
    %11 = vector.shape_cast %10 : vector<1x16x128xbf16> to vector<16x128xbf16>
    %cst_7 = arith.constant dense<0.000000e+00> : vector<32x128xf32>
    %12 = tpu.matmul %9, %11, %cst_7 {dimension_numbers = #tpu.dot_dimension_numbers<[1], [0], [0], [1], [0, 0, 1, 1], [], []>} : vector<32x16xbf16>, vector<16x128xbf16>, vector<32x128xf32> -> vector<32x128xf32>
    %13 = arith.addf %4, %12 : vector<32x128xf32>
    %c0_i32_8 = arith.constant 0 : i32
    %14 = arith.addi %3, %c0_i32_8 : i32
    %c0_9 = arith.constant 0 : index
    %15 = arith.index_cast %14 : i32 to index
    %c1 = arith.constant 1 : index
    %c0_10 = arith.constant 0 : index
    %16 = vector.load %arg2[%c0_9, %15, %c1, %c0_10] : memref<1x9x9x16xbf16, #tpu.memory_space<vmem>>, vector<1x4x8x16xbf16>
    %17 = vector.shape_cast %16 : vector<1x4x8x16xbf16> to vector<4x8x16xbf16>
    %18 = vector.shape_cast %17 : vector<4x8x16xbf16> to vector<32x16xbf16>
    %c1_11 = arith.constant 1 : index
    %c0_12 = arith.constant 0 : index
    %c0_13 = arith.constant 0 : index
    %19 = vector.load %arg3[%c1_11, %c0_12, %c0_13] : memref<4x16x128xbf16, #tpu.memory_space<vmem>>, vector<1x16x128xbf16>
    %20 = vector.shape_cast %19 : vector<1x16x128xbf16> to vector<16x128xbf16>
    %cst_14 = arith.constant dense<0.000000e+00> : vector<32x128xf32>
    %21 = tpu.matmul %18, %20, %cst_14 {dimension_numbers = #tpu.dot_dimension_numbers<[1], [0], [0], [1], [0, 0, 1, 1], [], []>} : vector<32x16xbf16>, vector<16x128xbf16>, vector<32x128xf32> -> vector<32x128xf32>
    %22 = arith.addf %13, %21 : vector<32x128xf32>
    %c1_i32 = arith.constant 1 : i32
    %23 = arith.addi %3, %c1_i32 : i32
    %c0_15 = arith.constant 0 : index
    %24 = arith.index_cast %23 : i32 to index
    %c0_16 = arith.constant 0 : index
    %c0_17 = arith.constant 0 : index
    %25 = vector.load %arg2[%c0_15, %24, %c0_16, %c0_17] : memref<1x9x9x16xbf16, #tpu.memory_space<vmem>>, vector<1x4x8x16xbf16>
    %26 = vector.shape_cast %25 : vector<1x4x8x16xbf16> to vector<4x8x16xbf16>
    %27 = vector.shape_cast %26 : vector<4x8x16xbf16> to vector<32x16xbf16>
    %c2 = arith.constant 2 : index
    %c0_18 = arith.constant 0 : index
    %c0_19 = arith.constant 0 : index
    %28 = vector.load %arg3[%c2, %c0_18, %c0_19] : memref<4x16x128xbf16, #tpu.memory_space<vmem>>, vector<1x16x128xbf16>
    %29 = vector.shape_cast %28 : vector<1x16x128xbf16> to vector<16x128xbf16>
    %cst_20 = arith.constant dense<0.000000e+00> : vector<32x128xf32>
    %30 = tpu.matmul %27, %29, %cst_20 {dimension_numbers = #tpu.dot_dimension_numbers<[1], [0], [0], [1], [0, 0, 1, 1], [], []>} : vector<32x16xbf16>, vector<16x128xbf16>, vector<32x128xf32> -> vector<32x128xf32>
    %31 = arith.addf %22, %30 : vector<32x128xf32>
    %c1_i32_21 = arith.constant 1 : i32
    %32 = arith.addi %3, %c1_i32_21 : i32
    %c0_22 = arith.constant 0 : index
    %33 = arith.index_cast %32 : i32 to index
    %c1_23 = arith.constant 1 : index
    %c0_24 = arith.constant 0 : index
    %34 = vector.load %arg2[%c0_22, %33, %c1_23, %c0_24] : memref<1x9x9x16xbf16, #tpu.memory_space<vmem>>, vector<1x4x8x16xbf16>
    %35 = vector.shape_cast %34 : vector<1x4x8x16xbf16> to vector<4x8x16xbf16>
    %36 = vector.shape_cast %35 : vector<4x8x16xbf16> to vector<32x16xbf16>
    %c3 = arith.constant 3 : index
    %c0_25 = arith.constant 0 : index
    %c0_26 = arith.constant 0 : index
    %37 = vector.load %arg3[%c3, %c0_25, %c0_26] : memref<4x16x128xbf16, #tpu.memory_space<vmem>>, vector<1x16x128xbf16>
    %38 = vector.shape_cast %37 : vector<1x16x128xbf16> to vector<16x128xbf16>
    %cst_27 = arith.constant dense<0.000000e+00> : vector<32x128xf32>
    %39 = tpu.matmul %36, %38, %cst_27 {dimension_numbers = #tpu.dot_dimension_numbers<[1], [0], [0], [1], [0, 0, 1, 1], [], []>} : vector<32x16xbf16>, vector<16x128xbf16>, vector<32x128xf32> -> vector<32x128xf32>
    %40 = arith.addf %31, %39 : vector<32x128xf32>
    %41 = vector.shape_cast %40 : vector<32x128xf32> to vector<1x4x8x128xf32>
    %c0_28 = arith.constant 0 : index
    %c0_29 = arith.constant 0 : index
    %c0_30 = arith.constant 0 : index
    %c0_31 = arith.constant 0 : index
    %42 = vector.load %arg4[%c0_28, %c0_29, %c0_30, %c0_31] : memref<1x4x8x128xf32, #tpu.memory_space<vmem>>, vector<1x4x8x128xf32>
    tpu.vector_store %arg4[%c0_28, %c0_29, %c0_30, %c0_31], %41 {strides = array<i32>} : memref<1x4x8x128xf32, #tpu.memory_space<vmem>>, vector<1x4x8x128xf32>,
    %c0_32 = arith.constant 0 : index
    %c0_33 = arith.constant 0 : index
    %c0_34 = arith.constant 0 : index
    %43 = vector.load %arg5[%c0_32, %c0_33, %c0_34] : memref<1x8x128xf32, #tpu.memory_space<vmem>>, vector<1x8x128xf32>
    %cst_35 = arith.constant dense<0.000000e+00> : vector<128xf32>
    %44 = vector.multi_reduction <add>, %40, %cst_35 [0] : vector<32x128xf32> to vector<128xf32>
    %45 = vector.shape_cast %44 : vector<128xf32> to vector<1x128xf32>
    %46 = vector.shape_cast %45 : vector<1x128xf32> to vector<1x1x128xf32>
    %47 = vector.broadcast %46 : vector<1x1x128xf32> to vector<1x8x128xf32>
    %48 = arith.addf %43, %47 : vector<1x8x128xf32>
    %c0_36 = arith.constant 0 : index
    %c0_37 = arith.constant 0 : index
    %c0_38 = arith.constant 0 : index
    %49 = vector.load %arg5[%c0_36, %c0_37, %c0_38] : memref<1x8x128xf32, #tpu.memory_space<vmem>>, vector<1x8x128xf32>
    tpu.vector_store %arg5[%c0_36, %c0_37, %c0_38], %48 {strides = array<i32>} : memref<1x8x128xf32, #tpu.memory_space<vmem>>, vector<1x8x128xf32>,
    %c0_39 = arith.constant 0 : index
    %c0_40 = arith.constant 0 : index
    %c0_41 = arith.constant 0 : index
    %50 = vector.load %arg6[%c0_39, %c0_40, %c0_41] : memref<1x8x128xf32, #tpu.memory_space<vmem>>, vector<1x8x128xf32>
    %51 = arith.mulf %40, %40 : vector<32x128xf32>
    %cst_42 = arith.constant dense<0.000000e+00> : vector<128xf32>
    %52 = vector.multi_reduction <add>, %51, %cst_42 [0] : vector<32x128xf32> to vector<128xf32>
    %53 = vector.shape_cast %52 : vector<128xf32> to vector<1x128xf32>
    %54 = vector.shape_cast %53 : vector<1x128xf32> to vector<1x1x128xf32>
    %55 = vector.broadcast %54 : vector<1x1x128xf32> to vector<1x8x128xf32>
    %56 = arith.addf %50, %55 : vector<1x8x128xf32>
    %c0_43 = arith.constant 0 : index
    %c0_44 = arith.constant 0 : index
    %c0_45 = arith.constant 0 : index
    %57 = vector.load %arg6[%c0_43, %c0_44, %c0_45] : memref<1x8x128xf32, #tpu.memory_space<vmem>>, vector<1x8x128xf32>
    tpu.vector_store %arg6[%c0_43, %c0_44, %c0_45], %56 {strides = array<i32>} : memref<1x8x128xf32, #tpu.memory_space<vmem>>, vector<1x8x128xf32>,
    return
  }
  func.func @transform_0(%arg0: i32, %arg1: i32) -> (i32, i32, i32, i32) {
    %c0_i32 = arith.constant 0 : i32
    %c0_i32_0 = arith.constant 0 : i32
    %c0_i32_1 = arith.constant 0 : i32
    %c0_i32_2 = arith.constant 0 : i32
    return %arg0, %c0_i32, %c0_i32_0, %c0_i32_1 : i32, i32, i32, i32
  }
  func.func @transform_1(%arg0: i32, %arg1: i32) -> (i32, i32, i32) {
    %c0_i32 = arith.constant 0 : i32
    %c0_i32_0 = arith.constant 0 : i32
    %c0_i32_1 = arith.constant 0 : i32
    %c0_i32_2 = arith.constant 0 : i32
    return %c0_i32, %c0_i32_0, %c0_i32_1 : i32, i32, i32
  }
  func.func @transform_2(%arg0: i32, %arg1: i32) -> (i32, i32, i32, i32) {
    %c0_i32 = arith.constant 0 : i32
    %c0_i32_0 = arith.constant 0 : i32
    %c0_i32_1 = arith.constant 0 : i32
    return %arg0, %arg1, %c0_i32, %c0_i32_0 : i32, i32, i32, i32
  }
  func.func @transform_3(%arg0: i32, %arg1: i32) -> (i32, i32, i32) {
    %c0_i32 = arith.constant 0 : i32
    %c0_i32_0 = arith.constant 0 : i32
    %c0_i32_1 = arith.constant 0 : i32
    return %arg0, %c0_i32, %c0_i32_0 : i32, i32, i32
  }
  func.func @transform_4(%arg0: i32, %arg1: i32) -> (i32, i32, i32) {
    %c0_i32 = arith.constant 0 : i32
    %c0_i32_0 = arith.constant 0 : i32
    %c0_i32_1 = arith.constant 0 : i32
    return %arg0, %c0_i32, %c0_i32_0 : i32, i32, i32
  }
}

module attributes {stable_mosaic.version = 11 : i64} {
  func.func @_bn_act_kernel(%arg0: i32, %arg1: memref<128x128xf32, #tpu.memory_space<vmem>>, %arg2: memref<1x128xf32, #tpu.memory_space<vmem>>, %arg3: memref<1x128xf32, #tpu.memory_space<vmem>>, %arg4: memref<1x128xf32, #tpu.memory_space<vmem>>, %arg5: memref<1x128xf32, #tpu.memory_space<vmem>>, %arg6: memref<128x128xbf16, #tpu.memory_space<vmem>>) attributes {dimension_semantics = [#tpu.dimension_semantics<parallel>], iteration_bounds = array<i64: 1>, scalar_prefetch = 0 : i64, scratch_operands = 0 : i64, tpu.core_type = #tpu.core_type<tc>, window_params = [{transform_indices = @transform_0, window_bounds = array<i64: 128, 128>}, {pipeline_mode = #tpu.pipeline_mode<synchronous>, transform_indices = @transform_1, window_bounds = array<i64: 1, 128>}, {pipeline_mode = #tpu.pipeline_mode<synchronous>, transform_indices = @transform_2, window_bounds = array<i64: 1, 128>}, {pipeline_mode = #tpu.pipeline_mode<synchronous>, transform_indices = @transform_3, window_bounds = array<i64: 1, 128>}, {pipeline_mode = #tpu.pipeline_mode<synchronous>, transform_indices = @transform_4, window_bounds = array<i64: 1, 128>}, {transform_indices = @transform_5, window_bounds = array<i64: 128, 128>}]} {
    %c0 = arith.constant 0 : index
    %c0_0 = arith.constant 0 : index
    %0 = vector.load %arg3[%c0, %c0_0] : memref<1x128xf32, #tpu.memory_space<vmem>>, vector<1x128xf32>
    %cst = arith.constant 9.99999974E-6 : f32
    %1 = vector.broadcast %cst : f32 to vector<1x128xf32>
    %2 = arith.addf %0, %1 : vector<1x128xf32>
    %3 = math.rsqrt %2 : vector<1x128xf32>
    %c0_1 = arith.constant 0 : index
    %c0_2 = arith.constant 0 : index
    %4 = vector.load %arg1[%c0_1, %c0_2] : memref<128x128xf32, #tpu.memory_space<vmem>>, vector<128x128xf32>
    %c0_3 = arith.constant 0 : index
    %c0_4 = arith.constant 0 : index
    %5 = vector.load %arg2[%c0_3, %c0_4] : memref<1x128xf32, #tpu.memory_space<vmem>>, vector<1x128xf32>
    %6 = vector.broadcast %5 : vector<1x128xf32> to vector<128x128xf32>
    %7 = arith.subf %4, %6 : vector<128x128xf32>
    %8 = vector.broadcast %3 : vector<1x128xf32> to vector<128x128xf32>
    %9 = arith.mulf %7, %8 : vector<128x128xf32>
    %c0_5 = arith.constant 0 : index
    %c0_6 = arith.constant 0 : index
    %10 = vector.load %arg4[%c0_5, %c0_6] : memref<1x128xf32, #tpu.memory_space<vmem>>, vector<1x128xf32>
    %11 = vector.broadcast %10 : vector<1x128xf32> to vector<128x128xf32>
    %12 = arith.mulf %9, %11 : vector<128x128xf32>
    %c0_7 = arith.constant 0 : index
    %c0_8 = arith.constant 0 : index
    %13 = vector.load %arg5[%c0_7, %c0_8] : memref<1x128xf32, #tpu.memory_space<vmem>>, vector<1x128xf32>
    %14 = vector.broadcast %13 : vector<1x128xf32> to vector<128x128xf32>
    %15 = arith.addf %12, %14 : vector<128x128xf32>
    %cst_9 = arith.constant 0.000000e+00 : f32
    %16 = vector.broadcast %cst_9 : f32 to vector<128x128xf32>
    %17 = arith.maximumf %15, %16 : vector<128x128xf32>
    %18 = arith.truncf %17 : vector<128x128xf32> to vector<128x128xbf16>
    %c0_10 = arith.constant 0 : index
    %c0_11 = arith.constant 0 : index
    %19 = vector.load %arg6[%c0_10, %c0_11] : memref<128x128xbf16, #tpu.memory_space<vmem>>, vector<128x128xbf16>
    tpu.vector_store %arg6[%c0_10, %c0_11], %18 {strides = array<i32>} : memref<128x128xbf16, #tpu.memory_space<vmem>>, vector<128x128xbf16>,
    return
  }
  func.func @transform_0(%arg0: i32) -> (i32, i32) {
    %c0_i32 = arith.constant 0 : i32
    %c0_i32_0 = arith.constant 0 : i32
    return %arg0, %c0_i32 : i32, i32
  }
  func.func @transform_1(%arg0: i32) -> (i32, i32) {
    %c0_i32 = arith.constant 0 : i32
    %c0_i32_0 = arith.constant 0 : i32
    %c0_i32_1 = arith.constant 0 : i32
    return %c0_i32, %c0_i32_0 : i32, i32
  }
  func.func @transform_2(%arg0: i32) -> (i32, i32) {
    %c0_i32 = arith.constant 0 : i32
    %c0_i32_0 = arith.constant 0 : i32
    %c0_i32_1 = arith.constant 0 : i32
    return %c0_i32, %c0_i32_0 : i32, i32
  }
  func.func @transform_3(%arg0: i32) -> (i32, i32) {
    %c0_i32 = arith.constant 0 : i32
    %c0_i32_0 = arith.constant 0 : i32
    %c0_i32_1 = arith.constant 0 : i32
    return %c0_i32, %c0_i32_0 : i32, i32
  }
  func.func @transform_4(%arg0: i32) -> (i32, i32) {
    %c0_i32 = arith.constant 0 : i32
    %c0_i32_0 = arith.constant 0 : i32
    %c0_i32_1 = arith.constant 0 : i32
    return %c0_i32, %c0_i32_0 : i32, i32
  }
  func.func @transform_5(%arg0: i32) -> (i32, i32) {
    %c0_i32 = arith.constant 0 : i32
    %c0_i32_0 = arith.constant 0 : i32
    return %arg0, %c0_i32 : i32, i32
  }
}

module attributes {stable_mosaic.version = 11 : i64} {
  func.func @_conv_stats_kernel(%arg0: i32, %arg1: i32, %arg2: memref<1x10x10x128xbf16, #tpu.memory_space<vmem>>, %arg3: memref<9x128x128xbf16, #tpu.memory_space<vmem>>, %arg4: memref<1x4x8x128xf32, #tpu.memory_space<vmem>>, %arg5: memref<1x8x128xf32, #tpu.memory_space<vmem>>, %arg6: memref<1x8x128xf32, #tpu.memory_space<vmem>>) attributes {dimension_semantics = [#tpu.dimension_semantics<parallel>, #tpu.dimension_semantics<arbitrary>], iteration_bounds = array<i64: 2, 2>, scalar_prefetch = 0 : i64, scratch_operands = 0 : i64, tpu.core_type = #tpu.core_type<tc>, window_params = [{transform_indices = @transform_0, window_bounds = array<i64: 1, 10, 10, 128>}, {pipeline_mode = #tpu.pipeline_mode<synchronous>, transform_indices = @transform_1, window_bounds = array<i64: 9, 128, 128>}, {transform_indices = @transform_2, window_bounds = array<i64: 1, 4, 8, 128>}, {transform_indices = @transform_3, window_bounds = array<i64: 1, 8, 128>}, {transform_indices = @transform_4, window_bounds = array<i64: 1, 8, 128>}]} {
    %c0_i32 = arith.constant 0 : i32
    %0 = arith.cmpi eq, %arg1, %c0_i32 : i32
    %1 = arith.extui %0 : i1 to i32
    %c0_i32_0 = arith.constant 0 : i32
    %2 = arith.cmpi ne, %1, %c0_i32_0 : i32
    scf.if %2 {
      %cst_80 = arith.constant 0.000000e+00 : f32
      %103 = vector.broadcast %cst_80 : f32 to vector<1x8x128xf32>
      %c0_81 = arith.constant 0 : index
      %c0_82 = arith.constant 0 : index
      %c0_83 = arith.constant 0 : index
      %104 = vector.load %arg5[%c0_81, %c0_82, %c0_83] : memref<1x8x128xf32, #tpu.memory_space<vmem>>, vector<1x8x128xf32>
      tpu.vector_store %arg5[%c0_81, %c0_82, %c0_83], %103 {strides = array<i32>} : memref<1x8x128xf32, #tpu.memory_space<vmem>>, vector<1x8x128xf32>,
      %cst_84 = arith.constant 0.000000e+00 : f32
      %105 = vector.broadcast %cst_84 : f32 to vector<1x8x128xf32>
      %c0_85 = arith.constant 0 : index
      %c0_86 = arith.constant 0 : index
      %c0_87 = arith.constant 0 : index
      %106 = vector.load %arg6[%c0_85, %c0_86, %c0_87] : memref<1x8x128xf32, #tpu.memory_space<vmem>>, vector<1x8x128xf32>
      tpu.vector_store %arg6[%c0_85, %c0_86, %c0_87], %105 {strides = array<i32>} : memref<1x8x128xf32, #tpu.memory_space<vmem>>, vector<1x8x128xf32>,
    } else {
    }
    %c4_i32 = arith.constant 4 : i32
    %3 = arith.muli %arg1, %c4_i32 : i32
    %cst = arith.constant 0.000000e+00 : f32
    %4 = vector.broadcast %cst : f32 to vector<32x128xf32>
    %c0_i32_1 = arith.constant 0 : i32
    %5 = arith.addi %3, %c0_i32_1 : i32
    %c0 = arith.constant 0 : index
    %6 = arith.index_cast %5 : i32 to index
    %c0_2 = arith.constant 0 : index
    %c0_3 = arith.constant 0 : index
    %7 = vector.load %arg2[%c0, %6, %c0_2, %c0_3] : memref<1x10x10x128xbf16, #tpu.memory_space<vmem>>, vector<1x4x8x128xbf16>
    %8 = vector.shape_cast %7 : vector<1x4x8x128xbf16> to vector<4x8x128xbf16>
    %9 = vector.shape_cast %8 : vector<4x8x128xbf16> to vector<32x128xbf16>
    %c0_4 = arith.constant 0 : index
    %c0_5 = arith.constant 0 : index
    %c0_6 = arith.constant 0 : index
    %10 = vector.load %arg3[%c0_4, %c0_5, %c0_6] : memref<9x128x128xbf16, #tpu.memory_space<vmem>>, vector<1x128x128xbf16>
    %11 = vector.shape_cast %10 : vector<1x128x128xbf16> to vector<128x128xbf16>
    %cst_7 = arith.constant dense<0.000000e+00> : vector<32x128xf32>
    %12 = tpu.matmul %9, %11, %cst_7 {dimension_numbers = #tpu.dot_dimension_numbers<[1], [0], [0], [1], [0, 0, 1, 1], [], []>} : vector<32x128xbf16>, vector<128x128xbf16>, vector<32x128xf32> -> vector<32x128xf32>
    %13 = arith.addf %4, %12 : vector<32x128xf32>
    %c0_i32_8 = arith.constant 0 : i32
    %14 = arith.addi %3, %c0_i32_8 : i32
    %c0_9 = arith.constant 0 : index
    %15 = arith.index_cast %14 : i32 to index
    %c1 = arith.constant 1 : index
    %c0_10 = arith.constant 0 : index
    %16 = vector.load %arg2[%c0_9, %15, %c1, %c0_10] : memref<1x10x10x128xbf16, #tpu.memory_space<vmem>>, vector<1x4x8x128xbf16>
    %17 = vector.shape_cast %16 : vector<1x4x8x128xbf16> to vector<4x8x128xbf16>
    %18 = vector.shape_cast %17 : vector<4x8x128xbf16> to vector<32x128xbf16>
    %c1_11 = arith.constant 1 : index
    %c0_12 = arith.constant 0 : index
    %c0_13 = arith.constant 0 : index
    %19 = vector.load %arg3[%c1_11, %c0_12, %c0_13] : memref<9x128x128xbf16, #tpu.memory_space<vmem>>, vector<1x128x128xbf16>
    %20 = vector.shape_cast %19 : vector<1x128x128xbf16> to vector<128x128xbf16>
    %cst_14 = arith.constant dense<0.000000e+00> : vector<32x128xf32>
    %21 = tpu.matmul %18, %20, %cst_14 {dimension_numbers = #tpu.dot_dimension_numbers<[1], [0], [0], [1], [0, 0, 1, 1], [], []>} : vector<32x128xbf16>, vector<128x128xbf16>, vector<32x128xf32> -> vector<32x128xf32>
    %22 = arith.addf %13, %21 : vector<32x128xf32>
    %c0_i32_15 = arith.constant 0 : i32
    %23 = arith.addi %3, %c0_i32_15 : i32
    %c0_16 = arith.constant 0 : index
    %24 = arith.index_cast %23 : i32 to index
    %c2 = arith.constant 2 : index
    %c0_17 = arith.constant 0 : index
    %25 = vector.load %arg2[%c0_16, %24, %c2, %c0_17] : memref<1x10x10x128xbf16, #tpu.memory_space<vmem>>, vector<1x4x8x128xbf16>
    %26 = vector.shape_cast %25 : vector<1x4x8x128xbf16> to vector<4x8x128xbf16>
    %27 = vector.shape_cast %26 : vector<4x8x128xbf16> to vector<32x128xbf16>
    %c2_18 = arith.constant 2 : index
    %c0_19 = arith.constant 0 : index
    %c0_20 = arith.constant 0 : index
    %28 = vector.load %arg3[%c2_18, %c0_19, %c0_20] : memref<9x128x128xbf16, #tpu.memory_space<vmem>>, vector<1x128x128xbf16>
    %29 = vector.shape_cast %28 : vector<1x128x128xbf16> to vector<128x128xbf16>
    %cst_21 = arith.constant dense<0.000000e+00> : vector<32x128xf32>
    %30 = tpu.matmul %27, %29, %cst_21 {dimension_numbers = #tpu.dot_dimension_numbers<[1], [0], [0], [1], [0, 0, 1, 1], [], []>} : vector<32x128xbf16>, vector<128x128xbf16>, vector<32x128xf32> -> vector<32x128xf32>
    %31 = arith.addf %22, %30 : vector<32x128xf32>
    %c1_i32 = arith.constant 1 : i32
    %32 = arith.addi %3, %c1_i32 : i32
    %c0_22 = arith.constant 0 : index
    %33 = arith.index_cast %32 : i32 to index
    %c0_23 = arith.constant 0 : index
    %c0_24 = arith.constant 0 : index
    %34 = vector.load %arg2[%c0_22, %33, %c0_23, %c0_24] : memref<1x10x10x128xbf16, #tpu.memory_space<vmem>>, vector<1x4x8x128xbf16>
    %35 = vector.shape_cast %34 : vector<1x4x8x128xbf16> to vector<4x8x128xbf16>
    %36 = vector.shape_cast %35 : vector<4x8x128xbf16> to vector<32x128xbf16>
    %c3 = arith.constant 3 : index
    %c0_25 = arith.constant 0 : index
    %c0_26 = arith.constant 0 : index
    %37 = vector.load %arg3[%c3, %c0_25, %c0_26] : memref<9x128x128xbf16, #tpu.memory_space<vmem>>, vector<1x128x128xbf16>
    %38 = vector.shape_cast %37 : vector<1x128x128xbf16> to vector<128x128xbf16>
    %cst_27 = arith.constant dense<0.000000e+00> : vector<32x128xf32>
    %39 = tpu.matmul %36, %38, %cst_27 {dimension_numbers = #tpu.dot_dimension_numbers<[1], [0], [0], [1], [0, 0, 1, 1], [], []>} : vector<32x128xbf16>, vector<128x128xbf16>, vector<32x128xf32> -> vector<32x128xf32>
    %40 = arith.addf %31, %39 : vector<32x128xf32>
    %c1_i32_28 = arith.constant 1 : i32
    %41 = arith.addi %3, %c1_i32_28 : i32
    %c0_29 = arith.constant 0 : index
    %42 = arith.index_cast %41 : i32 to index
    %c1_30 = arith.constant 1 : index
    %c0_31 = arith.constant 0 : index
    %43 = vector.load %arg2[%c0_29, %42, %c1_30, %c0_31] : memref<1x10x10x128xbf16, #tpu.memory_space<vmem>>, vector<1x4x8x128xbf16>
    %44 = vector.shape_cast %43 : vector<1x4x8x128xbf16> to vector<4x8x128xbf16>
    %45 = vector.shape_cast %44 : vector<4x8x128xbf16> to vector<32x128xbf16>
    %c4 = arith.constant 4 : index
    %c0_32 = arith.constant 0 : index
    %c0_33 = arith.constant 0 : index
    %46 = vector.load %arg3[%c4, %c0_32, %c0_33] : memref<9x128x128xbf16, #tpu.memory_space<vmem>>, vector<1x128x128xbf16>
    %47 = vector.shape_cast %46 : vector<1x128x128xbf16> to vector<128x128xbf16>
    %cst_34 = arith.constant dense<0.000000e+00> : vector<32x128xf32>
    %48 = tpu.matmul %45, %47, %cst_34 {dimension_numbers = #tpu.dot_dimension_numbers<[1], [0], [0], [1], [0, 0, 1, 1], [], []>} : vector<32x128xbf16>, vector<128x128xbf16>, vector<32x128xf32> -> vector<32x128xf32>
    %49 = arith.addf %40, %48 : vector<32x128xf32>
    %c1_i32_35 = arith.constant 1 : i32
    %50 = arith.addi %3, %c1_i32_35 : i32
    %c0_36 = arith.constant 0 : index
    %51 = arith.index_cast %50 : i32 to index
    %c2_37 = arith.constant 2 : index
    %c0_38 = arith.constant 0 : index
    %52 = vector.load %arg2[%c0_36, %51, %c2_37, %c0_38] : memref<1x10x10x128xbf16, #tpu.memory_space<vmem>>, vector<1x4x8x128xbf16>
    %53 = vector.shape_cast %52 : vector<1x4x8x128xbf16> to vector<4x8x128xbf16>
    %54 = vector.shape_cast %53 : vector<4x8x128xbf16> to vector<32x128xbf16>
    %c5 = arith.constant 5 : index
    %c0_39 = arith.constant 0 : index
    %c0_40 = arith.constant 0 : index
    %55 = vector.load %arg3[%c5, %c0_39, %c0_40] : memref<9x128x128xbf16, #tpu.memory_space<vmem>>, vector<1x128x128xbf16>
    %56 = vector.shape_cast %55 : vector<1x128x128xbf16> to vector<128x128xbf16>
    %cst_41 = arith.constant dense<0.000000e+00> : vector<32x128xf32>
    %57 = tpu.matmul %54, %56, %cst_41 {dimension_numbers = #tpu.dot_dimension_numbers<[1], [0], [0], [1], [0, 0, 1, 1], [], []>} : vector<32x128xbf16>, vector<128x128xbf16>, vector<32x128xf32> -> vector<32x128xf32>
    %58 = arith.addf %49, %57 : vector<32x128xf32>
    %c2_i32 = arith.constant 2 : i32
    %59 = arith.addi %3, %c2_i32 : i32
    %c0_42 = arith.constant 0 : index
    %60 = arith.index_cast %59 : i32 to index
    %c0_43 = arith.constant 0 : index
    %c0_44 = arith.constant 0 : index
    %61 = vector.load %arg2[%c0_42, %60, %c0_43, %c0_44] : memref<1x10x10x128xbf16, #tpu.memory_space<vmem>>, vector<1x4x8x128xbf16>
    %62 = vector.shape_cast %61 : vector<1x4x8x128xbf16> to vector<4x8x128xbf16>
    %63 = vector.shape_cast %62 : vector<4x8x128xbf16> to vector<32x128xbf16>
    %c6 = arith.constant 6 : index
    %c0_45 = arith.constant 0 : index
    %c0_46 = arith.constant 0 : index
    %64 = vector.load %arg3[%c6, %c0_45, %c0_46] : memref<9x128x128xbf16, #tpu.memory_space<vmem>>, vector<1x128x128xbf16>
    %65 = vector.shape_cast %64 : vector<1x128x128xbf16> to vector<128x128xbf16>
    %cst_47 = arith.constant dense<0.000000e+00> : vector<32x128xf32>
    %66 = tpu.matmul %63, %65, %cst_47 {dimension_numbers = #tpu.dot_dimension_numbers<[1], [0], [0], [1], [0, 0, 1, 1], [], []>} : vector<32x128xbf16>, vector<128x128xbf16>, vector<32x128xf32> -> vector<32x128xf32>
    %67 = arith.addf %58, %66 : vector<32x128xf32>
    %c2_i32_48 = arith.constant 2 : i32
    %68 = arith.addi %3, %c2_i32_48 : i32
    %c0_49 = arith.constant 0 : index
    %69 = arith.index_cast %68 : i32 to index
    %c1_50 = arith.constant 1 : index
    %c0_51 = arith.constant 0 : index
    %70 = vector.load %arg2[%c0_49, %69, %c1_50, %c0_51] : memref<1x10x10x128xbf16, #tpu.memory_space<vmem>>, vector<1x4x8x128xbf16>
    %71 = vector.shape_cast %70 : vector<1x4x8x128xbf16> to vector<4x8x128xbf16>
    %72 = vector.shape_cast %71 : vector<4x8x128xbf16> to vector<32x128xbf16>
    %c7 = arith.constant 7 : index
    %c0_52 = arith.constant 0 : index
    %c0_53 = arith.constant 0 : index
    %73 = vector.load %arg3[%c7, %c0_52, %c0_53] : memref<9x128x128xbf16, #tpu.memory_space<vmem>>, vector<1x128x128xbf16>
    %74 = vector.shape_cast %73 : vector<1x128x128xbf16> to vector<128x128xbf16>
    %cst_54 = arith.constant dense<0.000000e+00> : vector<32x128xf32>
    %75 = tpu.matmul %72, %74, %cst_54 {dimension_numbers = #tpu.dot_dimension_numbers<[1], [0], [0], [1], [0, 0, 1, 1], [], []>} : vector<32x128xbf16>, vector<128x128xbf16>, vector<32x128xf32> -> vector<32x128xf32>
    %76 = arith.addf %67, %75 : vector<32x128xf32>
    %c2_i32_55 = arith.constant 2 : i32
    %77 = arith.addi %3, %c2_i32_55 : i32
    %c0_56 = arith.constant 0 : index
    %78 = arith.index_cast %77 : i32 to index
    %c2_57 = arith.constant 2 : index
    %c0_58 = arith.constant 0 : index
    %79 = vector.load %arg2[%c0_56, %78, %c2_57, %c0_58] : memref<1x10x10x128xbf16, #tpu.memory_space<vmem>>, vector<1x4x8x128xbf16>
    %80 = vector.shape_cast %79 : vector<1x4x8x128xbf16> to vector<4x8x128xbf16>
    %81 = vector.shape_cast %80 : vector<4x8x128xbf16> to vector<32x128xbf16>
    %c8 = arith.constant 8 : index
    %c0_59 = arith.constant 0 : index
    %c0_60 = arith.constant 0 : index
    %82 = vector.load %arg3[%c8, %c0_59, %c0_60] : memref<9x128x128xbf16, #tpu.memory_space<vmem>>, vector<1x128x128xbf16>
    %83 = vector.shape_cast %82 : vector<1x128x128xbf16> to vector<128x128xbf16>
    %cst_61 = arith.constant dense<0.000000e+00> : vector<32x128xf32>
    %84 = tpu.matmul %81, %83, %cst_61 {dimension_numbers = #tpu.dot_dimension_numbers<[1], [0], [0], [1], [0, 0, 1, 1], [], []>} : vector<32x128xbf16>, vector<128x128xbf16>, vector<32x128xf32> -> vector<32x128xf32>
    %85 = arith.addf %76, %84 : vector<32x128xf32>
    %86 = vector.shape_cast %85 : vector<32x128xf32> to vector<1x4x8x128xf32>
    %c0_62 = arith.constant 0 : index
    %c0_63 = arith.constant 0 : index
    %c0_64 = arith.constant 0 : index
    %c0_65 = arith.constant 0 : index
    %87 = vector.load %arg4[%c0_62, %c0_63, %c0_64, %c0_65] : memref<1x4x8x128xf32, #tpu.memory_space<vmem>>, vector<1x4x8x128xf32>
    tpu.vector_store %arg4[%c0_62, %c0_63, %c0_64, %c0_65], %86 {strides = array<i32>} : memref<1x4x8x128xf32, #tpu.memory_space<vmem>>, vector<1x4x8x128xf32>,
    %c0_66 = arith.constant 0 : index
    %c0_67 = arith.constant 0 : index
    %c0_68 = arith.constant 0 : index
    %88 = vector.load %arg5[%c0_66, %c0_67, %c0_68] : memref<1x8x128xf32, #tpu.memory_space<vmem>>, vector<1x8x128xf32>
    %cst_69 = arith.constant dense<0.000000e+00> : vector<128xf32>
    %89 = vector.multi_reduction <add>, %85, %cst_69 [0] : vector<32x128xf32> to vector<128xf32>
    %90 = vector.shape_cast %89 : vector<128xf32> to vector<1x128xf32>
    %91 = vector.shape_cast %90 : vector<1x128xf32> to vector<1x1x128xf32>
    %92 = vector.broadcast %91 : vector<1x1x128xf32> to vector<1x8x128xf32>
    %93 = arith.addf %88, %92 : vector<1x8x128xf32>
    %c0_70 = arith.constant 0 : index
    %c0_71 = arith.constant 0 : index
    %c0_72 = arith.constant 0 : index
    %94 = vector.load %arg5[%c0_70, %c0_71, %c0_72] : memref<1x8x128xf32, #tpu.memory_space<vmem>>, vector<1x8x128xf32>
    tpu.vector_store %arg5[%c0_70, %c0_71, %c0_72], %93 {strides = array<i32>} : memref<1x8x128xf32, #tpu.memory_space<vmem>>, vector<1x8x128xf32>,
    %c0_73 = arith.constant 0 : index
    %c0_74 = arith.constant 0 : index
    %c0_75 = arith.constant 0 : index
    %95 = vector.load %arg6[%c0_73, %c0_74, %c0_75] : memref<1x8x128xf32, #tpu.memory_space<vmem>>, vector<1x8x128xf32>
    %96 = arith.mulf %85, %85 : vector<32x128xf32>
    %cst_76 = arith.constant dense<0.000000e+00> : vector<128xf32>
    %97 = vector.multi_reduction <add>, %96, %cst_76 [0] : vector<32x128xf32> to vector<128xf32>
    %98 = vector.shape_cast %97 : vector<128xf32> to vector<1x128xf32>
    %99 = vector.shape_cast %98 : vector<1x128xf32> to vector<1x1x128xf32>
    %100 = vector.broadcast %99 : vector<1x1x128xf32> to vector<1x8x128xf32>
    %101 = arith.addf %95, %100 : vector<1x8x128xf32>
    %c0_77 = arith.constant 0 : index
    %c0_78 = arith.constant 0 : index
    %c0_79 = arith.constant 0 : index
    %102 = vector.load %arg6[%c0_77, %c0_78, %c0_79] : memref<1x8x128xf32, #tpu.memory_space<vmem>>, vector<1x8x128xf32>
    tpu.vector_store %arg6[%c0_77, %c0_78, %c0_79], %101 {strides = array<i32>} : memref<1x8x128xf32, #tpu.memory_space<vmem>>, vector<1x8x128xf32>,
    return
  }
  func.func @transform_0(%arg0: i32, %arg1: i32) -> (i32, i32, i32, i32) {
    %c0_i32 = arith.constant 0 : i32
    %c0_i32_0 = arith.constant 0 : i32
    %c0_i32_1 = arith.constant 0 : i32
    %c0_i32_2 = arith.constant 0 : i32
    return %arg0, %c0_i32, %c0_i32_0, %c0_i32_1 : i32, i32, i32, i32
  }
  func.func @transform_1(%arg0: i32, %arg1: i32) -> (i32, i32, i32) {
    %c0_i32 = arith.constant 0 : i32
    %c0_i32_0 = arith.constant 0 : i32
    %c0_i32_1 = arith.constant 0 : i32
    %c0_i32_2 = arith.constant 0 : i32
    return %c0_i32, %c0_i32_0, %c0_i32_1 : i32, i32, i32
  }
  func.func @transform_2(%arg0: i32, %arg1: i32) -> (i32, i32, i32, i32) {
    %c0_i32 = arith.constant 0 : i32
    %c0_i32_0 = arith.constant 0 : i32
    %c0_i32_1 = arith.constant 0 : i32
    return %arg0, %arg1, %c0_i32, %c0_i32_0 : i32, i32, i32, i32
  }
  func.func @transform_3(%arg0: i32, %arg1: i32) -> (i32, i32, i32) {
    %c0_i32 = arith.constant 0 : i32
    %c0_i32_0 = arith.constant 0 : i32
    %c0_i32_1 = arith.constant 0 : i32
    return %arg0, %c0_i32, %c0_i32_0 : i32, i32, i32
  }
  func.func @transform_4(%arg0: i32, %arg1: i32) -> (i32, i32, i32) {
    %c0_i32 = arith.constant 0 : i32
    %c0_i32_0 = arith.constant 0 : i32
    %c0_i32_1 = arith.constant 0 : i32
    return %arg0, %c0_i32, %c0_i32_0 : i32, i32, i32
  }
}

module attributes {stable_mosaic.version = 11 : i64} {
  func.func @_conv_stats_kernel(%arg0: i32, %arg1: i32, %arg2: memref<1x8x8x4xbf16, #tpu.memory_space<vmem>>, %arg3: memref<1x4x128xbf16, #tpu.memory_space<vmem>>, %arg4: memref<1x4x8x128xf32, #tpu.memory_space<vmem>>, %arg5: memref<1x8x128xf32, #tpu.memory_space<vmem>>, %arg6: memref<1x8x128xf32, #tpu.memory_space<vmem>>) attributes {dimension_semantics = [#tpu.dimension_semantics<parallel>, #tpu.dimension_semantics<arbitrary>], iteration_bounds = array<i64: 2, 2>, scalar_prefetch = 0 : i64, scratch_operands = 0 : i64, tpu.core_type = #tpu.core_type<tc>, window_params = [{transform_indices = @transform_0, window_bounds = array<i64: 1, 8, 8, 4>}, {pipeline_mode = #tpu.pipeline_mode<synchronous>, transform_indices = @transform_1, window_bounds = array<i64: 1, 4, 128>}, {transform_indices = @transform_2, window_bounds = array<i64: 1, 4, 8, 128>}, {transform_indices = @transform_3, window_bounds = array<i64: 1, 8, 128>}, {transform_indices = @transform_4, window_bounds = array<i64: 1, 8, 128>}]} {
    %c0_i32 = arith.constant 0 : i32
    %0 = arith.cmpi eq, %arg1, %c0_i32 : i32
    %1 = arith.extui %0 : i1 to i32
    %c0_i32_0 = arith.constant 0 : i32
    %2 = arith.cmpi ne, %1, %c0_i32_0 : i32
    scf.if %2 {
      %cst_26 = arith.constant 0.000000e+00 : f32
      %31 = vector.broadcast %cst_26 : f32 to vector<1x8x128xf32>
      %c0_27 = arith.constant 0 : index
      %c0_28 = arith.constant 0 : index
      %c0_29 = arith.constant 0 : index
      %32 = vector.load %arg5[%c0_27, %c0_28, %c0_29] : memref<1x8x128xf32, #tpu.memory_space<vmem>>, vector<1x8x128xf32>
      tpu.vector_store %arg5[%c0_27, %c0_28, %c0_29], %31 {strides = array<i32>} : memref<1x8x128xf32, #tpu.memory_space<vmem>>, vector<1x8x128xf32>,
      %cst_30 = arith.constant 0.000000e+00 : f32
      %33 = vector.broadcast %cst_30 : f32 to vector<1x8x128xf32>
      %c0_31 = arith.constant 0 : index
      %c0_32 = arith.constant 0 : index
      %c0_33 = arith.constant 0 : index
      %34 = vector.load %arg6[%c0_31, %c0_32, %c0_33] : memref<1x8x128xf32, #tpu.memory_space<vmem>>, vector<1x8x128xf32>
      tpu.vector_store %arg6[%c0_31, %c0_32, %c0_33], %33 {strides = array<i32>} : memref<1x8x128xf32, #tpu.memory_space<vmem>>, vector<1x8x128xf32>,
    } else {
    }
    %c4_i32 = arith.constant 4 : i32
    %3 = arith.muli %arg1, %c4_i32 : i32
    %cst = arith.constant 0.000000e+00 : f32
    %4 = vector.broadcast %cst : f32 to vector<32x128xf32>
    %c0_i32_1 = arith.constant 0 : i32
    %5 = arith.addi %3, %c0_i32_1 : i32
    %c0 = arith.constant 0 : index
    %6 = arith.index_cast %5 : i32 to index
    %c0_2 = arith.constant 0 : index
    %c0_3 = arith.constant 0 : index
    %7 = vector.load %arg2[%c0, %6, %c0_2, %c0_3] : memref<1x8x8x4xbf16, #tpu.memory_space<vmem>>, vector<1x4x8x4xbf16>
    %8 = vector.shape_cast %7 : vector<1x4x8x4xbf16> to vector<4x8x4xbf16>
    %9 = vector.shape_cast %8 : vector<4x8x4xbf16> to vector<32x4xbf16>
    %c0_4 = arith.constant 0 : index
    %c0_5 = arith.constant 0 : index
    %c0_6 = arith.constant 0 : index
    %10 = vector.load %arg3[%c0_4, %c0_5, %c0_6] : memref<1x4x128xbf16, #tpu.memory_space<vmem>>, vector<1x4x128xbf16>
    %11 = vector.shape_cast %10 : vector<1x4x128xbf16> to vector<4x128xbf16>
    %cst_7 = arith.constant dense<0.000000e+00> : vector<32x128xf32>
    %12 = tpu.matmul %9, %11, %cst_7 {dimension_numbers = #tpu.dot_dimension_numbers<[1], [0], [0], [1], [0, 0, 1, 1], [], []>} : vector<32x4xbf16>, vector<4x128xbf16>, vector<32x128xf32> -> vector<32x128xf32>
    %13 = arith.addf %4, %12 : vector<32x128xf32>
    %14 = vector.shape_cast %13 : vector<32x128xf32> to vector<1x4x8x128xf32>
    %c0_8 = arith.constant 0 : index
    %c0_9 = arith.constant 0 : index
    %c0_10 = arith.constant 0 : index
    %c0_11 = arith.constant 0 : index
    %15 = vector.load %arg4[%c0_8, %c0_9, %c0_10, %c0_11] : memref<1x4x8x128xf32, #tpu.memory_space<vmem>>, vector<1x4x8x128xf32>
    tpu.vector_store %arg4[%c0_8, %c0_9, %c0_10, %c0_11], %14 {strides = array<i32>} : memref<1x4x8x128xf32, #tpu.memory_space<vmem>>, vector<1x4x8x128xf32>,
    %c0_12 = arith.constant 0 : index
    %c0_13 = arith.constant 0 : index
    %c0_14 = arith.constant 0 : index
    %16 = vector.load %arg5[%c0_12, %c0_13, %c0_14] : memref<1x8x128xf32, #tpu.memory_space<vmem>>, vector<1x8x128xf32>
    %cst_15 = arith.constant dense<0.000000e+00> : vector<128xf32>
    %17 = vector.multi_reduction <add>, %13, %cst_15 [0] : vector<32x128xf32> to vector<128xf32>
    %18 = vector.shape_cast %17 : vector<128xf32> to vector<1x128xf32>
    %19 = vector.shape_cast %18 : vector<1x128xf32> to vector<1x1x128xf32>
    %20 = vector.broadcast %19 : vector<1x1x128xf32> to vector<1x8x128xf32>
    %21 = arith.addf %16, %20 : vector<1x8x128xf32>
    %c0_16 = arith.constant 0 : index
    %c0_17 = arith.constant 0 : index
    %c0_18 = arith.constant 0 : index
    %22 = vector.load %arg5[%c0_16, %c0_17, %c0_18] : memref<1x8x128xf32, #tpu.memory_space<vmem>>, vector<1x8x128xf32>
    tpu.vector_store %arg5[%c0_16, %c0_17, %c0_18], %21 {strides = array<i32>} : memref<1x8x128xf32, #tpu.memory_space<vmem>>, vector<1x8x128xf32>,
    %c0_19 = arith.constant 0 : index
    %c0_20 = arith.constant 0 : index
    %c0_21 = arith.constant 0 : index
    %23 = vector.load %arg6[%c0_19, %c0_20, %c0_21] : memref<1x8x128xf32, #tpu.memory_space<vmem>>, vector<1x8x128xf32>
    %24 = arith.mulf %13, %13 : vector<32x128xf32>
    %cst_22 = arith.constant dense<0.000000e+00> : vector<128xf32>
    %25 = vector.multi_reduction <add>, %24, %cst_22 [0] : vector<32x128xf32> to vector<128xf32>
    %26 = vector.shape_cast %25 : vector<128xf32> to vector<1x128xf32>
    %27 = vector.shape_cast %26 : vector<1x128xf32> to vector<1x1x128xf32>
    %28 = vector.broadcast %27 : vector<1x1x128xf32> to vector<1x8x128xf32>
    %29 = arith.addf %23, %28 : vector<1x8x128xf32>
    %c0_23 = arith.constant 0 : index
    %c0_24 = arith.constant 0 : index
    %c0_25 = arith.constant 0 : index
    %30 = vector.load %arg6[%c0_23, %c0_24, %c0_25] : memref<1x8x128xf32, #tpu.memory_space<vmem>>, vector<1x8x128xf32>
    tpu.vector_store %arg6[%c0_23, %c0_24, %c0_25], %29 {strides = array<i32>} : memref<1x8x128xf32, #tpu.memory_space<vmem>>, vector<1x8x128xf32>,
    return
  }
  func.func @transform_0(%arg0: i32, %arg1: i32) -> (i32, i32, i32, i32) {
    %c0_i32 = arith.constant 0 : i32
    %c0_i32_0 = arith.constant 0 : i32
    %c0_i32_1 = arith.constant 0 : i32
    %c0_i32_2 = arith.constant 0 : i32
    return %arg0, %c0_i32, %c0_i32_0, %c0_i32_1 : i32, i32, i32, i32
  }
  func.func @transform_1(%arg0: i32, %arg1: i32) -> (i32, i32, i32) {
    %c0_i32 = arith.constant 0 : i32
    %c0_i32_0 = arith.constant 0 : i32
    %c0_i32_1 = arith.constant 0 : i32
    %c0_i32_2 = arith.constant 0 : i32
    return %c0_i32, %c0_i32_0, %c0_i32_1 : i32, i32, i32
  }
  func.func @transform_2(%arg0: i32, %arg1: i32) -> (i32, i32, i32, i32) {
    %c0_i32 = arith.constant 0 : i32
    %c0_i32_0 = arith.constant 0 : i32
    %c0_i32_1 = arith.constant 0 : i32
    return %arg0, %arg1, %c0_i32, %c0_i32_0 : i32, i32, i32, i32
  }
  func.func @transform_3(%arg0: i32, %arg1: i32) -> (i32, i32, i32) {
    %c0_i32 = arith.constant 0 : i32
    %c0_i32_0 = arith.constant 0 : i32
    %c0_i32_1 = arith.constant 0 : i32
    return %arg0, %c0_i32, %c0_i32_0 : i32, i32, i32
  }
  func.func @transform_4(%arg0: i32, %arg1: i32) -> (i32, i32, i32) {
    %c0_i32 = arith.constant 0 : i32
    %c0_i32_0 = arith.constant 0 : i32
    %c0_i32_1 = arith.constant 0 : i32
    return %arg0, %c0_i32, %c0_i32_0 : i32, i32, i32
  }
}

module attributes {stable_mosaic.version = 11 : i64} {
  func.func @_res_fuse_kernel(%arg0: i32, %arg1: memref<128x128xf32, #tpu.memory_space<vmem>>, %arg2: memref<1x128xf32, #tpu.memory_space<vmem>>, %arg3: memref<1x128xf32, #tpu.memory_space<vmem>>, %arg4: memref<1x128xf32, #tpu.memory_space<vmem>>, %arg5: memref<1x128xf32, #tpu.memory_space<vmem>>, %arg6: memref<128x128xf32, #tpu.memory_space<vmem>>, %arg7: memref<1x128xf32, #tpu.memory_space<vmem>>, %arg8: memref<1x128xf32, #tpu.memory_space<vmem>>, %arg9: memref<1x128xf32, #tpu.memory_space<vmem>>, %arg10: memref<1x128xf32, #tpu.memory_space<vmem>>, %arg11: memref<128x128xf32, #tpu.memory_space<vmem>>, %arg12: memref<8x128xf32, #tpu.memory_space<vmem>>, %arg13: memref<8x128xf32, #tpu.memory_space<vmem>>) attributes {dimension_semantics = [#tpu.dimension_semantics<arbitrary>], iteration_bounds = array<i64: 1>, scalar_prefetch = 0 : i64, scratch_operands = 0 : i64, tpu.core_type = #tpu.core_type<tc>, window_params = [{transform_indices = @transform_0, window_bounds = array<i64: 128, 128>}, {pipeline_mode = #tpu.pipeline_mode<synchronous>, transform_indices = @transform_1, window_bounds = array<i64: 1, 128>}, {pipeline_mode = #tpu.pipeline_mode<synchronous>, transform_indices = @transform_2, window_bounds = array<i64: 1, 128>}, {pipeline_mode = #tpu.pipeline_mode<synchronous>, transform_indices = @transform_3, window_bounds = array<i64: 1, 128>}, {pipeline_mode = #tpu.pipeline_mode<synchronous>, transform_indices = @transform_4, window_bounds = array<i64: 1, 128>}, {transform_indices = @transform_5, window_bounds = array<i64: 128, 128>}, {pipeline_mode = #tpu.pipeline_mode<synchronous>, transform_indices = @transform_6, window_bounds = array<i64: 1, 128>}, {pipeline_mode = #tpu.pipeline_mode<synchronous>, transform_indices = @transform_7, window_bounds = array<i64: 1, 128>}, {pipeline_mode = #tpu.pipeline_mode<synchronous>, transform_indices = @transform_8, window_bounds = array<i64: 1, 128>}, {pipeline_mode = #tpu.pipeline_mode<synchronous>, transform_indices = @transform_9, window_bounds = array<i64: 1, 128>}, {transform_indices = @transform_10, window_bounds = array<i64: 128, 128>}, {pipeline_mode = #tpu.pipeline_mode<synchronous>, transform_indices = @transform_11, window_bounds = array<i64: 8, 128>}, {pipeline_mode = #tpu.pipeline_mode<synchronous>, transform_indices = @transform_12, window_bounds = array<i64: 8, 128>}]} {
    %c0_i32 = arith.constant 0 : i32
    %0 = arith.cmpi eq, %arg0, %c0_i32 : i32
    %1 = arith.extui %0 : i1 to i32
    %c0_i32_0 = arith.constant 0 : i32
    %2 = arith.cmpi ne, %1, %c0_i32_0 : i32
    scf.if %2 {
      %cst_34 = arith.constant 0.000000e+00 : f32
      %52 = vector.broadcast %cst_34 : f32 to vector<8x128xf32>
      %c0_35 = arith.constant 0 : index
      %c0_36 = arith.constant 0 : index
      %53 = vector.load %arg12[%c0_35, %c0_36] : memref<8x128xf32, #tpu.memory_space<vmem>>, vector<8x128xf32>
      tpu.vector_store %arg12[%c0_35, %c0_36], %52 {strides = array<i32>} : memref<8x128xf32, #tpu.memory_space<vmem>>, vector<8x128xf32>,
      %cst_37 = arith.constant 0.000000e+00 : f32
      %54 = vector.broadcast %cst_37 : f32 to vector<8x128xf32>
      %c0_38 = arith.constant 0 : index
      %c0_39 = arith.constant 0 : index
      %55 = vector.load %arg13[%c0_38, %c0_39] : memref<8x128xf32, #tpu.memory_space<vmem>>, vector<8x128xf32>
      tpu.vector_store %arg13[%c0_38, %c0_39], %54 {strides = array<i32>} : memref<8x128xf32, #tpu.memory_space<vmem>>, vector<8x128xf32>,
    } else {
    }
    %c0 = arith.constant 0 : index
    %c0_1 = arith.constant 0 : index
    %3 = vector.load %arg1[%c0, %c0_1] : memref<128x128xf32, #tpu.memory_space<vmem>>, vector<128x128xf32>
    %c0_2 = arith.constant 0 : index
    %c0_3 = arith.constant 0 : index
    %4 = vector.load %arg2[%c0_2, %c0_3] : memref<1x128xf32, #tpu.memory_space<vmem>>, vector<1x128xf32>
    %5 = vector.broadcast %4 : vector<1x128xf32> to vector<128x128xf32>
    %6 = arith.subf %3, %5 : vector<128x128xf32>
    %c0_4 = arith.constant 0 : index
    %c0_5 = arith.constant 0 : index
    %7 = vector.load %arg3[%c0_4, %c0_5] : memref<1x128xf32, #tpu.memory_space<vmem>>, vector<1x128xf32>
    %cst = arith.constant 9.99999974E-6 : f32
    %8 = vector.broadcast %cst : f32 to vector<1x128xf32>
    %9 = arith.addf %7, %8 : vector<1x128xf32>
    %10 = math.rsqrt %9 : vector<1x128xf32>
    %11 = vector.broadcast %10 : vector<1x128xf32> to vector<128x128xf32>
    %12 = arith.mulf %6, %11 : vector<128x128xf32>
    %c0_6 = arith.constant 0 : index
    %c0_7 = arith.constant 0 : index
    %13 = vector.load %arg4[%c0_6, %c0_7] : memref<1x128xf32, #tpu.memory_space<vmem>>, vector<1x128xf32>
    %14 = vector.broadcast %13 : vector<1x128xf32> to vector<128x128xf32>
    %15 = arith.mulf %12, %14 : vector<128x128xf32>
    %c0_8 = arith.constant 0 : index
    %c0_9 = arith.constant 0 : index
    %16 = vector.load %arg5[%c0_8, %c0_9] : memref<1x128xf32, #tpu.memory_space<vmem>>, vector<1x128xf32>
    %17 = vector.broadcast %16 : vector<1x128xf32> to vector<128x128xf32>
    %18 = arith.addf %15, %17 : vector<128x128xf32>
    %c0_10 = arith.constant 0 : index
    %c0_11 = arith.constant 0 : index
    %19 = vector.load %arg6[%c0_10, %c0_11] : memref<128x128xf32, #tpu.memory_space<vmem>>, vector<128x128xf32>
    %c0_12 = arith.constant 0 : index
    %c0_13 = arith.constant 0 : index
    %20 = vector.load %arg7[%c0_12, %c0_13] : memref<1x128xf32, #tpu.memory_space<vmem>>, vector<1x128xf32>
    %21 = vector.broadcast %20 : vector<1x128xf32> to vector<128x128xf32>
    %22 = arith.subf %19, %21 : vector<128x128xf32>
    %c0_14 = arith.constant 0 : index
    %c0_15 = arith.constant 0 : index
    %23 = vector.load %arg8[%c0_14, %c0_15] : memref<1x128xf32, #tpu.memory_space<vmem>>, vector<1x128xf32>
    %cst_16 = arith.constant 9.99999974E-6 : f32
    %24 = vector.broadcast %cst_16 : f32 to vector<1x128xf32>
    %25 = arith.addf %23, %24 : vector<1x128xf32>
    %26 = math.rsqrt %25 : vector<1x128xf32>
    %27 = vector.broadcast %26 : vector<1x128xf32> to vector<128x128xf32>
    %28 = arith.mulf %22, %27 : vector<128x128xf32>
    %c0_17 = arith.constant 0 : index
    %c0_18 = arith.constant 0 : index
    %29 = vector.load %arg9[%c0_17, %c0_18] : memref<1x128xf32, #tpu.memory_space<vmem>>, vector<1x128xf32>
    %30 = vector.broadcast %29 : vector<1x128xf32> to vector<128x128xf32>
    %31 = arith.mulf %28, %30 : vector<128x128xf32>
    %c0_19 = arith.constant 0 : index
    %c0_20 = arith.constant 0 : index
    %32 = vector.load %arg10[%c0_19, %c0_20] : memref<1x128xf32, #tpu.memory_space<vmem>>, vector<1x128xf32>
    %33 = vector.broadcast %32 : vector<1x128xf32> to vector<128x128xf32>
    %34 = arith.addf %31, %33 : vector<128x128xf32>
    %35 = arith.addf %18, %34 : vector<128x128xf32>
    %cst_21 = arith.constant 0.000000e+00 : f32
    %36 = vector.broadcast %cst_21 : f32 to vector<128x128xf32>
    %37 = arith.maximumf %35, %36 : vector<128x128xf32>
    %c0_22 = arith.constant 0 : index
    %c0_23 = arith.constant 0 : index
    %38 = vector.load %arg11[%c0_22, %c0_23] : memref<128x128xf32, #tpu.memory_space<vmem>>, vector<128x128xf32>
    tpu.vector_store %arg11[%c0_22, %c0_23], %37 {strides = array<i32>} : memref<128x128xf32, #tpu.memory_space<vmem>>, vector<128x128xf32>,
    %c0_24 = arith.constant 0 : index
    %c0_25 = arith.constant 0 : index
    %39 = vector.load %arg12[%c0_24, %c0_25] : memref<8x128xf32, #tpu.memory_space<vmem>>, vector<8x128xf32>
    %cst_26 = arith.constant dense<0.000000e+00> : vector<128xf32>
    %40 = vector.multi_reduction <add>, %37, %cst_26 [0] : vector<128x128xf32> to vector<128xf32>
    %41 = vector.shape_cast %40 : vector<128xf32> to vector<1x128xf32>
    %42 = vector.broadcast %41 : vector<1x128xf32> to vector<8x128xf32>
    %43 = arith.addf %39, %42 : vector<8x128xf32>
    %c0_27 = arith.constant 0 : index
    %c0_28 = arith.constant 0 : index
    %44 = vector.load %arg12[%c0_27, %c0_28] : memref<8x128xf32, #tpu.memory_space<vmem>>, vector<8x128xf32>
    tpu.vector_store %arg12[%c0_27, %c0_28], %43 {strides = array<i32>} : memref<8x128xf32, #tpu.memory_space<vmem>>, vector<8x128xf32>,
    %c0_29 = arith.constant 0 : index
    %c0_30 = arith.constant 0 : index
    %45 = vector.load %arg13[%c0_29, %c0_30] : memref<8x128xf32, #tpu.memory_space<vmem>>, vector<8x128xf32>
    %46 = arith.mulf %37, %37 : vector<128x128xf32>
    %cst_31 = arith.constant dense<0.000000e+00> : vector<128xf32>
    %47 = vector.multi_reduction <add>, %46, %cst_31 [0] : vector<128x128xf32> to vector<128xf32>
    %48 = vector.shape_cast %47 : vector<128xf32> to vector<1x128xf32>
    %49 = vector.broadcast %48 : vector<1x128xf32> to vector<8x128xf32>
    %50 = arith.addf %45, %49 : vector<8x128xf32>
    %c0_32 = arith.constant 0 : index
    %c0_33 = arith.constant 0 : index
    %51 = vector.load %arg13[%c0_32, %c0_33] : memref<8x128xf32, #tpu.memory_space<vmem>>, vector<8x128xf32>
    tpu.vector_store %arg13[%c0_32, %c0_33], %50 {strides = array<i32>} : memref<8x128xf32, #tpu.memory_space<vmem>>, vector<8x128xf32>,
    return
  }
  func.func @transform_0(%arg0: i32) -> (i32, i32) {
    %c0_i32 = arith.constant 0 : i32
    %c0_i32_0 = arith.constant 0 : i32
    return %arg0, %c0_i32 : i32, i32
  }
  func.func @transform_1(%arg0: i32) -> (i32, i32) {
    %c0_i32 = arith.constant 0 : i32
    %c0_i32_0 = arith.constant 0 : i32
    %c0_i32_1 = arith.constant 0 : i32
    return %c0_i32, %c0_i32_0 : i32, i32
  }
  func.func @transform_2(%arg0: i32) -> (i32, i32) {
    %c0_i32 = arith.constant 0 : i32
    %c0_i32_0 = arith.constant 0 : i32
    %c0_i32_1 = arith.constant 0 : i32
    return %c0_i32, %c0_i32_0 : i32, i32
  }
  func.func @transform_3(%arg0: i32) -> (i32, i32) {
    %c0_i32 = arith.constant 0 : i32
    %c0_i32_0 = arith.constant 0 : i32
    %c0_i32_1 = arith.constant 0 : i32
    return %c0_i32, %c0_i32_0 : i32, i32
  }
  func.func @transform_4(%arg0: i32) -> (i32, i32) {
    %c0_i32 = arith.constant 0 : i32
    %c0_i32_0 = arith.constant 0 : i32
    %c0_i32_1 = arith.constant 0 : i32
    return %c0_i32, %c0_i32_0 : i32, i32
  }
  func.func @transform_5(%arg0: i32) -> (i32, i32) {
    %c0_i32 = arith.constant 0 : i32
    %c0_i32_0 = arith.constant 0 : i32
    return %arg0, %c0_i32 : i32, i32
  }
  func.func @transform_6(%arg0: i32) -> (i32, i32) {
    %c0_i32 = arith.constant 0 : i32
    %c0_i32_0 = arith.constant 0 : i32
    %c0_i32_1 = arith.constant 0 : i32
    return %c0_i32, %c0_i32_0 : i32, i32
  }
  func.func @transform_7(%arg0: i32) -> (i32, i32) {
    %c0_i32 = arith.constant 0 : i32
    %c0_i32_0 = arith.constant 0 : i32
    %c0_i32_1 = arith.constant 0 : i32
    return %c0_i32, %c0_i32_0 : i32, i32
  }
  func.func @transform_8(%arg0: i32) -> (i32, i32) {
    %c0_i32 = arith.constant 0 : i32
    %c0_i32_0 = arith.constant 0 : i32
    %c0_i32_1 = arith.constant 0 : i32
    return %c0_i32, %c0_i32_0 : i32, i32
  }
  func.func @transform_9(%arg0: i32) -> (i32, i32) {
    %c0_i32 = arith.constant 0 : i32
    %c0_i32_0 = arith.constant 0 : i32
    %c0_i32_1 = arith.constant 0 : i32
    return %c0_i32, %c0_i32_0 : i32, i32
  }
  func.func @transform_10(%arg0: i32) -> (i32, i32) {
    %c0_i32 = arith.constant 0 : i32
    %c0_i32_0 = arith.constant 0 : i32
    return %arg0, %c0_i32 : i32, i32
  }
  func.func @transform_11(%arg0: i32) -> (i32, i32) {
    %c0_i32 = arith.constant 0 : i32
    %c0_i32_0 = arith.constant 0 : i32
    %c0_i32_1 = arith.constant 0 : i32
    return %c0_i32, %c0_i32_0 : i32, i32
  }
  func.func @transform_12(%arg0: i32) -> (i32, i32) {
    %c0_i32 = arith.constant 0 : i32
    %c0_i32_0 = arith.constant 0 : i32
    %c0_i32_1 = arith.constant 0 : i32
    return %c0_i32, %c0_i32_0 : i32, i32
  }
}

module attributes {stable_mosaic.version = 11 : i64} {
  func.func @_bn_relu_pool_kernel(%arg0: i32, %arg1: i32, %arg2: memref<1x4x4x512xf32, #tpu.memory_space<vmem>>, %arg3: memref<1x128xf32, #tpu.memory_space<vmem>>, %arg4: memref<1x128xf32, #tpu.memory_space<vmem>>, %arg5: memref<1x128xf32, #tpu.memory_space<vmem>>, %arg6: memref<1x128xf32, #tpu.memory_space<vmem>>, %arg7: memref<1x4x4x128xf32, #tpu.memory_space<vmem>>) attributes {dimension_semantics = [#tpu.dimension_semantics<parallel>, #tpu.dimension_semantics<parallel>], iteration_bounds = array<i64: 2, 1>, scalar_prefetch = 0 : i64, scratch_operands = 0 : i64, tpu.core_type = #tpu.core_type<tc>, window_params = [{transform_indices = @transform_0, window_bounds = array<i64: 1, 4, 4, 512>}, {pipeline_mode = #tpu.pipeline_mode<synchronous>, transform_indices = @transform_1, window_bounds = array<i64: 1, 128>}, {pipeline_mode = #tpu.pipeline_mode<synchronous>, transform_indices = @transform_2, window_bounds = array<i64: 1, 128>}, {pipeline_mode = #tpu.pipeline_mode<synchronous>, transform_indices = @transform_3, window_bounds = array<i64: 1, 128>}, {pipeline_mode = #tpu.pipeline_mode<synchronous>, transform_indices = @transform_4, window_bounds = array<i64: 1, 128>}, {transform_indices = @transform_5, window_bounds = array<i64: 1, 4, 4, 128>}]} {
    %c0 = arith.constant 0 : index
    %c0_0 = arith.constant 0 : index
    %0 = vector.load %arg4[%c0, %c0_0] : memref<1x128xf32, #tpu.memory_space<vmem>>, vector<1x128xf32>
    %cst = arith.constant 9.99999974E-6 : f32
    %1 = vector.broadcast %cst : f32 to vector<1x128xf32>
    %2 = arith.addf %0, %1 : vector<1x128xf32>
    %3 = math.rsqrt %2 : vector<1x128xf32>
    %c0_1 = arith.constant 0 : index
    %c0_2 = arith.constant 0 : index
    %4 = vector.load %arg3[%c0_1, %c0_2] : memref<1x128xf32, #tpu.memory_space<vmem>>, vector<1x128xf32>
    %c0_3 = arith.constant 0 : index
    %c0_4 = arith.constant 0 : index
    %5 = vector.load %arg5[%c0_3, %c0_4] : memref<1x128xf32, #tpu.memory_space<vmem>>, vector<1x128xf32>
    %c0_5 = arith.constant 0 : index
    %c0_6 = arith.constant 0 : index
    %6 = vector.load %arg6[%c0_5, %c0_6] : memref<1x128xf32, #tpu.memory_space<vmem>>, vector<1x128xf32>
    %c0_7 = arith.constant 0 : index
    %c0_8 = arith.constant 0 : index
    %c0_9 = arith.constant 0 : index
    %c0_10 = arith.constant 0 : index
    %7 = vector.load %arg2[%c0_7, %c0_8, %c0_9, %c0_10] : memref<1x4x4x512xf32, #tpu.memory_space<vmem>>, vector<1x4x4x128xf32>
    %8 = vector.shape_cast %7 : vector<1x4x4x128xf32> to vector<4x4x128xf32>
    %9 = vector.shape_cast %4 : vector<1x128xf32> to vector<1x1x128xf32>
    %10 = vector.broadcast %9 : vector<1x1x128xf32> to vector<4x4x128xf32>
    %11 = arith.subf %8, %10 : vector<4x4x128xf32>
    %12 = vector.shape_cast %3 : vector<1x128xf32> to vector<1x1x128xf32>
    %13 = vector.broadcast %12 : vector<1x1x128xf32> to vector<4x4x128xf32>
    %14 = arith.mulf %11, %13 : vector<4x4x128xf32>
    %15 = vector.shape_cast %5 : vector<1x128xf32> to vector<1x1x128xf32>
    %16 = vector.broadcast %15 : vector<1x1x128xf32> to vector<4x4x128xf32>
    %17 = arith.mulf %14, %16 : vector<4x4x128xf32>
    %18 = vector.shape_cast %6 : vector<1x128xf32> to vector<1x1x128xf32>
    %19 = vector.broadcast %18 : vector<1x1x128xf32> to vector<4x4x128xf32>
    %20 = arith.addf %17, %19 : vector<4x4x128xf32>
    %cst_11 = arith.constant 0.000000e+00 : f32
    %21 = vector.broadcast %cst_11 : f32 to vector<4x4x128xf32>
    %22 = arith.maximumf %20, %21 : vector<4x4x128xf32>
    %c0_12 = arith.constant 0 : index
    %c0_13 = arith.constant 0 : index
    %c0_14 = arith.constant 0 : index
    %c128 = arith.constant 128 : index
    %23 = vector.load %arg2[%c0_12, %c0_13, %c0_14, %c128] : memref<1x4x4x512xf32, #tpu.memory_space<vmem>>, vector<1x4x4x128xf32>
    %24 = vector.shape_cast %23 : vector<1x4x4x128xf32> to vector<4x4x128xf32>
    %25 = vector.shape_cast %4 : vector<1x128xf32> to vector<1x1x128xf32>
    %26 = vector.broadcast %25 : vector<1x1x128xf32> to vector<4x4x128xf32>
    %27 = arith.subf %24, %26 : vector<4x4x128xf32>
    %28 = vector.shape_cast %3 : vector<1x128xf32> to vector<1x1x128xf32>
    %29 = vector.broadcast %28 : vector<1x1x128xf32> to vector<4x4x128xf32>
    %30 = arith.mulf %27, %29 : vector<4x4x128xf32>
    %31 = vector.shape_cast %5 : vector<1x128xf32> to vector<1x1x128xf32>
    %32 = vector.broadcast %31 : vector<1x1x128xf32> to vector<4x4x128xf32>
    %33 = arith.mulf %30, %32 : vector<4x4x128xf32>
    %34 = vector.shape_cast %6 : vector<1x128xf32> to vector<1x1x128xf32>
    %35 = vector.broadcast %34 : vector<1x1x128xf32> to vector<4x4x128xf32>
    %36 = arith.addf %33, %35 : vector<4x4x128xf32>
    %cst_15 = arith.constant 0.000000e+00 : f32
    %37 = vector.broadcast %cst_15 : f32 to vector<4x4x128xf32>
    %38 = arith.maximumf %36, %37 : vector<4x4x128xf32>
    %39 = arith.maximumf %22, %38 : vector<4x4x128xf32>
    %c0_16 = arith.constant 0 : index
    %c0_17 = arith.constant 0 : index
    %c0_18 = arith.constant 0 : index
    %c256 = arith.constant 256 : index
    %40 = vector.load %arg2[%c0_16, %c0_17, %c0_18, %c256] : memref<1x4x4x512xf32, #tpu.memory_space<vmem>>, vector<1x4x4x128xf32>
    %41 = vector.shape_cast %40 : vector<1x4x4x128xf32> to vector<4x4x128xf32>
    %42 = vector.shape_cast %4 : vector<1x128xf32> to vector<1x1x128xf32>
    %43 = vector.broadcast %42 : vector<1x1x128xf32> to vector<4x4x128xf32>
    %44 = arith.subf %41, %43 : vector<4x4x128xf32>
    %45 = vector.shape_cast %3 : vector<1x128xf32> to vector<1x1x128xf32>
    %46 = vector.broadcast %45 : vector<1x1x128xf32> to vector<4x4x128xf32>
    %47 = arith.mulf %44, %46 : vector<4x4x128xf32>
    %48 = vector.shape_cast %5 : vector<1x128xf32> to vector<1x1x128xf32>
    %49 = vector.broadcast %48 : vector<1x1x128xf32> to vector<4x4x128xf32>
    %50 = arith.mulf %47, %49 : vector<4x4x128xf32>
    %51 = vector.shape_cast %6 : vector<1x128xf32> to vector<1x1x128xf32>
    %52 = vector.broadcast %51 : vector<1x1x128xf32> to vector<4x4x128xf32>
    %53 = arith.addf %50, %52 : vector<4x4x128xf32>
    %cst_19 = arith.constant 0.000000e+00 : f32
    %54 = vector.broadcast %cst_19 : f32 to vector<4x4x128xf32>
    %55 = arith.maximumf %53, %54 : vector<4x4x128xf32>
    %56 = arith.maximumf %39, %55 : vector<4x4x128xf32>
    %c0_20 = arith.constant 0 : index
    %c0_21 = arith.constant 0 : index
    %c0_22 = arith.constant 0 : index
    %c384 = arith.constant 384 : index
    %57 = vector.load %arg2[%c0_20, %c0_21, %c0_22, %c384] : memref<1x4x4x512xf32, #tpu.memory_space<vmem>>, vector<1x4x4x128xf32>
    %58 = vector.shape_cast %57 : vector<1x4x4x128xf32> to vector<4x4x128xf32>
    %59 = vector.shape_cast %4 : vector<1x128xf32> to vector<1x1x128xf32>
    %60 = vector.broadcast %59 : vector<1x1x128xf32> to vector<4x4x128xf32>
    %61 = arith.subf %58, %60 : vector<4x4x128xf32>
    %62 = vector.shape_cast %3 : vector<1x128xf32> to vector<1x1x128xf32>
    %63 = vector.broadcast %62 : vector<1x1x128xf32> to vector<4x4x128xf32>
    %64 = arith.mulf %61, %63 : vector<4x4x128xf32>
    %65 = vector.shape_cast %5 : vector<1x128xf32> to vector<1x1x128xf32>
    %66 = vector.broadcast %65 : vector<1x1x128xf32> to vector<4x4x128xf32>
    %67 = arith.mulf %64, %66 : vector<4x4x128xf32>
    %68 = vector.shape_cast %6 : vector<1x128xf32> to vector<1x1x128xf32>
    %69 = vector.broadcast %68 : vector<1x1x128xf32> to vector<4x4x128xf32>
    %70 = arith.addf %67, %69 : vector<4x4x128xf32>
    %cst_23 = arith.constant 0.000000e+00 : f32
    %71 = vector.broadcast %cst_23 : f32 to vector<4x4x128xf32>
    %72 = arith.maximumf %70, %71 : vector<4x4x128xf32>
    %73 = arith.maximumf %56, %72 : vector<4x4x128xf32>
    %74 = vector.shape_cast %73 : vector<4x4x128xf32> to vector<1x4x4x128xf32>
    %c0_24 = arith.constant 0 : index
    %c0_25 = arith.constant 0 : index
    %c0_26 = arith.constant 0 : index
    %c0_27 = arith.constant 0 : index
    %75 = vector.load %arg7[%c0_24, %c0_25, %c0_26, %c0_27] : memref<1x4x4x128xf32, #tpu.memory_space<vmem>>, vector<1x4x4x128xf32>
    tpu.vector_store %arg7[%c0_24, %c0_25, %c0_26, %c0_27], %74 {strides = array<i32>} : memref<1x4x4x128xf32, #tpu.memory_space<vmem>>, vector<1x4x4x128xf32>,
    return
  }
  func.func @transform_0(%arg0: i32, %arg1: i32) -> (i32, i32, i32, i32) {
    %c0_i32 = arith.constant 0 : i32
    %c0_i32_0 = arith.constant 0 : i32
    %c0_i32_1 = arith.constant 0 : i32
    return %arg0, %arg1, %c0_i32, %c0_i32_0 : i32, i32, i32, i32
  }
  func.func @transform_1(%arg0: i32, %arg1: i32) -> (i32, i32) {
    %c0_i32 = arith.constant 0 : i32
    %c0_i32_0 = arith.constant 0 : i32
    %c0_i32_1 = arith.constant 0 : i32
    return %c0_i32, %c0_i32_0 : i32, i32
  }
  func.func @transform_2(%arg0: i32, %arg1: i32) -> (i32, i32) {
    %c0_i32 = arith.constant 0 : i32
    %c0_i32_0 = arith.constant 0 : i32
    %c0_i32_1 = arith.constant 0 : i32
    return %c0_i32, %c0_i32_0 : i32, i32
  }
  func.func @transform_3(%arg0: i32, %arg1: i32) -> (i32, i32) {
    %c0_i32 = arith.constant 0 : i32
    %c0_i32_0 = arith.constant 0 : i32
    %c0_i32_1 = arith.constant 0 : i32
    return %c0_i32, %c0_i32_0 : i32, i32
  }
  func.func @transform_4(%arg0: i32, %arg1: i32) -> (i32, i32) {
    %c0_i32 = arith.constant 0 : i32
    %c0_i32_0 = arith.constant 0 : i32
    %c0_i32_1 = arith.constant 0 : i32
    return %c0_i32, %c0_i32_0 : i32, i32
  }
  func.func @transform_5(%arg0: i32, %arg1: i32) -> (i32, i32, i32, i32) {
    %c0_i32 = arith.constant 0 : i32
    %c0_i32_0 = arith.constant 0 : i32
    %c0_i32_1 = arith.constant 0 : i32
    return %arg0, %arg1, %c0_i32, %c0_i32_0 : i32, i32, i32, i32
  }
}

</mosaic_0001>

<llo_original>
// kernel: resnet_block_forward.7
$region0: #{resnet_block_forward.7}
  #allocation0 [shape = 'u32[]', space=smem, size = 0x4, offset = 0x4, fixed_abs, tag = 'smem constant byte address 0x4 - core index']
  #allocation1 [shape = 'u32[144,128]{1,0:T(1,128)}', space=vmem, size = 0x12000, scoped, tag = 'internal scratch']
  %s0 = inlined_call_operand.vmem [shape: f32[128,128], index: 0, kind: input, shape index: {}]
  %s1 = inlined_call_operand.vmem [shape: f32[1,128], index: 1, kind: input, shape index: {}]
  %s2 = inlined_call_operand.vmem [shape: f32[1,128], index: 2, kind: input, shape index: {}]
  %s3 = inlined_call_operand.vmem [shape: f32[1,128], index: 3, kind: input, shape index: {}]
  %s4 = inlined_call_operand.vmem [shape: f32[1,128], index: 4, kind: input, shape index: {}]
  %s5 = inlined_call_operand.vmem [shape: bf16[128,128], index: 5, kind: output, shape index: {}]
  %s6 = sld [smem:[#allocation0]]
  $region30: #{resnet_block_forward.7} parent=0
    _
  %s8 = ssub.s32 1, %s6
  %s9 = scalar_select 0, %s8, %s6
  // Predicated region
  $region2: #{resnet_block_forward.7} parent=0 // pred_check
    _
  $region3: #{resnet_block_forward.7} parent=0 // pred_check_branch
    %11 = sbr.rel (0) target = $region5
  $region4: #{resnet_block_forward.7} parent=0 // pred_region
    _
  $region5: #{resnet_block_forward.7} parent=0 // pred_fallthru
    _
  // Predicated region
  $region6: #{resnet_block_forward.7} parent=0 // pred_check
    _
  $region7: #{resnet_block_forward.7} parent=0 // pred_check_branch
    %13 = sbr.rel (0) target = $region9
  $region8: #{resnet_block_forward.7} parent=0 // pred_region
    _
  $region9: #{resnet_block_forward.7} parent=0 // pred_fallthru
    _
  // Predicated region
  $region10: #{resnet_block_forward.7} parent=0 // pred_check
    _
  $region11: #{resnet_block_forward.7} parent=0 // pred_check_branch
    %15 = sbr.rel (0) target = $region13
  $region12: #{resnet_block_forward.7} parent=0 // pred_region
    _
  $region13: #{resnet_block_forward.7} parent=0 // pred_fallthru
    _
  // Predicated region
  $region14: #{resnet_block_forward.7} parent=0 // pred_check
    _
  $region15: #{resnet_block_forward.7} parent=0 // pred_check_branch
    %17 = sbr.rel (0) target = $region17
  $region16: #{resnet_block_forward.7} parent=0 // pred_region
    _
  $region17: #{resnet_block_forward.7} parent=0 // pred_fallthru
    _
  // Predicated region
  $region18: #{resnet_block_forward.7} parent=0 // pred_check
    _
  $region19: #{resnet_block_forward.7} parent=0 // pred_check_branch
    %19 = sbr.rel (0) target = $region21
  $region20: #{resnet_block_forward.7} parent=0 // pred_region
    _
  $region21: #{resnet_block_forward.7} parent=0 // pred_fallthru
    _
  %v20 = vld [vmem:[%s2] sm:$0x1]
  %v21 = vadd.f32 %v20, 1e-05
  %v22 = vrsqrt.pop %v21
  %v23 = vld [vmem:[%s0] sm:$0xff]
  %v24 = vld [vmem:[%s0 + $0x8] sm:$0xff]
  %v25 = vld [vmem:[%s0 + $0x10] sm:$0xff]
  %v26 = vld [vmem:[%s0 + $0x18] sm:$0xff]
  %v27 = vld [vmem:[%s0 + $0x20] sm:$0xff]
  %v28 = vld [vmem:[%s0 + $0x28] sm:$0xff]
  %v29 = vld [vmem:[%s0 + $0x30] sm:$0xff]
  %v30 = vld [vmem:[%s0 + $0x38] sm:$0xff]
  %v31 = vld [vmem:[%s0 + $0x40] sm:$0xff]
  %v32 = vld [vmem:[%s0 + $0x48] sm:$0xff]
  %v33 = vld [vmem:[%s0 + $0x50] sm:$0xff]
  %v34 = vld [vmem:[%s0 + $0x58] sm:$0xff]
  %v35 = vld [vmem:[%s0 + $0x60] sm:$0xff]
  %v36 = vld [vmem:[%s0 + $0x68] sm:$0xff]
  %v37 = vld [vmem:[%s0 + $0x70] sm:$0xff]
  %v38 = vld [vmem:[%s0 + $0x78] sm:$0xff]
  %v39 = vld [vmem:[%s1] sm:$0x1]
  %v41 = vlaneseq
  %v42 = vshrl.u32 %v41, 7
  %v43 = vsub.s32 0, %v42
  %v44 = vrot.slane %v39, %v43
  %v46 = vsub.f32 %v23, %v44
  %v47 = vsub.f32 %v24, %v44
  %v48 = vsub.f32 %v25, %v44
  %v49 = vsub.f32 %v26, %v44
  %v50 = vsub.f32 %v27, %v44
  %v51 = vsub.f32 %v28, %v44
  %v52 = vsub.f32 %v29, %v44
  %v53 = vsub.f32 %v30, %v44
  %v54 = vsub.f32 %v31, %v44
  %v55 = vsub.f32 %v32, %v44
  %v56 = vsub.f32 %v33, %v44
  %v57 = vsub.f32 %v34, %v44
  %v58 = vsub.f32 %v35, %v44
  %v59 = vsub.f32 %v36, %v44
  %v60 = vsub.f32 %v37, %v44
  %v61 = vsub.f32 %v38, %v44
  %v63 = vlaneseq
  %v64 = vshrl.u32 %v63, 7
  %v65 = vsub.s32 0, %v64
  %v66 = vrot.slane %v22, %v65
  %v68 = vmul.f32 %v46, %v66
  %v69 = vmul.f32 %v47, %v66
  %v70 = vmul.f32 %v48, %v66
  %v71 = vmul.f32 %v49, %v66
  %v72 = vmul.f32 %v50, %v66
  %v73 = vmul.f32 %v51, %v66
  %v74 = vmul.f32 %v52, %v66
  %v75 = vmul.f32 %v53, %v66
  %v76 = vmul.f32 %v54, %v66
  %v77 = vmul.f32 %v55, %v66
  %v78 = vmul.f32 %v56, %v66
  %v79 = vmul.f32 %v57, %v66
  %v80 = vmul.f32 %v58, %v66
  %v81 = vmul.f32 %v59, %v66
  %v82 = vmul.f32 %v60, %v66
  %v83 = vmul.f32 %v61, %v66
  %v84 = vld [vmem:[%s3] sm:$0x1]
  %v86 = vlaneseq
  %v87 = vshrl.u32 %v86, 7
  %v88 = vsub.s32 0, %v87
  %v89 = vrot.slane %v84, %v88
  %v91 = vmul.f32 %v68, %v89
  %v92 = vmul.f32 %v69, %v89
  %v93 = vmul.f32 %v70, %v89
  %v94 = vmul.f32 %v71, %v89
  %v95 = vmul.f32 %v72, %v89
  %v96 = vmul.f32 %v73, %v89
  %v97 = vmul.f32 %v74, %v89
  %v98 = vmul.f32 %v75, %v89
  %v99 = vmul.f32 %v76, %v89
  %v100 = vmul.f32 %v77, %v89
  %v101 = vmul.f32 %v78, %v89
  %v102 = vmul.f32 %v79, %v89
  %v103 = vmul.f32 %v80, %v89
  %v104 = vmul.f32 %v81, %v89
  %v105 = vmul.f32 %v82, %v89
  %v106 = vmul.f32 %v83, %v89
  %v107 = vld [vmem:[%s4] sm:$0x1]
  %v109 = vlaneseq
  %v110 = vshrl.u32 %v109, 7
  %v111 = vsub.s32 0, %v110
  %v112 = vrot.slane %v107, %v111
  %v114 = vadd.f32 %v91, %v112
  %v115 = vadd.f32 %v92, %v112
  %v116 = vadd.f32 %v93, %v112
  %v117 = vadd.f32 %v94, %v112
  %v118 = vadd.f32 %v95, %v112
  %v119 = vadd.f32 %v96, %v112
  %v120 = vadd.f32 %v97, %v112
  %v121 = vadd.f32 %v98, %v112
  %v122 = vadd.f32 %v99, %v112
  %v123 = vadd.f32 %v100, %v112
  %v124 = vadd.f32 %v101, %v112
  %v125 = vadd.f32 %v102, %v112
  %v126 = vadd.f32 %v103, %v112
  %v127 = vadd.f32 %v104, %v112
  %v128 = vadd.f32 %v105, %v112
  %v129 = vadd.f32 %v106, %v112
  %v130 = vmax.f32 %v114, 0.0
  %v131 = vmax.f32 %v115, 0.0
  %v132 = vmax.f32 %v116, 0.0
  %v133 = vmax.f32 %v117, 0.0
  %v134 = vmax.f32 %v118, 0.0
  %v135 = vmax.f32 %v119, 0.0
  %v136 = vmax.f32 %v120, 0.0
  %v137 = vmax.f32 %v121, 0.0
  %v138 = vmax.f32 %v122, 0.0
  %v139 = vmax.f32 %v123, 0.0
  %v140 = vmax.f32 %v124, 0.0
  %v141 = vmax.f32 %v125, 0.0
  %v142 = vmax.f32 %v126, 0.0
  %v143 = vmax.f32 %v127, 0.0
  %v144 = vmax.f32 %v128, 0.0
  %v145 = vmax.f32 %v129, 0.0
  %v146 = vpack.c.bf16 %v131, %v130
  %v147 = vpack.c.bf16 %v133, %v132
  %v148 = vpack.c.bf16 %v135, %v134
  %v149 = vpack.c.bf16 %v137, %v136
  %v150 = vpack.c.bf16 %v139, %v138
  %v151 = vpack.c.bf16 %v141, %v140
  %v152 = vpack.c.bf16 %v143, %v142
  %v153 = vpack.c.bf16 %v145, %v144
  %v162 = vunpack.c.l.b16 %v146
  %v163 = vunpack.c.h.b16 %v146
  %v164 = vunpack.c.l.b16 %v147
  %v165 = vunpack.c.h.b16 %v147
  %v166 = vunpack.c.l.b16 %v148
  %v167 = vunpack.c.h.b16 %v148
  %v168 = vunpack.c.l.b16 %v149
  %v169 = vunpack.c.h.b16 %v149
  %v170 = vunpack.c.l.b16 %v150
  %v171 = vunpack.c.h.b16 %v150
  %v172 = vunpack.c.l.b16 %v151
  %v173 = vunpack.c.h.b16 %v151
  %v174 = vunpack.c.l.b16 %v152
  %v175 = vunpack.c.h.b16 %v152
  %v176 = vunpack.c.l.b16 %v153
  %v177 = vunpack.c.h.b16 %v153
  %v178 = vpack.c.b16 %v162, %v162
  %v179 = vpack.c.b16 %v163, %v163
  %v180 = vpack.c.b16 %v164, %v164
  %v181 = vpack.c.b16 %v165, %v165
  %v182 = vpack.c.b16 %v166, %v166
  %v183 = vpack.c.b16 %v167, %v167
  %v184 = vpack.c.b16 %v168, %v168
  %v185 = vpack.c.b16 %v169, %v169
  %v186 = vpack.c.b16 %v170, %v170
  %v187 = vpack.c.b16 %v171, %v171
  %v188 = vpack.c.b16 %v172, %v172
  %v189 = vpack.c.b16 %v173, %v173
  %v190 = vpack.c.b16 %v174, %v174
  %v191 = vpack.c.b16 %v175, %v175
  %v192 = vpack.c.b16 %v176, %v176
  %v193 = vpack.c.b16 %v177, %v177
  %210 = vst [vmem:[%s5] sm:$0xf] %v178
  %211 = vst [vmem:[%s5 + $0x4] sm:$0xf] %v179
  %212 = vst [vmem:[%s5 + $0x8] sm:$0xf] %v180
  %213 = vst [vmem:[%s5 + $0xc] sm:$0xf] %v181
  %214 = vst [vmem:[%s5 + $0x10] sm:$0xf] %v182
  %215 = vst [vmem:[%s5 + $0x14] sm:$0xf] %v183
  %216 = vst [vmem:[%s5 + $0x18] sm:$0xf] %v184
  %217 = vst [vmem:[%s5 + $0x1c] sm:$0xf] %v185
  %218 = vst [vmem:[%s5 + $0x20] sm:$0xf] %v186
  %219 = vst [vmem:[%s5 + $0x24] sm:$0xf] %v187
  %220 = vst [vmem:[%s5 + $0x28] sm:$0xf] %v188
  %221 = vst [vmem:[%s5 + $0x2c] sm:$0xf] %v189
  %222 = vst [vmem:[%s5 + $0x30] sm:$0xf] %v190
  %223 = vst [vmem:[%s5 + $0x34] sm:$0xf] %v191
  %224 = vst [vmem:[%s5 + $0x38] sm:$0xf] %v192
  %225 = vst [vmem:[%s5 + $0x3c] sm:$0xf] %v193
  // Predicated region
  $region22: #{resnet_block_forward.7} parent=0 // pred_check
    _
  $region23: #{resnet_block_forward.7} parent=0 // pred_check_branch
    %227 = sbr.rel (0) target = $region25
  $region24: #{resnet_block_forward.7} parent=0 // pred_region
    _
  $region25: #{resnet_block_forward.7} parent=0 // pred_fallthru
    _
  // Predicated region
  $region26: #{resnet_block_forward.7} parent=0 // pred_check
    _
  $region27: #{resnet_block_forward.7} parent=0 // pred_check_branch
    %229 = sbr.rel (0) target = $region29
  $region28: #{resnet_block_forward.7} parent=0 // pred_region
    _
  $region29: #{resnet_block_forward.7} parent=0 // pred_fallthru
    _

// kernel: resnet_block_forward.6
$region0: #{resnet_block_forward.6}
  #allocation0 [shape = 'u32[]', space=smem, size = 0x4, offset = 0x4, fixed_abs, tag = 'smem constant byte address 0x4 - core index']
  #allocation1 [shape = 'u32[144,128]{1,0:T(1,128)}', space=vmem, size = 0x12000, scoped, tag = 'internal scratch']
  %s0 = inlined_call_operand.vmem [shape: bf16[2,9,9,16], index: 0, kind: input, shape index: {}]
  %s1 = inlined_call_operand.vmem [shape: bf16[4,16,128], index: 1, kind: input, shape index: {}]
  %s2 = inlined_call_operand.vmem [shape: f32[2,8,8,128], index: 2, kind: output, shape index: {0}]
  %s3 = inlined_call_operand.vmem [shape: f32[2,8,128], index: 3, kind: output, shape index: {1}]
  %s4 = inlined_call_operand.vmem [shape: f32[2,8,128], index: 4, kind: output, shape index: {2}]
  %5 = xla_tuple %s2, %s3, %s4
  %s6 = sld [smem:[#allocation0]]
  $region61: #{resnet_block_forward.6} parent=0
    _
  %s8 = ssub.s32 1, %s6
  %s9 = scalar_select 0, %s8, %s6
  loop: start=0, step=1, limit=6
  $region2: #{resnet_block_forward.6} parent=0 // loop_pre_header
    _
  $region3: #{resnet_block_forward.6} parent=0 // loop_header
    %s11 = sphi 0, %s15
    %p12 = scmp.ge.s32.totalorder %s11, 6
    %s18 = sphi 0, %s30
    %s19 = sphi 0, %s26
    %s20 = sphi 0, %s18
    %s21 = sphi 0, %s19
    %s22 = sphi 0, %s20
    %s23 = sphi 0, %s21
    %s33 = sphi 0, %s35
    %s36 = sphi 0, %s33
    %s37 = sphi 0, %s36
    %s53 = sphi 0, %s37
    %s57 = sphi 0, %s57
    %s59 = sphi 0, %s57
    %s60 = sphi 0, %s59
    %s74 = sphi 0, %s60
    %s82 = sphi 0, %s84
    %s85 = sphi 0, %s82
    %s86 = sphi 0, %s85
    %s102 = sphi 0, %s86
    %s108 = sphi 0, %s110
    %s111 = sphi 0, %s108
    %s112 = sphi 0, %s111
    %s128 = sphi 0, %s112
    %s134 = sphi 0, %s136
    %s137 = sphi 0, %s134
    %s138 = sphi 0, %s137
    %s154 = sphi 0, %s138
  $region4: #{resnet_block_forward.6} parent=0 // loop_header_branch
    %14 = sbr.rel (%p12) target = $region8
  $region5: #{resnet_block_forward.6} parent=0 // loop_body
    %s16 = ssub.s32 %s11, 1
    %s17 = ssub.s32 %s11, 2
    %s24 = sadd.s32 1, %s19
    %p25 = scmp.ge.s32.totalorder %s24, 2
    %s26 = scalar_select %p25, 0, %s24
    %s27 = sadd.s32 1, %s18
    %s28 = scalar_select %p25, %s27, %s18
    %p29 = scmp.ge.s32.totalorder %s28, 2
    %s30 = scalar_select %p29, 0, %s28
    %s31 = ssub.s32 %s18, %s30
    %p32 = scmp.eq.s32.totalorder %s31, 0
    %s34 = sadd.s32 %s33, 1
    %s35 = scalar_select %p32, %s33, %s34
    %p38 = pneg %p32
    %p39 = scmp.eq.s32.totalorder %s11, 3
    %p40 = por %p38, %p39
    %p41 = scmp.ne.s32.totalorder %s33, %s36
    %p42 = scmp.eq.s32.totalorder %s11, 0
    %p43 = por %p41, %p42
    %p44 = scmp.ne.s32.totalorder %s33, %s36
    %p45 = scmp.eq.s32.totalorder %s16, 3
    %p46 = por %p44, %p45
    %p47 = scmp.ne.s32.totalorder %s36, %s37
    %p48 = scmp.eq.s32.totalorder %s16, 0
    %p49 = por %p47, %p48
    %p50 = scmp.ne.s32.totalorder %s36, %s37
    %p51 = scmp.eq.s32.totalorder %s17, 3
    %p52 = por %p50, %p51
    %p54 = scmp.ne.s32.totalorder %s37, %s53
    %p55 = scmp.eq.s32.totalorder %s17, 0
    %p56 = por %p54, %p55
    %s58 = sadd.s32 %s57, 1
    %p61 = scmp.eq.s32.totalorder %s11, 3
    %p62 = scmp.ne.s32.totalorder %s57, %s59
    %p63 = scmp.eq.s32.totalorder %s11, 0
    %p64 = por %p62, %p63
    %p65 = scmp.ne.s32.totalorder %s57, %s59
    %p66 = scmp.eq.s32.totalorder %s16, 3
    %p67 = por %p65, %p66
    %p68 = scmp.ne.s32.totalorder %s59, %s60
    %p69 = scmp.eq.s32.totalorder %s16, 0
    %p70 = por %p68, %p69
    %p71 = scmp.ne.s32.totalorder %s59, %s60
    %p72 = scmp.eq.s32.totalorder %s17, 3
    %p73 = por %p71, %p72
    %p75 = scmp.ne.s32.totalorder %s60, %s74
    %p76 = scmp.eq.s32.totalorder %s17, 0
    %p77 = por %p75, %p76
    %s78 = ssub.s32 %s18, %s30
    %s79 = ssub.s32 %s19, %s26
    %s80 = sor.u32 %s78, %s79
    %p81 = scmp.eq.s32.totalorder %s80, 0
    %s83 = sadd.s32 %s82, 1
    %s84 = scalar_select %p81, %s82, %s83
    %p87 = pneg %p81
    %p88 = scmp.eq.s32.totalorder %s11, 3
    %p89 = por %p87, %p88
    %p90 = scmp.ne.s32.totalorder %s82, %s85
    %p91 = scmp.eq.s32.totalorder %s11, 0
    %p92 = por %p90, %p91
    %p93 = scmp.ne.s32.totalorder %s82, %s85
    %p94 = scmp.eq.s32.totalorder %s16, 3
    %p95 = por %p93, %p94
    %p96 = scmp.ne.s32.totalorder %s85, %s86
    %p97 = scmp.eq.s32.totalorder %s16, 0
    %p98 = por %p96, %p97
    %p99 = scmp.ne.s32.totalorder %s85, %s86
    %p100 = scmp.eq.s32.totalorder %s17, 3
    %p101 = por %p99, %p100
    %p103 = scmp.ne.s32.totalorder %s86, %s102
    %p104 = scmp.eq.s32.totalorder %s17, 0
    %p105 = por %p103, %p104
    %s106 = ssub.s32 %s18, %s30
    %p107 = scmp.eq.s32.totalorder %s106, 0
    %s109 = sadd.s32 %s108, 1
    %s110 = scalar_select %p107, %s108, %s109
    %p113 = pneg %p107
    %p114 = scmp.eq.s32.totalorder %s11, 3
    %p115 = por %p113, %p114
    %p116 = scmp.ne.s32.totalorder %s108, %s111
    %p117 = scmp.eq.s32.totalorder %s11, 0
    %p118 = por %p116, %p117
    %p119 = scmp.ne.s32.totalorder %s108, %s111
    %p120 = scmp.eq.s32.totalorder %s16, 3
    %p121 = por %p119, %p120
    %p122 = scmp.ne.s32.totalorder %s111, %s112
    %p123 = scmp.eq.s32.totalorder %s16, 0
    %p124 = por %p122, %p123
    %p125 = scmp.ne.s32.totalorder %s111, %s112
    %p126 = scmp.eq.s32.totalorder %s17, 3
    %p127 = por %p125, %p126
    %p129 = scmp.ne.s32.totalorder %s112, %s128
    %p130 = scmp.eq.s32.totalorder %s17, 0
    %p131 = por %p129, %p130
    %s132 = ssub.s32 %s18, %s30
    %p133 = scmp.eq.s32.totalorder %s132, 0
    %s135 = sadd.s32 %s134, 1
    %s136 = scalar_select %p133, %s134, %s135
    %p139 = pneg %p133
    %p140 = scmp.eq.s32.totalorder %s11, 3
    %p141 = por %p139, %p140
    %p142 = scmp.ne.s32.totalorder %s134, %s137
    %p143 = scmp.eq.s32.totalorder %s11, 0
    %p144 = por %p142, %p143
    %p145 = scmp.ne.s32.totalorder %s134, %s137
    %p146 = scmp.eq.s32.totalorder %s16, 3
    %p147 = por %p145, %p146
    %p148 = scmp.ne.s32.totalorder %s137, %s138
    %p149 = scmp.eq.s32.totalorder %s16, 0
    %p150 = por %p148, %p149
    %p151 = scmp.ne.s32.totalorder %s137, %s138
    %p152 = scmp.eq.s32.totalorder %s17, 3
    %p153 = por %p151, %p152
    %p155 = scmp.ne.s32.totalorder %s138, %s154
    %p156 = scmp.eq.s32.totalorder %s17, 0
    %p157 = por %p155, %p156
    %p158 = scmp.le.s32.totalorder 1, %s11
    %p159 = scmp.lt.s32.totalorder %s11, 5
    %p160 = pnand %p158, %p159
    %p161 = pneg %p160
    // Predicated region
    $region9: #{resnet_block_forward.6} parent=5 // pred_check
      _
    $region10: #{resnet_block_forward.6} parent=5 // pred_check_branch
      %163 = sbr.rel (%p160) target = $region12
    $region11: #{resnet_block_forward.6} parent=5 // pred_region
      %s164 = ssub.s32 %s11, 1
      // Predicated region
      $region13: #{resnet_block_forward.6} parent=11 // pred_check
        %p165 = pneg %p70
      $region14: #{resnet_block_forward.6} parent=11 // pred_check_branch
        %167 = sbr.rel (%p165) target = $region16
      $region15: #{resnet_block_forward.6} parent=11 // pred_region
        _
      $region16: #{resnet_block_forward.6} parent=11 // pred_fallthru
        _
    $region12: #{resnet_block_forward.6} parent=5 // pred_fallthru
      _
    %p168 = scmp.lt.s32.totalorder %s11, 4
    // Predicated region
    $region17: #{resnet_block_forward.6} parent=5 // pred_check
      %p169 = pneg %p168
    $region18: #{resnet_block_forward.6} parent=5 // pred_check_branch
      %171 = sbr.rel (%p169) target = $region20
    $region19: #{resnet_block_forward.6} parent=5 // pred_region
      // Predicated region
      $region21: #{resnet_block_forward.6} parent=19 // pred_check
        %p172 = pneg %p43
      $region22: #{resnet_block_forward.6} parent=19 // pred_check_branch
        %174 = sbr.rel (%p172) target = $region24
      $region23: #{resnet_block_forward.6} parent=19 // pred_region
        %p175 = scmp.lt.s32.totalorder %s18, 1
        %s176 = scalar_select %p175, %s18, 1
        %s177 = smul.addr %s176, 18
        %s178 = smul.addr %s177, 4
        %s179 = scalar_lea.vmem %s0, %s178
      $region24: #{resnet_block_forward.6} parent=19 // pred_fallthru
        _
    $region20: #{resnet_block_forward.6} parent=5 // pred_fallthru
      _
    %p180 = scmp.le.s32.totalorder 1, %s11
    %p181 = scmp.lt.s32.totalorder %s11, 5
    %p182 = pnand %p180, %p181
    %p183 = pneg %p182
    // Predicated region
    $region25: #{resnet_block_forward.6} parent=5 // pred_check
      _
    $region26: #{resnet_block_forward.6} parent=5 // pred_check_branch
      %185 = sbr.rel (%p182) target = $region28
    $region27: #{resnet_block_forward.6} parent=5 // pred_region
      %s186 = ssub.s32 %s11, 1
      %p187 = scmp.lt.s32.totalorder %s20, 1
      %s188 = scalar_select %p187, %s20, 1
      %s189 = smul.addr %s188, 18
      %s190 = smul.addr %s189, 4
      %s191 = scalar_lea.vmem %s0, %s190
      %p192 = pneg %p49
      %p193 = pneg %p46
      %p194 = pneg %p70
      %p195 = pneg %p67
      %p196 = pneg %p98
      %p197 = pneg %p95
      %s198 = smul.u32 4, %s21
      %p199 = scmp.lt.s32.totalorder %s20, 1
      %s200 = scalar_select %p199, %s20, 1
      %p201 = scmp.lt.s32.totalorder %s198, 7
      %s202 = scalar_select %p201, %s198, 7
      %s203 = smul.addr %s200, 8
      %s204 = sadd.s32 %s202, %s203
      %s205 = smul.addr %s204, 8
      %s206 = scalar_lea.vmem %s2, %s205
      %p207 = pneg %p124
      %p208 = pneg %p121
      %p209 = scmp.lt.s32.totalorder %s20, 1
      %s210 = scalar_select %p209, %s20, 1
      %s211 = smul.addr %s210, 8
      %s212 = scalar_lea.vmem %s3, %s211
      %p213 = pneg %p150
      %p214 = pneg %p147
      %p215 = scmp.lt.s32.totalorder %s20, 1
      %s216 = scalar_select %p215, %s20, 1
      %s217 = smul.addr %s216, 8
      %s218 = scalar_lea.vmem %s4, %s217
      %p219 = scmp.lt.s32.totalorder %s20, 1
      %s220 = scalar_select %p219, %s20, 1
      %s221 = smul.addr %s220, 18
      %s222 = smul.addr %s221, 4
      %s223 = scalar_lea.vmem %s0, %s222
      %s224 = smul.u32 4, %s21
      %p225 = scmp.lt.s32.totalorder %s20, 1
      %s226 = scalar_select %p225, %s20, 1
      %p227 = scmp.lt.s32.totalorder %s224, 7
      %s228 = scalar_select %p227, %s224, 7
      %s229 = smul.addr %s226, 8
      %s230 = sadd.s32 %s228, %s229
      %s231 = smul.addr %s230, 8
      %s232 = scalar_lea.vmem %s2, %s231
      %s233 = smul.u32 4, %s21
      %p234 = scmp.lt.s32.totalorder %s20, 1
      %s235 = scalar_select %p234, %s20, 1
      %s236 = smul.addr %s235, 8
      %s237 = scalar_lea.vmem %s3, %s236
      %p238 = scmp.lt.s32.totalorder %s20, 1
      %s239 = scalar_select %p238, %s20, 1
      %s240 = smul.addr %s239, 8
      %s241 = scalar_lea.vmem %s4, %s240
      %p243 = scmp.eq.s32.totalorder %s21, 0
      // Predicated region
      $region29: #{resnet_block_forward.6} parent=27 // pred_check
        %p244 = pneg %p243
      $region30: #{resnet_block_forward.6} parent=27 // pred_check_branch
        %246 = sbr.rel (%p244) target = $region32
      $region31: #{resnet_block_forward.6} parent=27 // pred_region
        %247 = vst [vmem:[%s237] sm:$0xff] 0.0
        %248 = vst [vmem:[%s241] sm:$0xff] 0.0
      $region32: #{resnet_block_forward.6} parent=27 // pred_fallthru
        _
      %s249 = smul.u32 %s21, 4
      %s250 = smul.u32 %s249, 2
      %s251 = smul.addr %s250, 4
      %s252 = scalar_lea.vmem %s223, %s251
      %v253 = vld [vmem:[%s252] sm:$0xf]
      %v254 = vld [vmem:[%s252 + $0x8] sm:$0xf]
      %v255 = vld [vmem:[%s252 + $0x10] sm:$0xf]
      %v256 = vld [vmem:[%s252 + $0x18] sm:$0xf]
      %v257 = vld [vmem:[%s1] sm:$0xf]
      %v258 = vld [vmem:[%s1 + $0x4] sm:$0xf]
      %v259 = vld [vmem:[%s252 + $0x4] sm:$0x1]
      %v260 = vld [vmem:[%s252 + $0xc] sm:$0x1]
      %v261 = vld [vmem:[%s252 + $0x14] sm:$0x1]
      %v262 = vld [vmem:[%s252 + $0x1c] sm:$0x1]
      %vm263 = vsmask.f32 3328
      %vm264 = vsmask.f32 7440
      %vm265 = vmor %vm263, %vm264
      %v267 = vshrl.u32 %v253, 16
      %v269 = vrot.slane %v267, 4
      %v270 = vshll.u32 %v253, 16
      %v272 = vrot.slane %v270, 5
      %v273 = vor.u32 %v269, %v272
      %v274 = vrot.slane %v273, 4
      %v276 = vshll.u32 %v259, 16
      %v278 = vrot.slane %v276, 5
      %v279 = vsel %vm265, %v274, %v278
      %v281 = vshrl.u32 %v254, 16
      %v283 = vrot.slane %v281, 4
      %v284 = vshll.u32 %v254, 16
      %v286 = vrot.slane %v284, 5
      %v287 = vor.u32 %v283, %v286
      %v288 = vrot.slane %v287, 4
      %v290 = vshll.u32 %v260, 16
      %v292 = vrot.slane %v290, 5
      %v293 = vsel %vm265, %v288, %v292
      %v295 = vshrl.u32 %v255, 16
      %v297 = vrot.slane %v295, 4
      %v298 = vshll.u32 %v255, 16
      %v300 = vrot.slane %v298, 5
      %v301 = vor.u32 %v297, %v300
      %v302 = vrot.slane %v301, 4
      %v304 = vshll.u32 %v261, 16
      %v306 = vrot.slane %v304, 5
      %v307 = vsel %vm265, %v302, %v306
      %v309 = vshrl.u32 %v256, 16
      %v311 = vrot.slane %v309, 4
      %v312 = vshll.u32 %v256, 16
      %v314 = vrot.slane %v312, 5
      %v315 = vor.u32 %v311, %v314
      %v316 = vrot.slane %v315, 4
      %v318 = vshll.u32 %v262, 16
      %v320 = vrot.slane %v318, 5
      %v321 = vsel %vm265, %v316, %v320
      %s322 = scalar_lea.vmem %s1, 8
      %v323 = vld [vmem:[%s322] sm:$0xf]
      %v324 = vld [vmem:[%s322 + $0x4] sm:$0xf]
      %v325 = vunpack.c.l.b16 %v279
      %v326 = vunpack.c.l.b16 %v293
      %v327 = vunpack.c.l.b16 %v307
      %v328 = vunpack.c.l.b16 %v321
      %v329 = vpack.c.b16 %v326, %v325
      %v330 = vpack.c.b16 %v328, %v327
      %v333 = vunpack.c.l.b16 %v323
      %v334 = vunpack.c.l.b16 %v324
      %v335 = vpack.c.b16 %v334, %v333
      %vm337 = vcmask 130048
      %v339 = vsel %vm337, %v329, 0
      %v342 = vsel %vm337, %v330, 0
      %344 = vmatprep.subr.bf16.mxu0 0
      %345 = vmatpush1.bf16.msra.mxu0 0
      %346 = vmatprep.subr.bf16.mxu0 0
      %347 = vmatpush1.bf16.msra.mxu0 0
      %348 = vmatprep.subr.bf16.mxu0 0
      %349 = vmatpush1.bf16.msra.mxu0 0
      %350 = vmatprep.subr.bf16.mxu0 0
      %351 = vmatpush1.bf16.msra.mxu0 0
      %352 = vmatprep.subr.bf16.mxu0 0
      %353 = vmatpush1.bf16.msra.mxu0 0
      %354 = vmatprep.subr.bf16.mxu0 0
      %355 = vmatpush1.bf16.msra.mxu0 0
      %356 = vmatprep.subr.bf16.mxu0 0
      %357 = vmatpush1.bf16.msra.mxu0 0
      %358 = vmatprep.subr.bf16.mxu0 0
      %359 = vmatpush1.bf16.msra.mxu0 %v335
      %360 = vmatprep.subr.bf16.mxu0 0
      %361 = vmatpush2.bf16.msra.mxu0 0
      %362 = vmatprep.subr.bf16.mxu0 0
      %363 = vmatpush2.bf16.msra.mxu0 0
      %364 = vmatprep.subr.bf16.mxu0 0
      %365 = vmatpush2.bf16.msra.mxu0 0
      %366 = vmatprep.subr.bf16.mxu0 0
      %367 = vmatpush2.bf16.msra.mxu0 0
      %368 = vmatprep.subr.bf16.mxu0 0
      %369 = vmatpush2.bf16.msra.mxu0 0
      %370 = vmatprep.subr.bf16.mxu0 0
      %371 = vmatpush2.bf16.msra.mxu0 0
      %372 = vmatprep.subr.bf16.mxu0 0
      %373 = vmatpush2.bf16.msra.mxu0 0
      %374 = vmatprep.subr.bf16.mxu0 0
      %375 = vmatpush2.bf16.msra.mxu0 0
      %376 = vmatprep.mubr.bf16.mxu0 0
      %377 = vmatmul.mubr.bf16.gmra.mxu0 %v339
      %v378 = vpop.f32.mrf.mxu0
      %v379 = vadd.f32 0.0, %v378
      %v380 = vpop.f32.mrf.mxu0
      %v381 = vpop.f32.mrf.mxu0
      %v382 = vadd.f32 0.0, %v381
      %v383 = vpop.f32.mrf.mxu0
      %384 = vmatprep.mubr.bf16.mxu0 0
      %385 = vmatmul.mubr.bf16.gmra.mxu0 %v342
      %v386 = vpop.f32.mrf.mxu0
      %v387 = vadd.f32 0.0, %v386
      %v388 = vpop.f32.mrf.mxu0
      %v389 = vpop.f32.mrf.mxu0
      %v390 = vadd.f32 0.0, %v389
      %v391 = vpop.f32.mrf.mxu0
      %392 = vdwg.mxu0
      %v397 = vunpack.c.l.b16 %v253
      %v398 = vunpack.c.l.b16 %v254
      %v399 = vunpack.c.l.b16 %v255
      %v400 = vunpack.c.l.b16 %v256
      %v401 = vpack.c.b16 %v398, %v397
      %v402 = vpack.c.b16 %v400, %v399
      %v405 = vunpack.c.l.b16 %v257
      %v406 = vunpack.c.l.b16 %v258
      %v407 = vpack.c.b16 %v406, %v405
      %v410 = vsel %vm337, %v401, 0
      %v413 = vsel %vm337, %v402, 0
      %415 = vmatprep.subr.bf16.mxu0 0
      %416 = vmatpush1.bf16.msra.mxu0 0
      %417 = vmatprep.subr.bf16.mxu0 0
      %418 = vmatpush1.bf16.msra.mxu0 0
      %419 = vmatprep.subr.bf16.mxu0 0
      %420 = vmatpush1.bf16.msra.mxu0 0
      %421 = vmatprep.subr.bf16.mxu0 0
      %422 = vmatpush1.bf16.msra.mxu0 0
      %423 = vmatprep.subr.bf16.mxu0 0
      %424 = vmatpush1.bf16.msra.mxu0 0
      %425 = vmatprep.subr.bf16.mxu0 0
      %426 = vmatpush1.bf16.msra.mxu0 0
      %427 = vmatprep.subr.bf16.mxu0 0
      %428 = vmatpush1.bf16.msra.mxu0 0
      %429 = vmatprep.subr.bf16.mxu0 0
      %430 = vmatpush1.bf16.msra.mxu0 %v407
      %431 = vmatprep.subr.bf16.mxu0 0
      %432 = vmatpush2.bf16.msra.mxu0 0
      %433 = vmatprep.subr.bf16.mxu0 0
      %434 = vmatpush2.bf16.msra.mxu0 0
      %435 = vmatprep.subr.bf16.mxu0 0
      %436 = vmatpush2.bf16.msra.mxu0 0
      %437 = vmatprep.subr.bf16.mxu0 0
      %438 = vmatpush2.bf16.msra.mxu0 0
      %439 = vmatprep.subr.bf16.mxu0 0
      %440 = vmatpush2.bf16.msra.mxu0 0
      %441 = vmatprep.subr.bf16.mxu0 0
      %442 = vmatpush2.bf16.msra.mxu0 0
      %443 = vmatprep.subr.bf16.mxu0 0
      %444 = vmatpush2.bf16.msra.mxu0 0
      %445 = vmatprep.subr.bf16.mxu0 0
      %446 = vmatpush2.bf16.msra.mxu0 0
      %447 = vmatprep.mubr.bf16.mxu0 0
      %448 = vmatmul.mubr.bf16.gmra.mxu0 %v410
      %v449 = vpop.f32.mrf.mxu0
      %v450 = vadd.f32 %v379, %v449
      %v451 = vpop.f32.mrf.mxu0
      %v452 = vpop.f32.mrf.mxu0
      %v453 = vadd.f32 %v382, %v452
      %v454 = vpop.f32.mrf.mxu0
      %455 = vmatprep.mubr.bf16.mxu0 0
      %456 = vmatmul.mubr.bf16.gmra.mxu0 %v413
      %v457 = vpop.f32.mrf.mxu0
      %v458 = vadd.f32 %v387, %v457
      %v459 = vpop.f32.mrf.mxu0
      %v460 = vpop.f32.mrf.mxu0
      %v461 = vadd.f32 %v390, %v460
      %v462 = vpop.f32.mrf.mxu0
      %463 = vdwg.mxu0
      %s464 = sadd.s32 %s249, 1
      %s465 = smul.u32 %s464, 2
      %s466 = smul.addr %s465, 4
      %s467 = scalar_lea.vmem %s223, %s466
      %v468 = vld [vmem:[%s467] sm:$0xf]
      %v469 = vld [vmem:[%s467 + $0x8] sm:$0xf]
      %v470 = vld [vmem:[%s467 + $0x10] sm:$0xf]
      %v471 = vld [vmem:[%s467 + $0x18] sm:$0xf]
      %s472 = scalar_lea.vmem %s1, 16
      %v473 = vld [vmem:[%s472] sm:$0xf]
      %v474 = vld [vmem:[%s472 + $0x4] sm:$0xf]
      %v479 = vunpack.c.l.b16 %v468
      %v480 = vunpack.c.l.b16 %v469
      %v481 = vunpack.c.l.b16 %v470
      %v482 = vunpack.c.l.b16 %v471
      %v483 = vpack.c.b16 %v480, %v479
      %v484 = vpack.c.b16 %v482, %v481
      %v487 = vunpack.c.l.b16 %v473
      %v488 = vunpack.c.l.b16 %v474
      %v489 = vpack.c.b16 %v488, %v487
      %v492 = vsel %vm337, %v483, 0
      %v495 = vsel %vm337, %v484, 0
      %497 = vmatprep.subr.bf16.mxu0 0
      %498 = vmatpush1.bf16.msra.mxu0 0
      %499 = vmatprep.subr.bf16.mxu0 0
      %500 = vmatpush1.bf16.msra.mxu0 0
      %501 = vmatprep.subr.bf16.mxu0 0
      %502 = vmatpush1.bf16.msra.mxu0 0
      %503 = vmatprep.subr.bf16.mxu0 0
      %504 = vmatpush1.bf16.msra.mxu0 0
      %505 = vmatprep.subr.bf16.mxu0 0
      %506 = vmatpush1.bf16.msra.mxu0 0
      %507 = vmatprep.subr.bf16.mxu0 0
      %508 = vmatpush1.bf16.msra.mxu0 0
      %509 = vmatprep.subr.bf16.mxu0 0
      %510 = vmatpush1.bf16.msra.mxu0 0
      %511 = vmatprep.subr.bf16.mxu0 0
      %512 = vmatpush1.bf16.msra.mxu0 %v489
      %513 = vmatprep.subr.bf16.mxu0 0
      %514 = vmatpush2.bf16.msra.mxu0 0
      %515 = vmatprep.subr.bf16.mxu0 0
      %516 = vmatpush2.bf16.msra.mxu0 0
      %517 = vmatprep.subr.bf16.mxu0 0
      %518 = vmatpush2.bf16.msra.mxu0 0
      %519 = vmatprep.subr.bf16.mxu0 0
      %520 = vmatpush2.bf16.msra.mxu0 0
      %521 = vmatprep.subr.bf16.mxu0 0
      %522 = vmatpush2.bf16.msra.mxu0 0
      %523 = vmatprep.subr.bf16.mxu0 0
      %524 = vmatpush2.bf16.msra.mxu0 0
      %525 = vmatprep.subr.bf16.mxu0 0
      %526 = vmatpush2.bf16.msra.mxu0 0
      %527 = vmatprep.subr.bf16.mxu0 0
      %528 = vmatpush2.bf16.msra.mxu0 0
      %529 = vmatprep.mubr.bf16.mxu0 0
      %530 = vmatmul.mubr.bf16.gmra.mxu0 %v492
      %v531 = vpop.f32.mrf.mxu0
      %v532 = vadd.f32 0.0, %v531
      %v533 = vpop.f32.mrf.mxu0
      %v534 = vpop.f32.mrf.mxu0
      %v535 = vadd.f32 0.0, %v534
      %v536 = vpop.f32.mrf.mxu0
      %537 = vmatprep.mubr.bf16.mxu0 0
      %538 = vmatmul.mubr.bf16.gmra.mxu0 %v495
      %v539 = vpop.f32.mrf.mxu0
      %v540 = vadd.f32 0.0, %v539
      %v541 = vpop.f32.mrf.mxu0
      %v542 = vpop.f32.mrf.mxu0
      %v543 = vadd.f32 0.0, %v542
      %v544 = vpop.f32.mrf.mxu0
      %545 = vdwg.mxu0
      %v546 = vadd.f32 %v450, %v532
      %v547 = vadd.f32 %v453, %v535
      %v548 = vadd.f32 %v458, %v540
      %v549 = vadd.f32 %v461, %v543
      %v550 = vld [vmem:[%s467] sm:$0xf]
      %v551 = vld [vmem:[%s467 + $0x4] sm:$0x1]
      %v552 = vld [vmem:[%s467 + $0x8] sm:$0xf]
      %v553 = vld [vmem:[%s467 + $0xc] sm:$0x1]
      %v554 = vld [vmem:[%s467 + $0x10] sm:$0xf]
      %v555 = vld [vmem:[%s467 + $0x14] sm:$0x1]
      %v556 = vld [vmem:[%s467 + $0x18] sm:$0xf]
      %v557 = vld [vmem:[%s467 + $0x1c] sm:$0x1]
      %v559 = vshrl.u32 %v550, 16
      %v561 = vrot.slane %v559, 4
      %v562 = vshll.u32 %v550, 16
      %v564 = vrot.slane %v562, 5
      %v565 = vor.u32 %v561, %v564
      %v566 = vrot.slane %v565, 4
      %v568 = vshll.u32 %v551, 16
      %v570 = vrot.slane %v568, 5
      %v571 = vsel %vm265, %v566, %v570
      %v573 = vshrl.u32 %v552, 16
      %v575 = vrot.slane %v573, 4
      %v576 = vshll.u32 %v552, 16
      %v578 = vrot.slane %v576, 5
      %v579 = vor.u32 %v575, %v578
      %v580 = vrot.slane %v579, 4
      %v582 = vshll.u32 %v553, 16
      %v584 = vrot.slane %v582, 5
      %v585 = vsel %vm265, %v580, %v584
      %v587 = vshrl.u32 %v554, 16
      %v589 = vrot.slane %v587, 4
      %v590 = vshll.u32 %v554, 16
      %v592 = vrot.slane %v590, 5
      %v593 = vor.u32 %v589, %v592
      %v594 = vrot.slane %v593, 4
      %v596 = vshll.u32 %v555, 16
      %v598 = vrot.slane %v596, 5
      %v599 = vsel %vm265, %v594, %v598
      %v601 = vshrl.u32 %v556, 16
      %v603 = vrot.slane %v601, 4
      %v604 = vshll.u32 %v556, 16
      %v606 = vrot.slane %v604, 5
      %v607 = vor.u32 %v603, %v606
      %v608 = vrot.slane %v607, 4
      %v610 = vshll.u32 %v557, 16
      %v612 = vrot.slane %v610, 5
      %v613 = vsel %vm265, %v608, %v612
      %s614 = scalar_lea.vmem %s1, 24
      %v615 = vld [vmem:[%s614] sm:$0xf]
      %v616 = vld [vmem:[%s614 + $0x4] sm:$0xf]
      %v617 = vunpack.c.l.b16 %v571
      %v618 = vunpack.c.l.b16 %v585
      %v619 = vunpack.c.l.b16 %v599
      %v620 = vunpack.c.l.b16 %v613
      %v621 = vpack.c.b16 %v618, %v617
      %v622 = vpack.c.b16 %v620, %v619
      %v625 = vunpack.c.l.b16 %v615
      %v626 = vunpack.c.l.b16 %v616
      %v627 = vpack.c.b16 %v626, %v625
      %v630 = vsel %vm337, %v621, 0
      %v633 = vsel %vm337, %v622, 0
      %635 = vmatprep.subr.bf16.mxu0 0
      %636 = vmatpush1.bf16.msra.mxu0 0
      %637 = vmatprep.subr.bf16.mxu0 0
      %638 = vmatpush1.bf16.msra.mxu0 0
      %639 = vmatprep.subr.bf16.mxu0 0
      %640 = vmatpush1.bf16.msra.mxu0 0
      %641 = vmatprep.subr.bf16.mxu0 0
      %642 = vmatpush1.bf16.msra.mxu0 0
      %643 = vmatprep.subr.bf16.mxu0 0
      %644 = vmatpush1.bf16.msra.mxu0 0
      %645 = vmatprep.subr.bf16.mxu0 0
      %646 = vmatpush1.bf16.msra.mxu0 0
      %647 = vmatprep.subr.bf16.mxu0 0
      %648 = vmatpush1.bf16.msra.mxu0 0
      %649 = vmatprep.subr.bf16.mxu0 0
      %650 = vmatpush1.bf16.msra.mxu0 %v627
      %651 = vmatprep.subr.bf16.mxu0 0
      %652 = vmatpush2.bf16.msra.mxu0 0
      %653 = vmatprep.subr.bf16.mxu0 0
      %654 = vmatpush2.bf16.msra.mxu0 0
      %655 = vmatprep.subr.bf16.mxu0 0
      %656 = vmatpush2.bf16.msra.mxu0 0
      %657 = vmatprep.subr.bf16.mxu0 0
      %658 = vmatpush2.bf16.msra.mxu0 0
      %659 = vmatprep.subr.bf16.mxu0 0
      %660 = vmatpush2.bf16.msra.mxu0 0
      %661 = vmatprep.subr.bf16.mxu0 0
      %662 = vmatpush2.bf16.msra.mxu0 0
      %663 = vmatprep.subr.bf16.mxu0 0
      %664 = vmatpush2.bf16.msra.mxu0 0
      %665 = vmatprep.subr.bf16.mxu0 0
      %666 = vmatpush2.bf16.msra.mxu0 0
      %667 = vmatprep.mubr.bf16.mxu0 0
      %668 = vmatmul.mubr.bf16.gmra.mxu0 %v630
      %v669 = vpop.f32.mrf.mxu0
      %v670 = vadd.f32 0.0, %v669
      %v671 = vpop.f32.mrf.mxu0
      %v672 = vpop.f32.mrf.mxu0
      %v673 = vadd.f32 0.0, %v672
      %v674 = vpop.f32.mrf.mxu0
      %675 = vmatprep.mubr.bf16.mxu0 0
      %676 = vmatmul.mubr.bf16.gmra.mxu0 %v633
      %v677 = vpop.f32.mrf.mxu0
      %v678 = vadd.f32 0.0, %v677
      %v679 = vpop.f32.mrf.mxu0
      %v680 = vpop.f32.mrf.mxu0
      %v681 = vadd.f32 0.0, %v680
      %v682 = vpop.f32.mrf.mxu0
      %683 = vdwg.mxu0
      %v684 = vadd.f32 %v546, %v670
      %v685 = vadd.f32 %v547, %v673
      %v686 = vadd.f32 %v548, %v678
      %v687 = vadd.f32 %v549, %v681
      %688 = vst [vmem:[%s232] sm:$0xff] %v684
      %689 = vst [vmem:[%s232 + $0x8] sm:$0xff] %v685
      %690 = vst [vmem:[%s232 + $0x10] sm:$0xff] %v686
      %691 = vst [vmem:[%s232 + $0x18] sm:$0xff] %v687
      %v692 = vld [vmem:[%s237] sm:$0xff]
      %v693 = vadd.f32 %v684, %v685
      %v694 = vadd.f32 %v693, %v686
      %v695 = vadd.f32 %v694, %v687
      %v696 = vrot.slane %v695, 4
      %v697 = vadd.f32 %v695, %v696
      %v698 = vrot.slane %v697, 2
      %v699 = vadd.f32 %v697, %v698
      %v700 = vrot.slane %v699, 1
      %v701 = vadd.f32 %v699, %v700
      %v702 = vadd.f32 %v692, %v701
      %703 = vst [vmem:[%s237] sm:$0xff] %v702
      %v704 = vld [vmem:[%s241] sm:$0xff]
      %v705 = vmul.f32 %v684, %v684
      %v706 = vmul.f32 %v685, %v685
      %v707 = vmul.f32 %v686, %v686
      %v708 = vmul.f32 %v687, %v687
      %v709 = vadd.f32 %v705, %v706
      %v710 = vadd.f32 %v709, %v707
      %v711 = vadd.f32 %v710, %v708
      %v712 = vrot.slane %v711, 4
      %v713 = vadd.f32 %v711, %v712
      %v714 = vrot.slane %v713, 2
      %v715 = vadd.f32 %v713, %v714
      %v716 = vrot.slane %v715, 1
      %v717 = vadd.f32 %v715, %v716
      %v718 = vadd.f32 %v704, %v717
      %719 = vst [vmem:[%s241] sm:$0xff] %v718
      %s720 = smul.u32 4, %s21
      %p721 = scmp.lt.s32.totalorder %s20, 1
      %s722 = scalar_select %p721, %s20, 1
      %p723 = scmp.lt.s32.totalorder %s720, 7
      %s724 = scalar_select %p723, %s720, 7
      %s725 = smul.addr %s722, 8
      %s726 = sadd.s32 %s724, %s725
      %s727 = smul.addr %s726, 8
      %s728 = scalar_lea.vmem %s2, %s727
      %p729 = scmp.lt.s32.totalorder %s20, 1
      %s730 = scalar_select %p729, %s20, 1
      %s731 = smul.addr %s730, 8
      %s732 = scalar_lea.vmem %s3, %s731
      %p733 = scmp.lt.s32.totalorder %s20, 1
      %s734 = scalar_select %p733, %s20, 1
      %s735 = smul.addr %s734, 8
      %s736 = scalar_lea.vmem %s4, %s735
      // Predicated region
      $region33: #{resnet_block_forward.6} parent=27 // pred_check
        %p737 = pneg %p95
      $region34: #{resnet_block_forward.6} parent=27 // pred_check_branch
        %739 = sbr.rel (%p737) target = $region36
      $region35: #{resnet_block_forward.6} parent=27 // pred_region
        %s740 = smul.u32 4, %s21
      $region36: #{resnet_block_forward.6} parent=27 // pred_fallthru
        _
      // Predicated region
      $region37: #{resnet_block_forward.6} parent=27 // pred_check
        %p741 = pneg %p121
      $region38: #{resnet_block_forward.6} parent=27 // pred_check_branch
        %743 = sbr.rel (%p741) target = $region40
      $region39: #{resnet_block_forward.6} parent=27 // pred_region
        _
      $region40: #{resnet_block_forward.6} parent=27 // pred_fallthru
        _
      // Predicated region
      $region41: #{resnet_block_forward.6} parent=27 // pred_check
        %p744 = pneg %p147
      $region42: #{resnet_block_forward.6} parent=27 // pred_check_branch
        %746 = sbr.rel (%p744) target = $region44
      $region43: #{resnet_block_forward.6} parent=27 // pred_region
        _
      $region44: #{resnet_block_forward.6} parent=27 // pred_fallthru
        _
    $region28: #{resnet_block_forward.6} parent=5 // pred_fallthru
      _
    %p747 = scmp.le.s32.totalorder 2, %s11
    // Predicated region
    $region45: #{resnet_block_forward.6} parent=5 // pred_check
      %p748 = pneg %p747
    $region46: #{resnet_block_forward.6} parent=5 // pred_check_branch
      %750 = sbr.rel (%p748) target = $region48
    $region47: #{resnet_block_forward.6} parent=5 // pred_region
      %s751 = ssub.s32 %s11, 2
      // Predicated region
      $region49: #{resnet_block_forward.6} parent=47 // pred_check
        %p752 = pneg %p101
      $region50: #{resnet_block_forward.6} parent=47 // pred_check_branch
        %754 = sbr.rel (%p752) target = $region52
      $region51: #{resnet_block_forward.6} parent=47 // pred_region
        %s755 = smul.u32 4, %s23
        %p756 = scmp.lt.s32.totalorder %s22, 1
        %s757 = scalar_select %p756, %s22, 1
        %p758 = scmp.lt.s32.totalorder %s755, 7
        %s759 = scalar_select %p758, %s755, 7
        %s760 = smul.addr %s757, 8
        %s761 = sadd.s32 %s759, %s760
        %s762 = smul.addr %s761, 8
        %s763 = scalar_lea.vmem %s2, %s762
      $region52: #{resnet_block_forward.6} parent=47 // pred_fallthru
        _
      // Predicated region
      $region53: #{resnet_block_forward.6} parent=47 // pred_check
        %p764 = pneg %p127
      $region54: #{resnet_block_forward.6} parent=47 // pred_check_branch
        %766 = sbr.rel (%p764) target = $region56
      $region55: #{resnet_block_forward.6} parent=47 // pred_region
        %p767 = scmp.lt.s32.totalorder %s22, 1
        %s768 = scalar_select %p767, %s22, 1
        %s769 = smul.addr %s768, 8
        %s770 = scalar_lea.vmem %s3, %s769
      $region56: #{resnet_block_forward.6} parent=47 // pred_fallthru
        _
      // Predicated region
      $region57: #{resnet_block_forward.6} parent=47 // pred_check
        %p771 = pneg %p153
      $region58: #{resnet_block_forward.6} parent=47 // pred_check_branch
        %773 = sbr.rel (%p771) target = $region60
      $region59: #{resnet_block_forward.6} parent=47 // pred_region
        %p774 = scmp.lt.s32.totalorder %s22, 1
        %s775 = scalar_select %p774, %s22, 1
        %s776 = smul.addr %s775, 8
        %s777 = scalar_lea.vmem %s4, %s776
      $region60: #{resnet_block_forward.6} parent=47 // pred_fallthru
        _
    $region48: #{resnet_block_forward.6} parent=5 // pred_fallthru
      _
  $region6: #{resnet_block_forward.6} parent=0 // loop_footer
    %s15 = sadd.s32 1, %s11
  $region7: #{resnet_block_forward.6} parent=0 // loop_footer_branch
    %10 = sbr.rel target = $region3
  $region8: #{resnet_block_forward.6} parent=0 // loop_exit
    _

// kernel: resnet_block_forward.9
$region0: #{resnet_block_forward.9}
  #allocation0 [shape = 'u32[]', space=smem, size = 0x4, offset = 0x4, fixed_abs, tag = 'smem constant byte address 0x4 - core index']
  #allocation1 [shape = 'u32[144,128]{1,0:T(1,128)}', space=vmem, size = 0x12000, scoped, tag = 'internal scratch']
  %s0 = inlined_call_operand.vmem [shape: bf16[2,8,8,4], index: 0, kind: input, shape index: {}]
  %s1 = inlined_call_operand.vmem [shape: bf16[1,4,128], index: 1, kind: input, shape index: {}]
  %s2 = inlined_call_operand.vmem [shape: f32[2,8,8,128], index: 2, kind: output, shape index: {0}]
  %s3 = inlined_call_operand.vmem [shape: f32[2,8,128], index: 3, kind: output, shape index: {1}]
  %s4 = inlined_call_operand.vmem [shape: f32[2,8,128], index: 4, kind: output, shape index: {2}]
  %5 = xla_tuple %s2, %s3, %s4
  %s6 = sld [smem:[#allocation0]]
  $region61: #{resnet_block_forward.9} parent=0
    _
  %s8 = ssub.s32 1, %s6
  %s9 = scalar_select 0, %s8, %s6
  loop: start=0, step=1, limit=6
  $region2: #{resnet_block_forward.9} parent=0 // loop_pre_header
    _
  $region3: #{resnet_block_forward.9} parent=0 // loop_header
    %s11 = sphi 0, %s15
    %p12 = scmp.ge.s32.totalorder %s11, 6
    %s18 = sphi 0, %s30
    %s19 = sphi 0, %s26
    %s20 = sphi 0, %s18
    %s21 = sphi 0, %s19
    %s22 = sphi 0, %s20
    %s23 = sphi 0, %s21
    %s33 = sphi 0, %s35
    %s36 = sphi 0, %s33
    %s37 = sphi 0, %s36
    %s53 = sphi 0, %s37
    %s57 = sphi 0, %s57
    %s59 = sphi 0, %s57
    %s60 = sphi 0, %s59
    %s74 = sphi 0, %s60
    %s82 = sphi 0, %s84
    %s85 = sphi 0, %s82
    %s86 = sphi 0, %s85
    %s102 = sphi 0, %s86
    %s108 = sphi 0, %s110
    %s111 = sphi 0, %s108
    %s112 = sphi 0, %s111
    %s128 = sphi 0, %s112
    %s134 = sphi 0, %s136
    %s137 = sphi 0, %s134
    %s138 = sphi 0, %s137
    %s154 = sphi 0, %s138
  $region4: #{resnet_block_forward.9} parent=0 // loop_header_branch
    %14 = sbr.rel (%p12) target = $region8
  $region5: #{resnet_block_forward.9} parent=0 // loop_body
    %s16 = ssub.s32 %s11, 1
    %s17 = ssub.s32 %s11, 2
    %s24 = sadd.s32 1, %s19
    %p25 = scmp.ge.s32.totalorder %s24, 2
    %s26 = scalar_select %p25, 0, %s24
    %s27 = sadd.s32 1, %s18
    %s28 = scalar_select %p25, %s27, %s18
    %p29 = scmp.ge.s32.totalorder %s28, 2
    %s30 = scalar_select %p29, 0, %s28
    %s31 = ssub.s32 %s18, %s30
    %p32 = scmp.eq.s32.totalorder %s31, 0
    %s34 = sadd.s32 %s33, 1
    %s35 = scalar_select %p32, %s33, %s34
    %p38 = pneg %p32
    %p39 = scmp.eq.s32.totalorder %s11, 3
    %p40 = por %p38, %p39
    %p41 = scmp.ne.s32.totalorder %s33, %s36
    %p42 = scmp.eq.s32.totalorder %s11, 0
    %p43 = por %p41, %p42
    %p44 = scmp.ne.s32.totalorder %s33, %s36
    %p45 = scmp.eq.s32.totalorder %s16, 3
    %p46 = por %p44, %p45
    %p47 = scmp.ne.s32.totalorder %s36, %s37
    %p48 = scmp.eq.s32.totalorder %s16, 0
    %p49 = por %p47, %p48
    %p50 = scmp.ne.s32.totalorder %s36, %s37
    %p51 = scmp.eq.s32.totalorder %s17, 3
    %p52 = por %p50, %p51
    %p54 = scmp.ne.s32.totalorder %s37, %s53
    %p55 = scmp.eq.s32.totalorder %s17, 0
    %p56 = por %p54, %p55
    %s58 = sadd.s32 %s57, 1
    %p61 = scmp.eq.s32.totalorder %s11, 3
    %p62 = scmp.ne.s32.totalorder %s57, %s59
    %p63 = scmp.eq.s32.totalorder %s11, 0
    %p64 = por %p62, %p63
    %p65 = scmp.ne.s32.totalorder %s57, %s59
    %p66 = scmp.eq.s32.totalorder %s16, 3
    %p67 = por %p65, %p66
    %p68 = scmp.ne.s32.totalorder %s59, %s60
    %p69 = scmp.eq.s32.totalorder %s16, 0
    %p70 = por %p68, %p69
    %p71 = scmp.ne.s32.totalorder %s59, %s60
    %p72 = scmp.eq.s32.totalorder %s17, 3
    %p73 = por %p71, %p72
    %p75 = scmp.ne.s32.totalorder %s60, %s74
    %p76 = scmp.eq.s32.totalorder %s17, 0
    %p77 = por %p75, %p76
    %s78 = ssub.s32 %s18, %s30
    %s79 = ssub.s32 %s19, %s26
    %s80 = sor.u32 %s78, %s79
    %p81 = scmp.eq.s32.totalorder %s80, 0
    %s83 = sadd.s32 %s82, 1
    %s84 = scalar_select %p81, %s82, %s83
    %p87 = pneg %p81
    %p88 = scmp.eq.s32.totalorder %s11, 3
    %p89 = por %p87, %p88
    %p90 = scmp.ne.s32.totalorder %s82, %s85
    %p91 = scmp.eq.s32.totalorder %s11, 0
    %p92 = por %p90, %p91
    %p93 = scmp.ne.s32.totalorder %s82, %s85
    %p94 = scmp.eq.s32.totalorder %s16, 3
    %p95 = por %p93, %p94
    %p96 = scmp.ne.s32.totalorder %s85, %s86
    %p97 = scmp.eq.s32.totalorder %s16, 0
    %p98 = por %p96, %p97
    %p99 = scmp.ne.s32.totalorder %s85, %s86
    %p100 = scmp.eq.s32.totalorder %s17, 3
    %p101 = por %p99, %p100
    %p103 = scmp.ne.s32.totalorder %s86, %s102
    %p104 = scmp.eq.s32.totalorder %s17, 0
    %p105 = por %p103, %p104
    %s106 = ssub.s32 %s18, %s30
    %p107 = scmp.eq.s32.totalorder %s106, 0
    %s109 = sadd.s32 %s108, 1
    %s110 = scalar_select %p107, %s108, %s109
    %p113 = pneg %p107
    %p114 = scmp.eq.s32.totalorder %s11, 3
    %p115 = por %p113, %p114
    %p116 = scmp.ne.s32.totalorder %s108, %s111
    %p117 = scmp.eq.s32.totalorder %s11, 0
    %p118 = por %p116, %p117
    %p119 = scmp.ne.s32.totalorder %s108, %s111
    %p120 = scmp.eq.s32.totalorder %s16, 3
    %p121 = por %p119, %p120
    %p122 = scmp.ne.s32.totalorder %s111, %s112
    %p123 = scmp.eq.s32.totalorder %s16, 0
    %p124 = por %p122, %p123
    %p125 = scmp.ne.s32.totalorder %s111, %s112
    %p126 = scmp.eq.s32.totalorder %s17, 3
    %p127 = por %p125, %p126
    %p129 = scmp.ne.s32.totalorder %s112, %s128
    %p130 = scmp.eq.s32.totalorder %s17, 0
    %p131 = por %p129, %p130
    %s132 = ssub.s32 %s18, %s30
    %p133 = scmp.eq.s32.totalorder %s132, 0
    %s135 = sadd.s32 %s134, 1
    %s136 = scalar_select %p133, %s134, %s135
    %p139 = pneg %p133
    %p140 = scmp.eq.s32.totalorder %s11, 3
    %p141 = por %p139, %p140
    %p142 = scmp.ne.s32.totalorder %s134, %s137
    %p143 = scmp.eq.s32.totalorder %s11, 0
    %p144 = por %p142, %p143
    %p145 = scmp.ne.s32.totalorder %s134, %s137
    %p146 = scmp.eq.s32.totalorder %s16, 3
    %p147 = por %p145, %p146
    %p148 = scmp.ne.s32.totalorder %s137, %s138
    %p149 = scmp.eq.s32.totalorder %s16, 0
    %p150 = por %p148, %p149
    %p151 = scmp.ne.s32.totalorder %s137, %s138
    %p152 = scmp.eq.s32.totalorder %s17, 3
    %p153 = por %p151, %p152
    %p155 = scmp.ne.s32.totalorder %s138, %s154
    %p156 = scmp.eq.s32.totalorder %s17, 0
    %p157 = por %p155, %p156
    %p158 = scmp.le.s32.totalorder 1, %s11
    %p159 = scmp.lt.s32.totalorder %s11, 5
    %p160 = pnand %p158, %p159
    %p161 = pneg %p160
    // Predicated region
    $region9: #{resnet_block_forward.9} parent=5 // pred_check
      _
    $region10: #{resnet_block_forward.9} parent=5 // pred_check_branch
      %163 = sbr.rel (%p160) target = $region12
    $region11: #{resnet_block_forward.9} parent=5 // pred_region
      %s164 = ssub.s32 %s11, 1
      // Predicated region
      $region13: #{resnet_block_forward.9} parent=11 // pred_check
        %p165 = pneg %p70
      $region14: #{resnet_block_forward.9} parent=11 // pred_check_branch
        %167 = sbr.rel (%p165) target = $region16
      $region15: #{resnet_block_forward.9} parent=11 // pred_region
        _
      $region16: #{resnet_block_forward.9} parent=11 // pred_fallthru
        _
    $region12: #{resnet_block_forward.9} parent=5 // pred_fallthru
      _
    %p168 = scmp.lt.s32.totalorder %s11, 4
    // Predicated region
    $region17: #{resnet_block_forward.9} parent=5 // pred_check
      %p169 = pneg %p168
    $region18: #{resnet_block_forward.9} parent=5 // pred_check_branch
      %171 = sbr.rel (%p169) target = $region20
    $region19: #{resnet_block_forward.9} parent=5 // pred_region
      // Predicated region
      $region21: #{resnet_block_forward.9} parent=19 // pred_check
        %p172 = pneg %p43
      $region22: #{resnet_block_forward.9} parent=19 // pred_check_branch
        %174 = sbr.rel (%p172) target = $region24
      $region23: #{resnet_block_forward.9} parent=19 // pred_region
        %p175 = scmp.lt.s32.totalorder %s18, 1
        %s176 = scalar_select %p175, %s18, 1
        %s177 = smul.addr %s176, 8
        %s178 = smul.addr %s177, 4
        %s179 = scalar_lea.vmem %s0, %s178
      $region24: #{resnet_block_forward.9} parent=19 // pred_fallthru
        _
    $region20: #{resnet_block_forward.9} parent=5 // pred_fallthru
      _
    %p180 = scmp.le.s32.totalorder 1, %s11
    %p181 = scmp.lt.s32.totalorder %s11, 5
    %p182 = pnand %p180, %p181
    %p183 = pneg %p182
    // Predicated region
    $region25: #{resnet_block_forward.9} parent=5 // pred_check
      _
    $region26: #{resnet_block_forward.9} parent=5 // pred_check_branch
      %185 = sbr.rel (%p182) target = $region28
    $region27: #{resnet_block_forward.9} parent=5 // pred_region
      %s186 = ssub.s32 %s11, 1
      %p187 = scmp.lt.s32.totalorder %s20, 1
      %s188 = scalar_select %p187, %s20, 1
      %s189 = smul.addr %s188, 8
      %s190 = smul.addr %s189, 4
      %s191 = scalar_lea.vmem %s0, %s190
      %p192 = pneg %p49
      %p193 = pneg %p46
      %p194 = pneg %p70
      %p195 = pneg %p67
      %p196 = pneg %p98
      %p197 = pneg %p95
      %s198 = smul.u32 4, %s21
      %p199 = scmp.lt.s32.totalorder %s20, 1
      %s200 = scalar_select %p199, %s20, 1
      %p201 = scmp.lt.s32.totalorder %s198, 7
      %s202 = scalar_select %p201, %s198, 7
      %s203 = smul.addr %s200, 8
      %s204 = sadd.s32 %s202, %s203
      %s205 = smul.addr %s204, 8
      %s206 = scalar_lea.vmem %s2, %s205
      %p207 = pneg %p124
      %p208 = pneg %p121
      %p209 = scmp.lt.s32.totalorder %s20, 1
      %s210 = scalar_select %p209, %s20, 1
      %s211 = smul.addr %s210, 8
      %s212 = scalar_lea.vmem %s3, %s211
      %p213 = pneg %p150
      %p214 = pneg %p147
      %p215 = scmp.lt.s32.totalorder %s20, 1
      %s216 = scalar_select %p215, %s20, 1
      %s217 = smul.addr %s216, 8
      %s218 = scalar_lea.vmem %s4, %s217
      %p219 = scmp.lt.s32.totalorder %s20, 1
      %s220 = scalar_select %p219, %s20, 1
      %s221 = smul.addr %s220, 8
      %s222 = smul.addr %s221, 4
      %s223 = scalar_lea.vmem %s0, %s222
      %s224 = smul.u32 4, %s21
      %p225 = scmp.lt.s32.totalorder %s20, 1
      %s226 = scalar_select %p225, %s20, 1
      %p227 = scmp.lt.s32.totalorder %s224, 7
      %s228 = scalar_select %p227, %s224, 7
      %s229 = smul.addr %s226, 8
      %s230 = sadd.s32 %s228, %s229
      %s231 = smul.addr %s230, 8
      %s232 = scalar_lea.vmem %s2, %s231
      %s233 = smul.u32 4, %s21
      %p234 = scmp.lt.s32.totalorder %s20, 1
      %s235 = scalar_select %p234, %s20, 1
      %s236 = smul.addr %s235, 8
      %s237 = scalar_lea.vmem %s3, %s236
      %p238 = scmp.lt.s32.totalorder %s20, 1
      %s239 = scalar_select %p238, %s20, 1
      %s240 = smul.addr %s239, 8
      %s241 = scalar_lea.vmem %s4, %s240
      %p243 = scmp.eq.s32.totalorder %s21, 0
      // Predicated region
      $region29: #{resnet_block_forward.9} parent=27 // pred_check
        %p244 = pneg %p243
      $region30: #{resnet_block_forward.9} parent=27 // pred_check_branch
        %246 = sbr.rel (%p244) target = $region32
      $region31: #{resnet_block_forward.9} parent=27 // pred_region
        %247 = vst [vmem:[%s237] sm:$0xff] 0.0
        %248 = vst [vmem:[%s241] sm:$0xff] 0.0
      $region32: #{resnet_block_forward.9} parent=27 // pred_fallthru
        _
      %s249 = smul.u32 %s21, 4
      %s250 = smul.addr %s249, 4
      %s251 = scalar_lea.vmem %s223, %s250
      %v252 = vld [vmem:[%s251] sm:$0xf]
      %v253 = vld [vmem:[%s251 + $0x4] sm:$0xf]
      %v254 = vld [vmem:[%s251 + $0x8] sm:$0xf]
      %v255 = vld [vmem:[%s251 + $0xc] sm:$0xf]
      %v256 = vld [vmem:[%s1] sm:$0x3]
      %v261 = vunpack.c.l.b16 %v252
      %v262 = vunpack.c.l.b16 %v253
      %v263 = vunpack.c.l.b16 %v254
      %v264 = vunpack.c.l.b16 %v255
      %v265 = vpack.c.b16 %v262, %v261
      %v266 = vpack.c.b16 %v264, %v263
      %vm267 = vcmask 31744
      %v269 = vsel %vm267, %v265, 0
      %v272 = vsel %vm267, %v266, 0
      %vm274 = vcmask 1041408
      %v276 = vsel %vm274, %v256, 0
      %278 = vmatprep.subr.bf16.mxu0 0
      %279 = vmatpush1.bf16.msra.mxu0 0
      %280 = vmatprep.subr.bf16.mxu0 0
      %281 = vmatpush1.bf16.msra.mxu0 0
      %282 = vmatprep.subr.bf16.mxu0 0
      %283 = vmatpush1.bf16.msra.mxu0 0
      %284 = vmatprep.subr.bf16.mxu0 0
      %285 = vmatpush1.bf16.msra.mxu0 0
      %286 = vmatprep.subr.bf16.mxu0 0
      %287 = vmatpush1.bf16.msra.mxu0 0
      %288 = vmatprep.subr.bf16.mxu0 0
      %289 = vmatpush1.bf16.msra.mxu0 0
      %290 = vmatprep.subr.bf16.mxu0 0
      %291 = vmatpush1.bf16.msra.mxu0 0
      %292 = vmatprep.subr.bf16.mxu0 0
      %293 = vmatpush1.bf16.msra.mxu0 %v276
      %294 = vmatprep.subr.bf16.mxu0 0
      %295 = vmatpush2.bf16.msra.mxu0 0
      %296 = vmatprep.subr.bf16.mxu0 0
      %297 = vmatpush2.bf16.msra.mxu0 0
      %298 = vmatprep.subr.bf16.mxu0 0
      %299 = vmatpush2.bf16.msra.mxu0 0
      %300 = vmatprep.subr.bf16.mxu0 0
      %301 = vmatpush2.bf16.msra.mxu0 0
      %302 = vmatprep.subr.bf16.mxu0 0
      %303 = vmatpush2.bf16.msra.mxu0 0
      %304 = vmatprep.subr.bf16.mxu0 0
      %305 = vmatpush2.bf16.msra.mxu0 0
      %306 = vmatprep.subr.bf16.mxu0 0
      %307 = vmatpush2.bf16.msra.mxu0 0
      %308 = vmatprep.subr.bf16.mxu0 0
      %309 = vmatpush2.bf16.msra.mxu0 0
      %310 = vmatprep.mubr.bf16.mxu0 0
      %311 = vmatmul.mubr.bf16.gmra.mxu0 %v269
      %v312 = vpop.f32.mrf.mxu0
      %v313 = vadd.f32 0.0, %v312
      %v314 = vpop.f32.mrf.mxu0
      %v315 = vpop.f32.mrf.mxu0
      %v316 = vadd.f32 0.0, %v315
      %v317 = vpop.f32.mrf.mxu0
      %318 = vmatprep.mubr.bf16.mxu0 0
      %319 = vmatmul.mubr.bf16.gmra.mxu0 %v272
      %v320 = vpop.f32.mrf.mxu0
      %v321 = vadd.f32 0.0, %v320
      %v322 = vpop.f32.mrf.mxu0
      %v323 = vpop.f32.mrf.mxu0
      %v324 = vadd.f32 0.0, %v323
      %v325 = vpop.f32.mrf.mxu0
      %326 = vdwg.mxu0
      %327 = vst [vmem:[%s232] sm:$0xff] %v313
      %328 = vst [vmem:[%s232 + $0x8] sm:$0xff] %v316
      %329 = vst [vmem:[%s232 + $0x10] sm:$0xff] %v321
      %330 = vst [vmem:[%s232 + $0x18] sm:$0xff] %v324
      %v331 = vld [vmem:[%s237] sm:$0xff]
      %v332 = vadd.f32 %v313, %v316
      %v333 = vadd.f32 %v332, %v321
      %v334 = vadd.f32 %v333, %v324
      %v335 = vrot.slane %v334, 4
      %v336 = vadd.f32 %v334, %v335
      %v337 = vrot.slane %v336, 2
      %v338 = vadd.f32 %v336, %v337
      %v339 = vrot.slane %v338, 1
      %v340 = vadd.f32 %v338, %v339
      %v341 = vadd.f32 %v331, %v340
      %342 = vst [vmem:[%s237] sm:$0xff] %v341
      %v343 = vld [vmem:[%s241] sm:$0xff]
      %v344 = vmul.f32 %v313, %v313
      %v345 = vmul.f32 %v316, %v316
      %v346 = vmul.f32 %v321, %v321
      %v347 = vmul.f32 %v324, %v324
      %v348 = vadd.f32 %v344, %v345
      %v349 = vadd.f32 %v348, %v346
      %v350 = vadd.f32 %v349, %v347
      %v351 = vrot.slane %v350, 4
      %v352 = vadd.f32 %v350, %v351
      %v353 = vrot.slane %v352, 2
      %v354 = vadd.f32 %v352, %v353
      %v355 = vrot.slane %v354, 1
      %v356 = vadd.f32 %v354, %v355
      %v357 = vadd.f32 %v343, %v356
      %358 = vst [vmem:[%s241] sm:$0xff] %v357
      %s359 = smul.u32 4, %s21
      %p360 = scmp.lt.s32.totalorder %s20, 1
      %s361 = scalar_select %p360, %s20, 1
      %p362 = scmp.lt.s32.totalorder %s359, 7
      %s363 = scalar_select %p362, %s359, 7
      %s364 = smul.addr %s361, 8
      %s365 = sadd.s32 %s363, %s364
      %s366 = smul.addr %s365, 8
      %s367 = scalar_lea.vmem %s2, %s366
      %p368 = scmp.lt.s32.totalorder %s20, 1
      %s369 = scalar_select %p368, %s20, 1
      %s370 = smul.addr %s369, 8
      %s371 = scalar_lea.vmem %s3, %s370
      %p372 = scmp.lt.s32.totalorder %s20, 1
      %s373 = scalar_select %p372, %s20, 1
      %s374 = smul.addr %s373, 8
      %s375 = scalar_lea.vmem %s4, %s374
      // Predicated region
      $region33: #{resnet_block_forward.9} parent=27 // pred_check
        %p376 = pneg %p95
      $region34: #{resnet_block_forward.9} parent=27 // pred_check_branch
        %378 = sbr.rel (%p376) target = $region36
      $region35: #{resnet_block_forward.9} parent=27 // pred_region
        %s379 = smul.u32 4, %s21
      $region36: #{resnet_block_forward.9} parent=27 // pred_fallthru
        _
      // Predicated region
      $region37: #{resnet_block_forward.9} parent=27 // pred_check
        %p380 = pneg %p121
      $region38: #{resnet_block_forward.9} parent=27 // pred_check_branch
        %382 = sbr.rel (%p380) target = $region40
      $region39: #{resnet_block_forward.9} parent=27 // pred_region
        _
      $region40: #{resnet_block_forward.9} parent=27 // pred_fallthru
        _
      // Predicated region
      $region41: #{resnet_block_forward.9} parent=27 // pred_check
        %p383 = pneg %p147
      $region42: #{resnet_block_forward.9} parent=27 // pred_check_branch
        %385 = sbr.rel (%p383) target = $region44
      $region43: #{resnet_block_forward.9} parent=27 // pred_region
        _
      $region44: #{resnet_block_forward.9} parent=27 // pred_fallthru
        _
    $region28: #{resnet_block_forward.9} parent=5 // pred_fallthru
      _
    %p386 = scmp.le.s32.totalorder 2, %s11
    // Predicated region
    $region45: #{resnet_block_forward.9} parent=5 // pred_check
      %p387 = pneg %p386
    $region46: #{resnet_block_forward.9} parent=5 // pred_check_branch
      %389 = sbr.rel (%p387) target = $region48
    $region47: #{resnet_block_forward.9} parent=5 // pred_region
      %s390 = ssub.s32 %s11, 2
      // Predicated region
      $region49: #{resnet_block_forward.9} parent=47 // pred_check
        %p391 = pneg %p101
      $region50: #{resnet_block_forward.9} parent=47 // pred_check_branch
        %393 = sbr.rel (%p391) target = $region52
      $region51: #{resnet_block_forward.9} parent=47 // pred_region
        %s394 = smul.u32 4, %s23
        %p395 = scmp.lt.s32.totalorder %s22, 1
        %s396 = scalar_select %p395, %s22, 1
        %p397 = scmp.lt.s32.totalorder %s394, 7
        %s398 = scalar_select %p397, %s394, 7
        %s399 = smul.addr %s396, 8
        %s400 = sadd.s32 %s398, %s399
        %s401 = smul.addr %s400, 8
        %s402 = scalar_lea.vmem %s2, %s401
      $region52: #{resnet_block_forward.9} parent=47 // pred_fallthru
        _
      // Predicated region
      $region53: #{resnet_block_forward.9} parent=47 // pred_check
        %p403 = pneg %p127
      $region54: #{resnet_block_forward.9} parent=47 // pred_check_branch
        %405 = sbr.rel (%p403) target = $region56
      $region55: #{resnet_block_forward.9} parent=47 // pred_region
        %p406 = scmp.lt.s32.totalorder %s22, 1
        %s407 = scalar_select %p406, %s22, 1
        %s408 = smul.addr %s407, 8
        %s409 = scalar_lea.vmem %s3, %s408
      $region56: #{resnet_block_forward.9} parent=47 // pred_fallthru
        _
      // Predicated region
      $region57: #{resnet_block_forward.9} parent=47 // pred_check
        %p410 = pneg %p153
      $region58: #{resnet_block_forward.9} parent=47 // pred_check_branch
        %412 = sbr.rel (%p410) target = $region60
      $region59: #{resnet_block_forward.9} parent=47 // pred_region
        %p413 = scmp.lt.s32.totalorder %s22, 1
        %s414 = scalar_select %p413, %s22, 1
        %s415 = smul.addr %s414, 8
        %s416 = scalar_lea.vmem %s4, %s415
      $region60: #{resnet_block_forward.9} parent=47 // pred_fallthru
        _
    $region48: #{resnet_block_forward.9} parent=5 // pred_fallthru
      _
  $region6: #{resnet_block_forward.9} parent=0 // loop_footer
    %s15 = sadd.s32 1, %s11
  $region7: #{resnet_block_forward.9} parent=0 // loop_footer_branch
    %10 = sbr.rel target = $region3
  $region8: #{resnet_block_forward.9} parent=0 // loop_exit
    _

// kernel: resnet_block_forward.10
$region0: #{resnet_block_forward.10}
  #allocation0 [shape = 'u32[]', space=smem, size = 0x4, offset = 0x4, fixed_abs, tag = 'smem constant byte address 0x4 - core index']
  #allocation1 [shape = 'u32[144,128]{1,0:T(1,128)}', space=vmem, size = 0x12000, scoped, tag = 'internal scratch']
  %s0 = inlined_call_operand.vmem [shape: f32[128,128], index: 0, kind: input, shape index: {}]
  %s1 = inlined_call_operand.vmem [shape: f32[1,128], index: 1, kind: input, shape index: {}]
  %s2 = inlined_call_operand.vmem [shape: f32[1,128], index: 2, kind: input, shape index: {}]
  %s3 = inlined_call_operand.vmem [shape: f32[1,128], index: 3, kind: input, shape index: {}]
  %s4 = inlined_call_operand.vmem [shape: f32[1,128], index: 4, kind: input, shape index: {}]
  %s5 = inlined_call_operand.vmem [shape: f32[128,128], index: 5, kind: input, shape index: {}]
  %s6 = inlined_call_operand.vmem [shape: f32[1,128], index: 6, kind: input, shape index: {}]
  %s7 = inlined_call_operand.vmem [shape: f32[1,128], index: 7, kind: input, shape index: {}]
  %s8 = inlined_call_operand.vmem [shape: f32[1,128], index: 8, kind: input, shape index: {}]
  %s9 = inlined_call_operand.vmem [shape: f32[1,128], index: 9, kind: input, shape index: {}]
  %s10 = inlined_call_operand.vmem [shape: f32[128,128], index: 10, kind: output, shape index: {0}]
  %s11 = inlined_call_operand.vmem [shape: f32[8,128], index: 11, kind: output, shape index: {1}]
  %s12 = inlined_call_operand.vmem [shape: f32[8,128], index: 12, kind: output, shape index: {2}]
  %13 = xla_tuple %s10, %s11, %s12
  %s14 = sld [smem:[#allocation0]]
  $region70: #{resnet_block_forward.10} parent=0
    _
  %s16 = ssub.s32 1, %s14
  %s17 = scalar_select 0, %s16, %s14
  // Predicated region
  $region2: #{resnet_block_forward.10} parent=0 // pred_check
    _
  $region3: #{resnet_block_forward.10} parent=0 // pred_check_branch
    %19 = sbr.rel (0) target = $region5
  $region4: #{resnet_block_forward.10} parent=0 // pred_region
    _
  $region5: #{resnet_block_forward.10} parent=0 // pred_fallthru
    _
  // Predicated region
  $region6: #{resnet_block_forward.10} parent=0 // pred_check
    _
  $region7: #{resnet_block_forward.10} parent=0 // pred_check_branch
    %21 = sbr.rel (0) target = $region9
  $region8: #{resnet_block_forward.10} parent=0 // pred_region
    _
  $region9: #{resnet_block_forward.10} parent=0 // pred_fallthru
    _
  // Predicated region
  $region10: #{resnet_block_forward.10} parent=0 // pred_check
    _
  $region11: #{resnet_block_forward.10} parent=0 // pred_check_branch
    %23 = sbr.rel (0) target = $region13
  $region12: #{resnet_block_forward.10} parent=0 // pred_region
    _
  $region13: #{resnet_block_forward.10} parent=0 // pred_fallthru
    _
  // Predicated region
  $region14: #{resnet_block_forward.10} parent=0 // pred_check
    _
  $region15: #{resnet_block_forward.10} parent=0 // pred_check_branch
    %25 = sbr.rel (0) target = $region17
  $region16: #{resnet_block_forward.10} parent=0 // pred_region
    _
  $region17: #{resnet_block_forward.10} parent=0 // pred_fallthru
    _
  // Predicated region
  $region18: #{resnet_block_forward.10} parent=0 // pred_check
    _
  $region19: #{resnet_block_forward.10} parent=0 // pred_check_branch
    %27 = sbr.rel (0) target = $region21
  $region20: #{resnet_block_forward.10} parent=0 // pred_region
    _
  $region21: #{resnet_block_forward.10} parent=0 // pred_fallthru
    _
  // Predicated region
  $region22: #{resnet_block_forward.10} parent=0 // pred_check
    _
  $region23: #{resnet_block_forward.10} parent=0 // pred_check_branch
    %29 = sbr.rel (0) target = $region25
  $region24: #{resnet_block_forward.10} parent=0 // pred_region
    _
  $region25: #{resnet_block_forward.10} parent=0 // pred_fallthru
    _
  // Predicated region
  $region26: #{resnet_block_forward.10} parent=0 // pred_check
    _
  $region27: #{resnet_block_forward.10} parent=0 // pred_check_branch
    %31 = sbr.rel (0) target = $region29
  $region28: #{resnet_block_forward.10} parent=0 // pred_region
    _
  $region29: #{resnet_block_forward.10} parent=0 // pred_fallthru
    _
  // Predicated region
  $region30: #{resnet_block_forward.10} parent=0 // pred_check
    _
  $region31: #{resnet_block_forward.10} parent=0 // pred_check_branch
    %33 = sbr.rel (0) target = $region33
  $region32: #{resnet_block_forward.10} parent=0 // pred_region
    _
  $region33: #{resnet_block_forward.10} parent=0 // pred_fallthru
    _
  // Predicated region
  $region34: #{resnet_block_forward.10} parent=0 // pred_check
    _
  $region35: #{resnet_block_forward.10} parent=0 // pred_check_branch
    %35 = sbr.rel (0) target = $region37
  $region36: #{resnet_block_forward.10} parent=0 // pred_region
    _
  $region37: #{resnet_block_forward.10} parent=0 // pred_fallthru
    _
  // Predicated region
  $region38: #{resnet_block_forward.10} parent=0 // pred_check
    _
  $region39: #{resnet_block_forward.10} parent=0 // pred_check_branch
    %37 = sbr.rel (0) target = $region41
  $region40: #{resnet_block_forward.10} parent=0 // pred_region
    _
  $region41: #{resnet_block_forward.10} parent=0 // pred_fallthru
    _
  %p38 = scmp.eq.s32.totalorder 0, 0
  // Predicated region
  $region42: #{resnet_block_forward.10} parent=0 // pred_check
    %p39 = pneg %p38
  $region43: #{resnet_block_forward.10} parent=0 // pred_check_branch
    %41 = sbr.rel (%p39) target = $region45
  $region44: #{resnet_block_forward.10} parent=0 // pred_region
    %42 = vst [vmem:[%s11] sm:$0xff] 0.0
    %43 = vst [vmem:[%s12] sm:$0xff] 0.0
  $region45: #{resnet_block_forward.10} parent=0 // pred_fallthru
    _
  %v44 = vld [vmem:[%s0] sm:$0xff]
  %v45 = vld [vmem:[%s0 + $0x8] sm:$0xff]
  %v46 = vld [vmem:[%s0 + $0x10] sm:$0xff]
  %v47 = vld [vmem:[%s0 + $0x18] sm:$0xff]
  %v48 = vld [vmem:[%s0 + $0x20] sm:$0xff]
  %v49 = vld [vmem:[%s0 + $0x28] sm:$0xff]
  %v50 = vld [vmem:[%s0 + $0x30] sm:$0xff]
  %v51 = vld [vmem:[%s0 + $0x38] sm:$0xff]
  %v52 = vld [vmem:[%s0 + $0x40] sm:$0xff]
  %v53 = vld [vmem:[%s0 + $0x48] sm:$0xff]
  %v54 = vld [vmem:[%s0 + $0x50] sm:$0xff]
  %v55 = vld [vmem:[%s0 + $0x58] sm:$0xff]
  %v56 = vld [vmem:[%s0 + $0x60] sm:$0xff]
  %v57 = vld [vmem:[%s0 + $0x68] sm:$0xff]
  %v58 = vld [vmem:[%s0 + $0x70] sm:$0xff]
  %v59 = vld [vmem:[%s0 + $0x78] sm:$0xff]
  %v60 = vld [vmem:[%s1] sm:$0x1]
  %v62 = vlaneseq
  %v63 = vshrl.u32 %v62, 7
  %v64 = vsub.s32 0, %v63
  %v65 = vrot.slane %v60, %v64
  %v67 = vsub.f32 %v44, %v65
  %v68 = vsub.f32 %v45, %v65
  %v69 = vsub.f32 %v46, %v65
  %v70 = vsub.f32 %v47, %v65
  %v71 = vsub.f32 %v48, %v65
  %v72 = vsub.f32 %v49, %v65
  %v73 = vsub.f32 %v50, %v65
  %v74 = vsub.f32 %v51, %v65
  %v75 = vsub.f32 %v52, %v65
  %v76 = vsub.f32 %v53, %v65
  %v77 = vsub.f32 %v54, %v65
  %v78 = vsub.f32 %v55, %v65
  %v79 = vsub.f32 %v56, %v65
  %v80 = vsub.f32 %v57, %v65
  %v81 = vsub.f32 %v58, %v65
  %v82 = vsub.f32 %v59, %v65
  %v83 = vld [vmem:[%s2] sm:$0x1]
  %v84 = vadd.f32 %v83, 1e-05
  %v85 = vrsqrt.pop %v84
  %v87 = vlaneseq
  %v88 = vshrl.u32 %v87, 7
  %v89 = vsub.s32 0, %v88
  %v90 = vrot.slane %v85, %v89
  %v92 = vmul.f32 %v67, %v90
  %v93 = vmul.f32 %v68, %v90
  %v94 = vmul.f32 %v69, %v90
  %v95 = vmul.f32 %v70, %v90
  %v96 = vmul.f32 %v71, %v90
  %v97 = vmul.f32 %v72, %v90
  %v98 = vmul.f32 %v73, %v90
  %v99 = vmul.f32 %v74, %v90
  %v100 = vmul.f32 %v75, %v90
  %v101 = vmul.f32 %v76, %v90
  %v102 = vmul.f32 %v77, %v90
  %v103 = vmul.f32 %v78, %v90
  %v104 = vmul.f32 %v79, %v90
  %v105 = vmul.f32 %v80, %v90
  %v106 = vmul.f32 %v81, %v90
  %v107 = vmul.f32 %v82, %v90
  %v108 = vld [vmem:[%s3] sm:$0x1]
  %v110 = vlaneseq
  %v111 = vshrl.u32 %v110, 7
  %v112 = vsub.s32 0, %v111
  %v113 = vrot.slane %v108, %v112
  %v115 = vmul.f32 %v92, %v113
  %v116 = vmul.f32 %v93, %v113
  %v117 = vmul.f32 %v94, %v113
  %v118 = vmul.f32 %v95, %v113
  %v119 = vmul.f32 %v96, %v113
  %v120 = vmul.f32 %v97, %v113
  %v121 = vmul.f32 %v98, %v113
  %v122 = vmul.f32 %v99, %v113
  %v123 = vmul.f32 %v100, %v113
  %v124 = vmul.f32 %v101, %v113
  %v125 = vmul.f32 %v102, %v113
  %v126 = vmul.f32 %v103, %v113
  %v127 = vmul.f32 %v104, %v113
  %v128 = vmul.f32 %v105, %v113
  %v129 = vmul.f32 %v106, %v113
  %v130 = vmul.f32 %v107, %v113
  %v131 = vld [vmem:[%s4] sm:$0x1]
  %v133 = vlaneseq
  %v134 = vshrl.u32 %v133, 7
  %v135 = vsub.s32 0, %v134
  %v136 = vrot.slane %v131, %v135
  %v138 = vadd.f32 %v115, %v136
  %v139 = vadd.f32 %v116, %v136
  %v140 = vadd.f32 %v117, %v136
  %v141 = vadd.f32 %v118, %v136
  %v142 = vadd.f32 %v119, %v136
  %v143 = vadd.f32 %v120, %v136
  %v144 = vadd.f32 %v121, %v136
  %v145 = vadd.f32 %v122, %v136
  %v146 = vadd.f32 %v123, %v136
  %v147 = vadd.f32 %v124, %v136
  %v148 = vadd.f32 %v125, %v136
  %v149 = vadd.f32 %v126, %v136
  %v150 = vadd.f32 %v127, %v136
  %v151 = vadd.f32 %v128, %v136
  %v152 = vadd.f32 %v129, %v136
  %v153 = vadd.f32 %v130, %v136
  %v154 = vld [vmem:[%s5] sm:$0xff]
  %v155 = vld [vmem:[%s5 + $0x8] sm:$0xff]
  %v156 = vld [vmem:[%s5 + $0x10] sm:$0xff]
  %v157 = vld [vmem:[%s5 + $0x18] sm:$0xff]
  %v158 = vld [vmem:[%s5 + $0x20] sm:$0xff]
  %v159 = vld [vmem:[%s5 + $0x28] sm:$0xff]
  %v160 = vld [vmem:[%s5 + $0x30] sm:$0xff]
  %v161 = vld [vmem:[%s5 + $0x38] sm:$0xff]
  %v162 = vld [vmem:[%s5 + $0x40] sm:$0xff]
  %v163 = vld [vmem:[%s5 + $0x48] sm:$0xff]
  %v164 = vld [vmem:[%s5 + $0x50] sm:$0xff]
  %v165 = vld [vmem:[%s5 + $0x58] sm:$0xff]
  %v166 = vld [vmem:[%s5 + $0x60] sm:$0xff]
  %v167 = vld [vmem:[%s5 + $0x68] sm:$0xff]
  %v168 = vld [vmem:[%s5 + $0x70] sm:$0xff]
  %v169 = vld [vmem:[%s5 + $0x78] sm:$0xff]
  %v170 = vld [vmem:[%s6] sm:$0x1]
  %v172 = vlaneseq
  %v173 = vshrl.u32 %v172, 7
  %v174 = vsub.s32 0, %v173
  %v175 = vrot.slane %v170, %v174
  %v177 = vsub.f32 %v154, %v175
  %v178 = vsub.f32 %v155, %v175
  %v179 = vsub.f32 %v156, %v175
  %v180 = vsub.f32 %v157, %v175
  %v181 = vsub.f32 %v158, %v175
  %v182 = vsub.f32 %v159, %v175
  %v183 = vsub.f32 %v160, %v175
  %v184 = vsub.f32 %v161, %v175
  %v185 = vsub.f32 %v162, %v175
  %v186 = vsub.f32 %v163, %v175
  %v187 = vsub.f32 %v164, %v175
  %v188 = vsub.f32 %v165, %v175
  %v189 = vsub.f32 %v166, %v175
  %v190 = vsub.f32 %v167, %v175
  %v191 = vsub.f32 %v168, %v175
  %v192 = vsub.f32 %v169, %v175
  %v193 = vld [vmem:[%s7] sm:$0x1]
  %v194 = vadd.f32 %v193, 1e-05
  %v195 = vrsqrt.pop %v194
  %v197 = vlaneseq
  %v198 = vshrl.u32 %v197, 7
  %v199 = vsub.s32 0, %v198
  %v200 = vrot.slane %v195, %v199
  %v202 = vmul.f32 %v177, %v200
  %v203 = vmul.f32 %v178, %v200
  %v204 = vmul.f32 %v179, %v200
  %v205 = vmul.f32 %v180, %v200
  %v206 = vmul.f32 %v181, %v200
  %v207 = vmul.f32 %v182, %v200
  %v208 = vmul.f32 %v183, %v200
  %v209 = vmul.f32 %v184, %v200
  %v210 = vmul.f32 %v185, %v200
  %v211 = vmul.f32 %v186, %v200
  %v212 = vmul.f32 %v187, %v200
  %v213 = vmul.f32 %v188, %v200
  %v214 = vmul.f32 %v189, %v200
  %v215 = vmul.f32 %v190, %v200
  %v216 = vmul.f32 %v191, %v200
  %v217 = vmul.f32 %v192, %v200
  %v218 = vld [vmem:[%s8] sm:$0x1]
  %v220 = vlaneseq
  %v221 = vshrl.u32 %v220, 7
  %v222 = vsub.s32 0, %v221
  %v223 = vrot.slane %v218, %v222
  %v225 = vmul.f32 %v202, %v223
  %v226 = vmul.f32 %v203, %v223
  %v227 = vmul.f32 %v204, %v223
  %v228 = vmul.f32 %v205, %v223
  %v229 = vmul.f32 %v206, %v223
  %v230 = vmul.f32 %v207, %v223
  %v231 = vmul.f32 %v208, %v223
  %v232 = vmul.f32 %v209, %v223
  %v233 = vmul.f32 %v210, %v223
  %v234 = vmul.f32 %v211, %v223
  %v235 = vmul.f32 %v212, %v223
  %v236 = vmul.f32 %v213, %v223
  %v237 = vmul.f32 %v214, %v223
  %v238 = vmul.f32 %v215, %v223
  %v239 = vmul.f32 %v216, %v223
  %v240 = vmul.f32 %v217, %v223
  %v241 = vld [vmem:[%s9] sm:$0x1]
  %v243 = vlaneseq
  %v244 = vshrl.u32 %v243, 7
  %v245 = vsub.s32 0, %v244
  %v246 = vrot.slane %v241, %v245
  %v248 = vadd.f32 %v225, %v246
  %v249 = vadd.f32 %v226, %v246
  %v250 = vadd.f32 %v227, %v246
  %v251 = vadd.f32 %v228, %v246
  %v252 = vadd.f32 %v229, %v246
  %v253 = vadd.f32 %v230, %v246
  %v254 = vadd.f32 %v231, %v246
  %v255 = vadd.f32 %v232, %v246
  %v256 = vadd.f32 %v233, %v246
  %v257 = vadd.f32 %v234, %v246
  %v258 = vadd.f32 %v235, %v246
  %v259 = vadd.f32 %v236, %v246
  %v260 = vadd.f32 %v237, %v246
  %v261 = vadd.f32 %v238, %v246
  %v262 = vadd.f32 %v239, %v246
  %v263 = vadd.f32 %v240, %v246
  %v264 = vadd.f32 %v138, %v248
  %v265 = vadd.f32 %v139, %v249
  %v266 = vadd.f32 %v140, %v250
  %v267 = vadd.f32 %v141, %v251
  %v268 = vadd.f32 %v142, %v252
  %v269 = vadd.f32 %v143, %v253
  %v270 = vadd.f32 %v144, %v254
  %v271 = vadd.f32 %v145, %v255
  %v272 = vadd.f32 %v146, %v256
  %v273 = vadd.f32 %v147, %v257
  %v274 = vadd.f32 %v148, %v258
  %v275 = vadd.f32 %v149, %v259
  %v276 = vadd.f32 %v150, %v260
  %v277 = vadd.f32 %v151, %v261
  %v278 = vadd.f32 %v152, %v262
  %v279 = vadd.f32 %v153, %v263
  %v280 = vmax.f32 %v264, 0.0
  %v281 = vmax.f32 %v265, 0.0
  %v282 = vmax.f32 %v266, 0.0
  %v283 = vmax.f32 %v267, 0.0
  %v284 = vmax.f32 %v268, 0.0
  %v285 = vmax.f32 %v269, 0.0
  %v286 = vmax.f32 %v270, 0.0
  %v287 = vmax.f32 %v271, 0.0
  %v288 = vmax.f32 %v272, 0.0
  %v289 = vmax.f32 %v273, 0.0
  %v290 = vmax.f32 %v274, 0.0
  %v291 = vmax.f32 %v275, 0.0
  %v292 = vmax.f32 %v276, 0.0
  %v293 = vmax.f32 %v277, 0.0
  %v294 = vmax.f32 %v278, 0.0
  %v295 = vmax.f32 %v279, 0.0
  %296 = vst [vmem:[%s10] sm:$0xff] %v280
  %297 = vst [vmem:[%s10 + $0x8] sm:$0xff] %v281
  %298 = vst [vmem:[%s10 + $0x10] sm:$0xff] %v282
  %299 = vst [vmem:[%s10 + $0x18] sm:$0xff] %v283
  %300 = vst [vmem:[%s10 + $0x20] sm:$0xff] %v284
  %301 = vst [vmem:[%s10 + $0x28] sm:$0xff] %v285
  %302 = vst [vmem:[%s10 + $0x30] sm:$0xff] %v286
  %303 = vst [vmem:[%s10 + $0x38] sm:$0xff] %v287
  %304 = vst [vmem:[%s10 + $0x40] sm:$0xff] %v288
  %305 = vst [vmem:[%s10 + $0x48] sm:$0xff] %v289
  %306 = vst [vmem:[%s10 + $0x50] sm:$0xff] %v290
  %307 = vst [vmem:[%s10 + $0x58] sm:$0xff] %v291
  %308 = vst [vmem:[%s10 + $0x60] sm:$0xff] %v292
  %309 = vst [vmem:[%s10 + $0x68] sm:$0xff] %v293
  %310 = vst [vmem:[%s10 + $0x70] sm:$0xff] %v294
  %311 = vst [vmem:[%s10 + $0x78] sm:$0xff] %v295
  %v312 = vld [vmem:[%s11] sm:$0xff]
  %v313 = vadd.f32 %v280, %v281
  %v314 = vadd.f32 %v313, %v282
  %v315 = vadd.f32 %v314, %v283
  %v316 = vadd.f32 %v315, %v284
  %v317 = vadd.f32 %v316, %v285
  %v318 = vadd.f32 %v317, %v286
  %v319 = vadd.f32 %v318, %v287
  %v320 = vadd.f32 %v319, %v288
  %v321 = vadd.f32 %v320, %v289
  %v322 = vadd.f32 %v321, %v290
  %v323 = vadd.f32 %v322, %v291
  %v324 = vadd.f32 %v323, %v292
  %v325 = vadd.f32 %v324, %v293
  %v326 = vadd.f32 %v325, %v294
  %v327 = vadd.f32 %v326, %v295
  %v328 = vrot.slane %v327, 4
  %v329 = vadd.f32 %v327, %v328
  %v330 = vrot.slane %v329, 2
  %v331 = vadd.f32 %v329, %v330
  %v332 = vrot.slane %v331, 1
  %v333 = vadd.f32 %v331, %v332
  %v334 = vadd.f32 %v312, %v333
  %335 = vst [vmem:[%s11] sm:$0xff] %v334
  %v336 = vld [vmem:[%s12] sm:$0xff]
  %v337 = vmul.f32 %v280, %v280
  %v338 = vmul.f32 %v281, %v281
  %v339 = vmul.f32 %v282, %v282
  %v340 = vmul.f32 %v283, %v283
  %v341 = vmul.f32 %v284, %v284
  %v342 = vmul.f32 %v285, %v285
  %v343 = vmul.f32 %v286, %v286
  %v344 = vmul.f32 %v287, %v287
  %v345 = vmul.f32 %v288, %v288
  %v346 = vmul.f32 %v289, %v289
  %v347 = vmul.f32 %v290, %v290
  %v348 = vmul.f32 %v291, %v291
  %v349 = vmul.f32 %v292, %v292
  %v350 = vmul.f32 %v293, %v293
  %v351 = vmul.f32 %v294, %v294
  %v352 = vmul.f32 %v295, %v295
  %v353 = vadd.f32 %v337, %v338
  %v354 = vadd.f32 %v353, %v339
  %v355 = vadd.f32 %v354, %v340
  %v356 = vadd.f32 %v355, %v341
  %v357 = vadd.f32 %v356, %v342
  %v358 = vadd.f32 %v357, %v343
  %v359 = vadd.f32 %v358, %v344
  %v360 = vadd.f32 %v359, %v345
  %v361 = vadd.f32 %v360, %v346
  %v362 = vadd.f32 %v361, %v347
  %v363 = vadd.f32 %v362, %v348
  %v364 = vadd.f32 %v363, %v349
  %v365 = vadd.f32 %v364, %v350
  %v366 = vadd.f32 %v365, %v351
  %v367 = vadd.f32 %v366, %v352
  %v368 = vrot.slane %v367, 4
  %v369 = vadd.f32 %v367, %v368
  %v370 = vrot.slane %v369, 2
  %v371 = vadd.f32 %v369, %v370
  %v372 = vrot.slane %v371, 1
  %v373 = vadd.f32 %v371, %v372
  %v374 = vadd.f32 %v336, %v373
  %375 = vst [vmem:[%s12] sm:$0xff] %v374
  // Predicated region
  $region46: #{resnet_block_forward.10} parent=0 // pred_check
    _
  $region47: #{resnet_block_forward.10} parent=0 // pred_check_branch
    %377 = sbr.rel (0) target = $region49
  $region48: #{resnet_block_forward.10} parent=0 // pred_region
    _
  $region49: #{resnet_block_forward.10} parent=0 // pred_fallthru
    _
  // Predicated region
  $region50: #{resnet_block_forward.10} parent=0 // pred_check
    _
  $region51: #{resnet_block_forward.10} parent=0 // pred_check_branch
    %379 = sbr.rel (0) target = $region53
  $region52: #{resnet_block_forward.10} parent=0 // pred_region
    _
  $region53: #{resnet_block_forward.10} parent=0 // pred_fallthru
    _
  // Predicated region
  $region54: #{resnet_block_forward.10} parent=0 // pred_check
    _
  $region55: #{resnet_block_forward.10} parent=0 // pred_check_branch
    %381 = sbr.rel (0) target = $region57
  $region56: #{resnet_block_forward.10} parent=0 // pred_region
    _
  $region57: #{resnet_block_forward.10} parent=0 // pred_fallthru
    _
  // Predicated region
  $region58: #{resnet_block_forward.10} parent=0 // pred_check
    _
  $region59: #{resnet_block_forward.10} parent=0 // pred_check_branch
    %383 = sbr.rel (0) target = $region61
  $region60: #{resnet_block_forward.10} parent=0 // pred_region
    _
  $region61: #{resnet_block_forward.10} parent=0 // pred_fallthru
    _
  // Predicated region
  $region62: #{resnet_block_forward.10} parent=0 // pred_check
    _
  $region63: #{resnet_block_forward.10} parent=0 // pred_check_branch
    %385 = sbr.rel (0) target = $region65
  $region64: #{resnet_block_forward.10} parent=0 // pred_region
    _
  $region65: #{resnet_block_forward.10} parent=0 // pred_fallthru
    _
  // Predicated region
  $region66: #{resnet_block_forward.10} parent=0 // pred_check
    _
  $region67: #{resnet_block_forward.10} parent=0 // pred_check_branch
    %387 = sbr.rel (0) target = $region69
  $region68: #{resnet_block_forward.10} parent=0 // pred_region
    _
  $region69: #{resnet_block_forward.10} parent=0 // pred_fallthru
    _

// kernel: resnet_block_forward.8
$region0: #{resnet_block_forward.8}
  #allocation0 [shape = 'u32[]', space=smem, size = 0x4, offset = 0x4, fixed_abs, tag = 'smem constant byte address 0x4 - core index']
  #allocation1 [shape = 'u32[144,128]{1,0:T(1,128)}', space=vmem, size = 0x12000, scoped, tag = 'internal scratch']
  %s0 = inlined_call_operand.vmem [shape: bf16[2,10,10,128], index: 0, kind: input, shape index: {}]
  %s1 = inlined_call_operand.vmem [shape: bf16[9,128,128], index: 1, kind: input, shape index: {}]
  %s2 = inlined_call_operand.vmem [shape: f32[2,8,8,128], index: 2, kind: output, shape index: {0}]
  %s3 = inlined_call_operand.vmem [shape: f32[2,8,128], index: 3, kind: output, shape index: {1}]
  %s4 = inlined_call_operand.vmem [shape: f32[2,8,128], index: 4, kind: output, shape index: {2}]
  %5 = xla_tuple %s2, %s3, %s4
  %s6 = sld [smem:[#allocation0]]
  $region61: #{resnet_block_forward.8} parent=0
    _
  %s8 = ssub.s32 1, %s6
  %s9 = scalar_select 0, %s8, %s6
  loop: start=0, step=1, limit=6
  $region2: #{resnet_block_forward.8} parent=0 // loop_pre_header
    _
  $region3: #{resnet_block_forward.8} parent=0 // loop_header
    %s11 = sphi 0, %s15
    %p12 = scmp.ge.s32.totalorder %s11, 6
    %s18 = sphi 0, %s30
    %s19 = sphi 0, %s26
    %s20 = sphi 0, %s18
    %s21 = sphi 0, %s19
    %s22 = sphi 0, %s20
    %s23 = sphi 0, %s21
    %s33 = sphi 0, %s35
    %s36 = sphi 0, %s33
    %s37 = sphi 0, %s36
    %s53 = sphi 0, %s37
    %s57 = sphi 0, %s57
    %s59 = sphi 0, %s57
    %s60 = sphi 0, %s59
    %s74 = sphi 0, %s60
    %s82 = sphi 0, %s84
    %s85 = sphi 0, %s82
    %s86 = sphi 0, %s85
    %s102 = sphi 0, %s86
    %s108 = sphi 0, %s110
    %s111 = sphi 0, %s108
    %s112 = sphi 0, %s111
    %s128 = sphi 0, %s112
    %s134 = sphi 0, %s136
    %s137 = sphi 0, %s134
    %s138 = sphi 0, %s137
    %s154 = sphi 0, %s138
  $region4: #{resnet_block_forward.8} parent=0 // loop_header_branch
    %14 = sbr.rel (%p12) target = $region8
  $region5: #{resnet_block_forward.8} parent=0 // loop_body
    %s16 = ssub.s32 %s11, 1
    %s17 = ssub.s32 %s11, 2
    %s24 = sadd.s32 1, %s19
    %p25 = scmp.ge.s32.totalorder %s24, 2
    %s26 = scalar_select %p25, 0, %s24
    %s27 = sadd.s32 1, %s18
    %s28 = scalar_select %p25, %s27, %s18
    %p29 = scmp.ge.s32.totalorder %s28, 2
    %s30 = scalar_select %p29, 0, %s28
    %s31 = ssub.s32 %s18, %s30
    %p32 = scmp.eq.s32.totalorder %s31, 0
    %s34 = sadd.s32 %s33, 1
    %s35 = scalar_select %p32, %s33, %s34
    %p38 = pneg %p32
    %p39 = scmp.eq.s32.totalorder %s11, 3
    %p40 = por %p38, %p39
    %p41 = scmp.ne.s32.totalorder %s33, %s36
    %p42 = scmp.eq.s32.totalorder %s11, 0
    %p43 = por %p41, %p42
    %p44 = scmp.ne.s32.totalorder %s33, %s36
    %p45 = scmp.eq.s32.totalorder %s16, 3
    %p46 = por %p44, %p45
    %p47 = scmp.ne.s32.totalorder %s36, %s37
    %p48 = scmp.eq.s32.totalorder %s16, 0
    %p49 = por %p47, %p48
    %p50 = scmp.ne.s32.totalorder %s36, %s37
    %p51 = scmp.eq.s32.totalorder %s17, 3
    %p52 = por %p50, %p51
    %p54 = scmp.ne.s32.totalorder %s37, %s53
    %p55 = scmp.eq.s32.totalorder %s17, 0
    %p56 = por %p54, %p55
    %s58 = sadd.s32 %s57, 1
    %p61 = scmp.eq.s32.totalorder %s11, 3
    %p62 = scmp.ne.s32.totalorder %s57, %s59
    %p63 = scmp.eq.s32.totalorder %s11, 0
    %p64 = por %p62, %p63
    %p65 = scmp.ne.s32.totalorder %s57, %s59
    %p66 = scmp.eq.s32.totalorder %s16, 3
    %p67 = por %p65, %p66
    %p68 = scmp.ne.s32.totalorder %s59, %s60
    %p69 = scmp.eq.s32.totalorder %s16, 0
    %p70 = por %p68, %p69
    %p71 = scmp.ne.s32.totalorder %s59, %s60
    %p72 = scmp.eq.s32.totalorder %s17, 3
    %p73 = por %p71, %p72
    %p75 = scmp.ne.s32.totalorder %s60, %s74
    %p76 = scmp.eq.s32.totalorder %s17, 0
    %p77 = por %p75, %p76
    %s78 = ssub.s32 %s18, %s30
    %s79 = ssub.s32 %s19, %s26
    %s80 = sor.u32 %s78, %s79
    %p81 = scmp.eq.s32.totalorder %s80, 0
    %s83 = sadd.s32 %s82, 1
    %s84 = scalar_select %p81, %s82, %s83
    %p87 = pneg %p81
    %p88 = scmp.eq.s32.totalorder %s11, 3
    %p89 = por %p87, %p88
    %p90 = scmp.ne.s32.totalorder %s82, %s85
    %p91 = scmp.eq.s32.totalorder %s11, 0
    %p92 = por %p90, %p91
    %p93 = scmp.ne.s32.totalorder %s82, %s85
    %p94 = scmp.eq.s32.totalorder %s16, 3
    %p95 = por %p93, %p94
    %p96 = scmp.ne.s32.totalorder %s85, %s86
    %p97 = scmp.eq.s32.totalorder %s16, 0
    %p98 = por %p96, %p97
    %p99 = scmp.ne.s32.totalorder %s85, %s86
    %p100 = scmp.eq.s32.totalorder %s17, 3
    %p101 = por %p99, %p100
    %p103 = scmp.ne.s32.totalorder %s86, %s102
    %p104 = scmp.eq.s32.totalorder %s17, 0
    %p105 = por %p103, %p104
    %s106 = ssub.s32 %s18, %s30
    %p107 = scmp.eq.s32.totalorder %s106, 0
    %s109 = sadd.s32 %s108, 1
    %s110 = scalar_select %p107, %s108, %s109
    %p113 = pneg %p107
    %p114 = scmp.eq.s32.totalorder %s11, 3
    %p115 = por %p113, %p114
    %p116 = scmp.ne.s32.totalorder %s108, %s111
    %p117 = scmp.eq.s32.totalorder %s11, 0
    %p118 = por %p116, %p117
    %p119 = scmp.ne.s32.totalorder %s108, %s111
    %p120 = scmp.eq.s32.totalorder %s16, 3
    %p121 = por %p119, %p120
    %p122 = scmp.ne.s32.totalorder %s111, %s112
    %p123 = scmp.eq.s32.totalorder %s16, 0
    %p124 = por %p122, %p123
    %p125 = scmp.ne.s32.totalorder %s111, %s112
    %p126 = scmp.eq.s32.totalorder %s17, 3
    %p127 = por %p125, %p126
    %p129 = scmp.ne.s32.totalorder %s112, %s128
    %p130 = scmp.eq.s32.totalorder %s17, 0
    %p131 = por %p129, %p130
    %s132 = ssub.s32 %s18, %s30
    %p133 = scmp.eq.s32.totalorder %s132, 0
    %s135 = sadd.s32 %s134, 1
    %s136 = scalar_select %p133, %s134, %s135
    %p139 = pneg %p133
    %p140 = scmp.eq.s32.totalorder %s11, 3
    %p141 = por %p139, %p140
    %p142 = scmp.ne.s32.totalorder %s134, %s137
    %p143 = scmp.eq.s32.totalorder %s11, 0
    %p144 = por %p142, %p143
    %p145 = scmp.ne.s32.totalorder %s134, %s137
    %p146 = scmp.eq.s32.totalorder %s16, 3
    %p147 = por %p145, %p146
    %p148 = scmp.ne.s32.totalorder %s137, %s138
    %p149 = scmp.eq.s32.totalorder %s16, 0
    %p150 = por %p148, %p149
    %p151 = scmp.ne.s32.totalorder %s137, %s138
    %p152 = scmp.eq.s32.totalorder %s17, 3
    %p153 = por %p151, %p152
    %p155 = scmp.ne.s32.totalorder %s138, %s154
    %p156 = scmp.eq.s32.totalorder %s17, 0
    %p157 = por %p155, %p156
    %p158 = scmp.le.s32.totalorder 1, %s11
    %p159 = scmp.lt.s32.totalorder %s11, 5
    %p160 = pnand %p158, %p159
    %p161 = pneg %p160
    // Predicated region
    $region9: #{resnet_block_forward.8} parent=5 // pred_check
      _
    $region10: #{resnet_block_forward.8} parent=5 // pred_check_branch
      %163 = sbr.rel (%p160) target = $region12
    $region11: #{resnet_block_forward.8} parent=5 // pred_region
      %s164 = ssub.s32 %s11, 1
      // Predicated region
      $region13: #{resnet_block_forward.8} parent=11 // pred_check
        %p165 = pneg %p70
      $region14: #{resnet_block_forward.8} parent=11 // pred_check_branch
        %167 = sbr.rel (%p165) target = $region16
      $region15: #{resnet_block_forward.8} parent=11 // pred_region
        _
      $region16: #{resnet_block_forward.8} parent=11 // pred_fallthru
        _
    $region12: #{resnet_block_forward.8} parent=5 // pred_fallthru
      _
    %p168 = scmp.lt.s32.totalorder %s11, 4
    // Predicated region
    $region17: #{resnet_block_forward.8} parent=5 // pred_check
      %p169 = pneg %p168
    $region18: #{resnet_block_forward.8} parent=5 // pred_check_branch
      %171 = sbr.rel (%p169) target = $region20
    $region19: #{resnet_block_forward.8} parent=5 // pred_region
      // Predicated region
      $region21: #{resnet_block_forward.8} parent=19 // pred_check
        %p172 = pneg %p43
      $region22: #{resnet_block_forward.8} parent=19 // pred_check_branch
        %174 = sbr.rel (%p172) target = $region24
      $region23: #{resnet_block_forward.8} parent=19 // pred_region
        %p175 = scmp.lt.s32.totalorder %s18, 1
        %s176 = scalar_select %p175, %s18, 1
        %s177 = smul.addr %s176, 20
        %s178 = smul.addr %s177, 4
        %s179 = scalar_lea.vmem %s0, %s178
      $region24: #{resnet_block_forward.8} parent=19 // pred_fallthru
        _
    $region20: #{resnet_block_forward.8} parent=5 // pred_fallthru
      _
    %p180 = scmp.le.s32.totalorder 1, %s11
    %p181 = scmp.lt.s32.totalorder %s11, 5
    %p182 = pnand %p180, %p181
    %p183 = pneg %p182
    // Predicated region
    $region25: #{resnet_block_forward.8} parent=5 // pred_check
      _
    $region26: #{resnet_block_forward.8} parent=5 // pred_check_branch
      %185 = sbr.rel (%p182) target = $region28
    $region27: #{resnet_block_forward.8} parent=5 // pred_region
      %s186 = ssub.s32 %s11, 1
      %p187 = scmp.lt.s32.totalorder %s20, 1
      %s188 = scalar_select %p187, %s20, 1
      %s189 = smul.addr %s188, 20
      %s190 = smul.addr %s189, 4
      %s191 = scalar_lea.vmem %s0, %s190
      %p192 = pneg %p49
      %p193 = pneg %p46
      %p194 = pneg %p70
      %p195 = pneg %p67
      %p196 = pneg %p98
      %p197 = pneg %p95
      %s198 = smul.u32 4, %s21
      %p199 = scmp.lt.s32.totalorder %s20, 1
      %s200 = scalar_select %p199, %s20, 1
      %p201 = scmp.lt.s32.totalorder %s198, 7
      %s202 = scalar_select %p201, %s198, 7
      %s203 = smul.addr %s200, 8
      %s204 = sadd.s32 %s202, %s203
      %s205 = smul.addr %s204, 8
      %s206 = scalar_lea.vmem %s2, %s205
      %p207 = pneg %p124
      %p208 = pneg %p121
      %p209 = scmp.lt.s32.totalorder %s20, 1
      %s210 = scalar_select %p209, %s20, 1
      %s211 = smul.addr %s210, 8
      %s212 = scalar_lea.vmem %s3, %s211
      %p213 = pneg %p150
      %p214 = pneg %p147
      %p215 = scmp.lt.s32.totalorder %s20, 1
      %s216 = scalar_select %p215, %s20, 1
      %s217 = smul.addr %s216, 8
      %s218 = scalar_lea.vmem %s4, %s217
      %p219 = scmp.lt.s32.totalorder %s20, 1
      %s220 = scalar_select %p219, %s20, 1
      %s221 = smul.addr %s220, 20
      %s222 = smul.addr %s221, 4
      %s223 = scalar_lea.vmem %s0, %s222
      %s224 = smul.u32 4, %s21
      %p225 = scmp.lt.s32.totalorder %s20, 1
      %s226 = scalar_select %p225, %s20, 1
      %p227 = scmp.lt.s32.totalorder %s224, 7
      %s228 = scalar_select %p227, %s224, 7
      %s229 = smul.addr %s226, 8
      %s230 = sadd.s32 %s228, %s229
      %s231 = smul.addr %s230, 8
      %s232 = scalar_lea.vmem %s2, %s231
      %s233 = smul.u32 4, %s21
      %p234 = scmp.lt.s32.totalorder %s20, 1
      %s235 = scalar_select %p234, %s20, 1
      %s236 = smul.addr %s235, 8
      %s237 = scalar_lea.vmem %s3, %s236
      %p238 = scmp.lt.s32.totalorder %s20, 1
      %s239 = scalar_select %p238, %s20, 1
      %s240 = smul.addr %s239, 8
      %s241 = scalar_lea.vmem %s4, %s240
      %p243 = scmp.eq.s32.totalorder %s21, 0
      // Predicated region
      $region29: #{resnet_block_forward.8} parent=27 // pred_check
        %p244 = pneg %p243
      $region30: #{resnet_block_forward.8} parent=27 // pred_check_branch
        %246 = sbr.rel (%p244) target = $region32
      $region31: #{resnet_block_forward.8} parent=27 // pred_region
        %247 = vst [vmem:[%s237] sm:$0xff] 0.0
        %248 = vst [vmem:[%s241] sm:$0xff] 0.0
      $region32: #{resnet_block_forward.8} parent=27 // pred_fallthru
        _
      %s249 = smul.u32 %s21, 4
      %s250 = smul.u32 %s249, 2
      %s251 = smul.addr %s250, 4
      %s252 = scalar_lea.vmem %s223, %s251
      %v253 = vld [vmem:[%s252] sm:$0xf]
      %v254 = vld [vmem:[%s252 + $0x8] sm:$0xf]
      %v255 = vld [vmem:[%s252 + $0x10] sm:$0xf]
      %v256 = vld [vmem:[%s252 + $0x18] sm:$0xf]
      %v257 = vld [vmem:[%s1] sm:$0xf]
      %v258 = vld [vmem:[%s1 + $0x4] sm:$0xf]
      %v259 = vld [vmem:[%s1 + $0x8] sm:$0xf]
      %v260 = vld [vmem:[%s1 + $0xc] sm:$0xf]
      %v261 = vld [vmem:[%s1 + $0x10] sm:$0xf]
      %v262 = vld [vmem:[%s1 + $0x14] sm:$0xf]
      %v263 = vld [vmem:[%s1 + $0x18] sm:$0xf]
      %v264 = vld [vmem:[%s1 + $0x1c] sm:$0xf]
      %v265 = vld [vmem:[%s1 + $0x20] sm:$0xf]
      %v266 = vld [vmem:[%s1 + $0x24] sm:$0xf]
      %v267 = vld [vmem:[%s1 + $0x28] sm:$0xf]
      %v268 = vld [vmem:[%s1 + $0x2c] sm:$0xf]
      %v269 = vld [vmem:[%s1 + $0x30] sm:$0xf]
      %v270 = vld [vmem:[%s1 + $0x34] sm:$0xf]
      %v271 = vld [vmem:[%s1 + $0x38] sm:$0xf]
      %v272 = vld [vmem:[%s1 + $0x3c] sm:$0xf]
      %v273 = vld [vmem:[%s252 + $0x4] sm:$0x1]
      %v274 = vld [vmem:[%s252 + $0xc] sm:$0x1]
      %v275 = vld [vmem:[%s252 + $0x14] sm:$0x1]
      %v276 = vld [vmem:[%s252 + $0x1c] sm:$0x1]
      %vm277 = vsmask.f32 3328
      %vm278 = vsmask.f32 7440
      %vm279 = vmor %vm277, %vm278
      %v281 = vshrl.u32 %v253, 16
      %v283 = vrot.slane %v281, 4
      %v284 = vshll.u32 %v253, 16
      %v286 = vrot.slane %v284, 5
      %v287 = vor.u32 %v283, %v286
      %v288 = vrot.slane %v287, 4
      %v290 = vshll.u32 %v273, 16
      %v292 = vrot.slane %v290, 5
      %v293 = vsel %vm279, %v288, %v292
      %v295 = vshrl.u32 %v254, 16
      %v297 = vrot.slane %v295, 4
      %v298 = vshll.u32 %v254, 16
      %v300 = vrot.slane %v298, 5
      %v301 = vor.u32 %v297, %v300
      %v302 = vrot.slane %v301, 4
      %v304 = vshll.u32 %v274, 16
      %v306 = vrot.slane %v304, 5
      %v307 = vsel %vm279, %v302, %v306
      %v309 = vshrl.u32 %v255, 16
      %v311 = vrot.slane %v309, 4
      %v312 = vshll.u32 %v255, 16
      %v314 = vrot.slane %v312, 5
      %v315 = vor.u32 %v311, %v314
      %v316 = vrot.slane %v315, 4
      %v318 = vshll.u32 %v275, 16
      %v320 = vrot.slane %v318, 5
      %v321 = vsel %vm279, %v316, %v320
      %v323 = vshrl.u32 %v256, 16
      %v325 = vrot.slane %v323, 4
      %v326 = vshll.u32 %v256, 16
      %v328 = vrot.slane %v326, 5
      %v329 = vor.u32 %v325, %v328
      %v330 = vrot.slane %v329, 4
      %v332 = vshll.u32 %v276, 16
      %v334 = vrot.slane %v332, 5
      %v335 = vsel %vm279, %v330, %v334
      %s336 = scalar_lea.vmem %s1, 64
      %v337 = vld [vmem:[%s336] sm:$0xf]
      %v338 = vld [vmem:[%s336 + $0x4] sm:$0xf]
      %v339 = vld [vmem:[%s336 + $0x8] sm:$0xf]
      %v340 = vld [vmem:[%s336 + $0xc] sm:$0xf]
      %v341 = vld [vmem:[%s336 + $0x10] sm:$0xf]
      %v342 = vld [vmem:[%s336 + $0x14] sm:$0xf]
      %v343 = vld [vmem:[%s336 + $0x18] sm:$0xf]
      %v344 = vld [vmem:[%s336 + $0x1c] sm:$0xf]
      %v345 = vld [vmem:[%s336 + $0x20] sm:$0xf]
      %v346 = vld [vmem:[%s336 + $0x24] sm:$0xf]
      %v347 = vld [vmem:[%s336 + $0x28] sm:$0xf]
      %v348 = vld [vmem:[%s336 + $0x2c] sm:$0xf]
      %v349 = vld [vmem:[%s336 + $0x30] sm:$0xf]
      %v350 = vld [vmem:[%s336 + $0x34] sm:$0xf]
      %v351 = vld [vmem:[%s336 + $0x38] sm:$0xf]
      %v352 = vld [vmem:[%s336 + $0x3c] sm:$0xf]
      %v353 = vunpack.c.l.b16 %v293
      %v354 = vunpack.c.l.b16 %v307
      %v355 = vunpack.c.l.b16 %v321
      %v356 = vunpack.c.l.b16 %v335
      %v357 = vpack.c.b16 %v354, %v353
      %v358 = vpack.c.b16 %v356, %v355
      %v377 = vunpack.c.l.b16 %v337
      %v378 = vunpack.c.l.b16 %v338
      %v379 = vunpack.c.l.b16 %v339
      %v380 = vunpack.c.l.b16 %v340
      %v381 = vunpack.c.l.b16 %v341
      %v382 = vunpack.c.l.b16 %v342
      %v383 = vunpack.c.l.b16 %v343
      %v384 = vunpack.c.l.b16 %v344
      %v385 = vunpack.c.l.b16 %v345
      %v386 = vunpack.c.l.b16 %v346
      %v387 = vunpack.c.l.b16 %v347
      %v388 = vunpack.c.l.b16 %v348
      %v389 = vunpack.c.l.b16 %v349
      %v390 = vunpack.c.l.b16 %v350
      %v391 = vunpack.c.l.b16 %v351
      %v392 = vunpack.c.l.b16 %v352
      %v393 = vpack.c.b16 %v378, %v377
      %v394 = vpack.c.b16 %v380, %v379
      %v395 = vpack.c.b16 %v382, %v381
      %v396 = vpack.c.b16 %v384, %v383
      %v397 = vpack.c.b16 %v386, %v385
      %v398 = vpack.c.b16 %v388, %v387
      %v399 = vpack.c.b16 %v390, %v389
      %v400 = vpack.c.b16 %v392, %v391
      %409 = vmatprep.subr.bf16.mxu0 0
      %410 = vmatpush1.bf16.msra.mxu0 %v400
      %411 = vmatprep.subr.bf16.mxu0 0
      %412 = vmatpush1.bf16.msra.mxu0 %v399
      %413 = vmatprep.subr.bf16.mxu0 0
      %414 = vmatpush1.bf16.msra.mxu0 %v398
      %415 = vmatprep.subr.bf16.mxu0 0
      %416 = vmatpush1.bf16.msra.mxu0 %v397
      %417 = vmatprep.subr.bf16.mxu0 0
      %418 = vmatpush1.bf16.msra.mxu0 %v396
      %419 = vmatprep.subr.bf16.mxu0 0
      %420 = vmatpush1.bf16.msra.mxu0 %v395
      %421 = vmatprep.subr.bf16.mxu0 0
      %422 = vmatpush1.bf16.msra.mxu0 %v394
      %423 = vmatprep.subr.bf16.mxu0 0
      %424 = vmatpush1.bf16.msra.mxu0 %v393
      %425 = vmatprep.subr.bf16.mxu0 0
      %426 = vmatpush2.bf16.msra.mxu0 0
      %427 = vmatprep.subr.bf16.mxu0 0
      %428 = vmatpush2.bf16.msra.mxu0 0
      %429 = vmatprep.subr.bf16.mxu0 0
      %430 = vmatpush2.bf16.msra.mxu0 0
      %431 = vmatprep.subr.bf16.mxu0 0
      %432 = vmatpush2.bf16.msra.mxu0 0
      %433 = vmatprep.subr.bf16.mxu0 0
      %434 = vmatpush2.bf16.msra.mxu0 0
      %435 = vmatprep.subr.bf16.mxu0 0
      %436 = vmatpush2.bf16.msra.mxu0 0
      %437 = vmatprep.subr.bf16.mxu0 0
      %438 = vmatpush2.bf16.msra.mxu0 0
      %439 = vmatprep.subr.bf16.mxu0 0
      %440 = vmatpush2.bf16.msra.mxu0 0
      %441 = vmatprep.mubr.bf16.mxu0 0
      %442 = vmatmul.mubr.bf16.gmra.mxu0 %v357
      %v443 = vpop.f32.mrf.mxu0
      %v444 = vadd.f32 0.0, %v443
      %v445 = vpop.f32.mrf.mxu0
      %v446 = vpop.f32.mrf.mxu0
      %v447 = vadd.f32 0.0, %v446
      %v448 = vpop.f32.mrf.mxu0
      %449 = vmatprep.mubr.bf16.mxu0 0
      %450 = vmatmul.mubr.bf16.gmra.mxu0 %v358
      %v451 = vpop.f32.mrf.mxu0
      %v452 = vadd.f32 0.0, %v451
      %v453 = vpop.f32.mrf.mxu0
      %v454 = vpop.f32.mrf.mxu0
      %v455 = vadd.f32 0.0, %v454
      %v456 = vpop.f32.mrf.mxu0
      %457 = vdwg.mxu0
      %v462 = vunpack.c.l.b16 %v253
      %v463 = vunpack.c.l.b16 %v254
      %v464 = vunpack.c.l.b16 %v255
      %v465 = vunpack.c.l.b16 %v256
      %v466 = vpack.c.b16 %v463, %v462
      %v467 = vpack.c.b16 %v465, %v464
      %v486 = vunpack.c.l.b16 %v257
      %v487 = vunpack.c.l.b16 %v258
      %v488 = vunpack.c.l.b16 %v259
      %v489 = vunpack.c.l.b16 %v260
      %v490 = vunpack.c.l.b16 %v261
      %v491 = vunpack.c.l.b16 %v262
      %v492 = vunpack.c.l.b16 %v263
      %v493 = vunpack.c.l.b16 %v264
      %v494 = vunpack.c.l.b16 %v265
      %v495 = vunpack.c.l.b16 %v266
      %v496 = vunpack.c.l.b16 %v267
      %v497 = vunpack.c.l.b16 %v268
      %v498 = vunpack.c.l.b16 %v269
      %v499 = vunpack.c.l.b16 %v270
      %v500 = vunpack.c.l.b16 %v271
      %v501 = vunpack.c.l.b16 %v272
      %v502 = vpack.c.b16 %v487, %v486
      %v503 = vpack.c.b16 %v489, %v488
      %v504 = vpack.c.b16 %v491, %v490
      %v505 = vpack.c.b16 %v493, %v492
      %v506 = vpack.c.b16 %v495, %v494
      %v507 = vpack.c.b16 %v497, %v496
      %v508 = vpack.c.b16 %v499, %v498
      %v509 = vpack.c.b16 %v501, %v500
      %518 = vmatprep.subr.bf16.mxu0 0
      %519 = vmatpush1.bf16.msra.mxu0 %v509
      %520 = vmatprep.subr.bf16.mxu0 0
      %521 = vmatpush1.bf16.msra.mxu0 %v508
      %522 = vmatprep.subr.bf16.mxu0 0
      %523 = vmatpush1.bf16.msra.mxu0 %v507
      %524 = vmatprep.subr.bf16.mxu0 0
      %525 = vmatpush1.bf16.msra.mxu0 %v506
      %526 = vmatprep.subr.bf16.mxu0 0
      %527 = vmatpush1.bf16.msra.mxu0 %v505
      %528 = vmatprep.subr.bf16.mxu0 0
      %529 = vmatpush1.bf16.msra.mxu0 %v504
      %530 = vmatprep.subr.bf16.mxu0 0
      %531 = vmatpush1.bf16.msra.mxu0 %v503
      %532 = vmatprep.subr.bf16.mxu0 0
      %533 = vmatpush1.bf16.msra.mxu0 %v502
      %534 = vmatprep.subr.bf16.mxu0 0
      %535 = vmatpush2.bf16.msra.mxu0 0
      %536 = vmatprep.subr.bf16.mxu0 0
      %537 = vmatpush2.bf16.msra.mxu0 0
      %538 = vmatprep.subr.bf16.mxu0 0
      %539 = vmatpush2.bf16.msra.mxu0 0
      %540 = vmatprep.subr.bf16.mxu0 0
      %541 = vmatpush2.bf16.msra.mxu0 0
      %542 = vmatprep.subr.bf16.mxu0 0
      %543 = vmatpush2.bf16.msra.mxu0 0
      %544 = vmatprep.subr.bf16.mxu0 0
      %545 = vmatpush2.bf16.msra.mxu0 0
      %546 = vmatprep.subr.bf16.mxu0 0
      %547 = vmatpush2.bf16.msra.mxu0 0
      %548 = vmatprep.subr.bf16.mxu0 0
      %549 = vmatpush2.bf16.msra.mxu0 0
      %550 = vmatprep.mubr.bf16.mxu0 0
      %551 = vmatmul.mubr.bf16.gmra.mxu0 %v466
      %v552 = vpop.f32.mrf.mxu0
      %v553 = vadd.f32 %v444, %v552
      %v554 = vpop.f32.mrf.mxu0
      %v555 = vpop.f32.mrf.mxu0
      %v556 = vadd.f32 %v447, %v555
      %v557 = vpop.f32.mrf.mxu0
      %558 = vmatprep.mubr.bf16.mxu0 0
      %559 = vmatmul.mubr.bf16.gmra.mxu0 %v467
      %v560 = vpop.f32.mrf.mxu0
      %v561 = vadd.f32 %v452, %v560
      %v562 = vpop.f32.mrf.mxu0
      %v563 = vpop.f32.mrf.mxu0
      %v564 = vadd.f32 %v455, %v563
      %v565 = vpop.f32.mrf.mxu0
      %566 = vdwg.mxu0
      %v567 = vld [vmem:[%s252] sm:$0xe]
      %v568 = vld [vmem:[%s252 + $0x8] sm:$0xe]
      %v569 = vld [vmem:[%s252 + $0x10] sm:$0xe]
      %v570 = vld [vmem:[%s252 + $0x18] sm:$0xe]
      %vm579 = vcmask 1042432
      %vm580 = vcmask 1046532
      %vm581 = vmor %vm579, %vm580
      %v582 = vrot.slane %v567, 5
      %v583 = vrot.slane %v582, 4
      %v584 = vrot.slane %v273, 5
      %v585 = vsel %vm581, %v583, %v584
      %v586 = vrot.slane %v568, 5
      %v587 = vrot.slane %v586, 4
      %v588 = vrot.slane %v274, 5
      %v589 = vsel %vm581, %v587, %v588
      %v590 = vrot.slane %v569, 5
      %v591 = vrot.slane %v590, 4
      %v592 = vrot.slane %v275, 5
      %v593 = vsel %vm581, %v591, %v592
      %v594 = vrot.slane %v570, 5
      %v595 = vrot.slane %v594, 4
      %v596 = vrot.slane %v276, 5
      %v597 = vsel %vm581, %v595, %v596
      %s598 = scalar_lea.vmem %s1, 128
      %v599 = vld [vmem:[%s598] sm:$0xf]
      %v600 = vld [vmem:[%s598 + $0x4] sm:$0xf]
      %v601 = vld [vmem:[%s598 + $0x8] sm:$0xf]
      %v602 = vld [vmem:[%s598 + $0xc] sm:$0xf]
      %v603 = vld [vmem:[%s598 + $0x10] sm:$0xf]
      %v604 = vld [vmem:[%s598 + $0x14] sm:$0xf]
      %v605 = vld [vmem:[%s598 + $0x18] sm:$0xf]
      %v606 = vld [vmem:[%s598 + $0x1c] sm:$0xf]
      %v607 = vld [vmem:[%s598 + $0x20] sm:$0xf]
      %v608 = vld [vmem:[%s598 + $0x24] sm:$0xf]
      %v609 = vld [vmem:[%s598 + $0x28] sm:$0xf]
      %v610 = vld [vmem:[%s598 + $0x2c] sm:$0xf]
      %v611 = vld [vmem:[%s598 + $0x30] sm:$0xf]
      %v612 = vld [vmem:[%s598 + $0x34] sm:$0xf]
      %v613 = vld [vmem:[%s598 + $0x38] sm:$0xf]
      %v614 = vld [vmem:[%s598 + $0x3c] sm:$0xf]
      %v615 = vunpack.c.l.b16 %v585
      %v616 = vunpack.c.l.b16 %v589
      %v617 = vunpack.c.l.b16 %v593
      %v618 = vunpack.c.l.b16 %v597
      %v619 = vpack.c.b16 %v616, %v615
      %v620 = vpack.c.b16 %v618, %v617
      %v639 = vunpack.c.l.b16 %v599
      %v640 = vunpack.c.l.b16 %v600
      %v641 = vunpack.c.l.b16 %v601
      %v642 = vunpack.c.l.b16 %v602
      %v643 = vunpack.c.l.b16 %v603
      %v644 = vunpack.c.l.b16 %v604
      %v645 = vunpack.c.l.b16 %v605
      %v646 = vunpack.c.l.b16 %v606
      %v647 = vunpack.c.l.b16 %v607
      %v648 = vunpack.c.l.b16 %v608
      %v649 = vunpack.c.l.b16 %v609
      %v650 = vunpack.c.l.b16 %v610
      %v651 = vunpack.c.l.b16 %v611
      %v652 = vunpack.c.l.b16 %v612
      %v653 = vunpack.c.l.b16 %v613
      %v654 = vunpack.c.l.b16 %v614
      %v655 = vpack.c.b16 %v640, %v639
      %v656 = vpack.c.b16 %v642, %v641
      %v657 = vpack.c.b16 %v644, %v643
      %v658 = vpack.c.b16 %v646, %v645
      %v659 = vpack.c.b16 %v648, %v647
      %v660 = vpack.c.b16 %v650, %v649
      %v661 = vpack.c.b16 %v652, %v651
      %v662 = vpack.c.b16 %v654, %v653
      %671 = vmatprep.subr.bf16.mxu0 0
      %672 = vmatpush1.bf16.msra.mxu0 %v662
      %673 = vmatprep.subr.bf16.mxu0 0
      %674 = vmatpush1.bf16.msra.mxu0 %v661
      %675 = vmatprep.subr.bf16.mxu0 0
      %676 = vmatpush1.bf16.msra.mxu0 %v660
      %677 = vmatprep.subr.bf16.mxu0 0
      %678 = vmatpush1.bf16.msra.mxu0 %v659
      %679 = vmatprep.subr.bf16.mxu0 0
      %680 = vmatpush1.bf16.msra.mxu0 %v658
      %681 = vmatprep.subr.bf16.mxu0 0
      %682 = vmatpush1.bf16.msra.mxu0 %v657
      %683 = vmatprep.subr.bf16.mxu0 0
      %684 = vmatpush1.bf16.msra.mxu0 %v656
      %685 = vmatprep.subr.bf16.mxu0 0
      %686 = vmatpush1.bf16.msra.mxu0 %v655
      %687 = vmatprep.subr.bf16.mxu0 0
      %688 = vmatpush2.bf16.msra.mxu0 0
      %689 = vmatprep.subr.bf16.mxu0 0
      %690 = vmatpush2.bf16.msra.mxu0 0
      %691 = vmatprep.subr.bf16.mxu0 0
      %692 = vmatpush2.bf16.msra.mxu0 0
      %693 = vmatprep.subr.bf16.mxu0 0
      %694 = vmatpush2.bf16.msra.mxu0 0
      %695 = vmatprep.subr.bf16.mxu0 0
      %696 = vmatpush2.bf16.msra.mxu0 0
      %697 = vmatprep.subr.bf16.mxu0 0
      %698 = vmatpush2.bf16.msra.mxu0 0
      %699 = vmatprep.subr.bf16.mxu0 0
      %700 = vmatpush2.bf16.msra.mxu0 0
      %701 = vmatprep.subr.bf16.mxu0 0
      %702 = vmatpush2.bf16.msra.mxu0 0
      %703 = vmatprep.mubr.bf16.mxu0 0
      %704 = vmatmul.mubr.bf16.gmra.mxu0 %v619
      %v705 = vpop.f32.mrf.mxu0
      %v706 = vadd.f32 0.0, %v705
      %v707 = vpop.f32.mrf.mxu0
      %v708 = vpop.f32.mrf.mxu0
      %v709 = vadd.f32 0.0, %v708
      %v710 = vpop.f32.mrf.mxu0
      %711 = vmatprep.mubr.bf16.mxu0 0
      %712 = vmatmul.mubr.bf16.gmra.mxu0 %v620
      %v713 = vpop.f32.mrf.mxu0
      %v714 = vadd.f32 0.0, %v713
      %v715 = vpop.f32.mrf.mxu0
      %v716 = vpop.f32.mrf.mxu0
      %v717 = vadd.f32 0.0, %v716
      %v718 = vpop.f32.mrf.mxu0
      %719 = vdwg.mxu0
      %v720 = vadd.f32 %v553, %v706
      %v721 = vadd.f32 %v556, %v709
      %v722 = vadd.f32 %v561, %v714
      %v723 = vadd.f32 %v564, %v717
      %s724 = sadd.s32 %s249, 1
      %s725 = smul.u32 %s724, 2
      %s726 = smul.addr %s725, 4
      %s727 = scalar_lea.vmem %s223, %s726
      %v728 = vld [vmem:[%s727] sm:$0xf]
      %v729 = vld [vmem:[%s727 + $0x8] sm:$0xf]
      %v730 = vld [vmem:[%s727 + $0x10] sm:$0xf]
      %v731 = vld [vmem:[%s727 + $0x18] sm:$0xf]
      %s732 = scalar_lea.vmem %s1, 192
      %v733 = vld [vmem:[%s732] sm:$0xf]
      %v734 = vld [vmem:[%s732 + $0x4] sm:$0xf]
      %v735 = vld [vmem:[%s732 + $0x8] sm:$0xf]
      %v736 = vld [vmem:[%s732 + $0xc] sm:$0xf]
      %v737 = vld [vmem:[%s732 + $0x10] sm:$0xf]
      %v738 = vld [vmem:[%s732 + $0x14] sm:$0xf]
      %v739 = vld [vmem:[%s732 + $0x18] sm:$0xf]
      %v740 = vld [vmem:[%s732 + $0x1c] sm:$0xf]
      %v741 = vld [vmem:[%s732 + $0x20] sm:$0xf]
      %v742 = vld [vmem:[%s732 + $0x24] sm:$0xf]
      %v743 = vld [vmem:[%s732 + $0x28] sm:$0xf]
      %v744 = vld [vmem:[%s732 + $0x2c] sm:$0xf]
      %v745 = vld [vmem:[%s732 + $0x30] sm:$0xf]
      %v746 = vld [vmem:[%s732 + $0x34] sm:$0xf]
      %v747 = vld [vmem:[%s732 + $0x38] sm:$0xf]
      %v748 = vld [vmem:[%s732 + $0x3c] sm:$0xf]
      %v753 = vunpack.c.l.b16 %v728
      %v754 = vunpack.c.l.b16 %v729
      %v755 = vunpack.c.l.b16 %v730
      %v756 = vunpack.c.l.b16 %v731
      %v757 = vpack.c.b16 %v754, %v753
      %v758 = vpack.c.b16 %v756, %v755
      %v777 = vunpack.c.l.b16 %v733
      %v778 = vunpack.c.l.b16 %v734
      %v779 = vunpack.c.l.b16 %v735
      %v780 = vunpack.c.l.b16 %v736
      %v781 = vunpack.c.l.b16 %v737
      %v782 = vunpack.c.l.b16 %v738
      %v783 = vunpack.c.l.b16 %v739
      %v784 = vunpack.c.l.b16 %v740
      %v785 = vunpack.c.l.b16 %v741
      %v786 = vunpack.c.l.b16 %v742
      %v787 = vunpack.c.l.b16 %v743
      %v788 = vunpack.c.l.b16 %v744
      %v789 = vunpack.c.l.b16 %v745
      %v790 = vunpack.c.l.b16 %v746
      %v791 = vunpack.c.l.b16 %v747
      %v792 = vunpack.c.l.b16 %v748
      %v793 = vpack.c.b16 %v778, %v777
      %v794 = vpack.c.b16 %v780, %v779
      %v795 = vpack.c.b16 %v782, %v781
      %v796 = vpack.c.b16 %v784, %v783
      %v797 = vpack.c.b16 %v786, %v785
      %v798 = vpack.c.b16 %v788, %v787
      %v799 = vpack.c.b16 %v790, %v789
      %v800 = vpack.c.b16 %v792, %v791
      %809 = vmatprep.subr.bf16.mxu0 0
      %810 = vmatpush1.bf16.msra.mxu0 %v800
      %811 = vmatprep.subr.bf16.mxu0 0
      %812 = vmatpush1.bf16.msra.mxu0 %v799
      %813 = vmatprep.subr.bf16.mxu0 0
      %814 = vmatpush1.bf16.msra.mxu0 %v798
      %815 = vmatprep.subr.bf16.mxu0 0
      %816 = vmatpush1.bf16.msra.mxu0 %v797
      %817 = vmatprep.subr.bf16.mxu0 0
      %818 = vmatpush1.bf16.msra.mxu0 %v796
      %819 = vmatprep.subr.bf16.mxu0 0
      %820 = vmatpush1.bf16.msra.mxu0 %v795
      %821 = vmatprep.subr.bf16.mxu0 0
      %822 = vmatpush1.bf16.msra.mxu0 %v794
      %823 = vmatprep.subr.bf16.mxu0 0
      %824 = vmatpush1.bf16.msra.mxu0 %v793
      %825 = vmatprep.subr.bf16.mxu0 0
      %826 = vmatpush2.bf16.msra.mxu0 0
      %827 = vmatprep.subr.bf16.mxu0 0
      %828 = vmatpush2.bf16.msra.mxu0 0
      %829 = vmatprep.subr.bf16.mxu0 0
      %830 = vmatpush2.bf16.msra.mxu0 0
      %831 = vmatprep.subr.bf16.mxu0 0
      %832 = vmatpush2.bf16.msra.mxu0 0
      %833 = vmatprep.subr.bf16.mxu0 0
      %834 = vmatpush2.bf16.msra.mxu0 0
      %835 = vmatprep.subr.bf16.mxu0 0
      %836 = vmatpush2.bf16.msra.mxu0 0
      %837 = vmatprep.subr.bf16.mxu0 0
      %838 = vmatpush2.bf16.msra.mxu0 0
      %839 = vmatprep.subr.bf16.mxu0 0
      %840 = vmatpush2.bf16.msra.mxu0 0
      %841 = vmatprep.mubr.bf16.mxu0 0
      %842 = vmatmul.mubr.bf16.gmra.mxu0 %v757
      %v843 = vpop.f32.mrf.mxu0
      %v844 = vadd.f32 0.0, %v843
      %v845 = vpop.f32.mrf.mxu0
      %v846 = vpop.f32.mrf.mxu0
      %v847 = vadd.f32 0.0, %v846
      %v848 = vpop.f32.mrf.mxu0
      %849 = vmatprep.mubr.bf16.mxu0 0
      %850 = vmatmul.mubr.bf16.gmra.mxu0 %v758
      %v851 = vpop.f32.mrf.mxu0
      %v852 = vadd.f32 0.0, %v851
      %v853 = vpop.f32.mrf.mxu0
      %v854 = vpop.f32.mrf.mxu0
      %v855 = vadd.f32 0.0, %v854
      %v856 = vpop.f32.mrf.mxu0
      %857 = vdwg.mxu0
      %v858 = vadd.f32 %v720, %v844
      %v859 = vadd.f32 %v721, %v847
      %v860 = vadd.f32 %v722, %v852
      %v861 = vadd.f32 %v723, %v855
      %v862 = vld [vmem:[%s727] sm:$0xf]
      %v863 = vld [vmem:[%s727 + $0x4] sm:$0x1]
      %v864 = vld [vmem:[%s727 + $0x8] sm:$0xf]
      %v865 = vld [vmem:[%s727 + $0xc] sm:$0x1]
      %v866 = vld [vmem:[%s727 + $0x10] sm:$0xf]
      %v867 = vld [vmem:[%s727 + $0x14] sm:$0x1]
      %v868 = vld [vmem:[%s727 + $0x18] sm:$0xf]
      %v869 = vld [vmem:[%s727 + $0x1c] sm:$0x1]
      %v871 = vshrl.u32 %v862, 16
      %v873 = vrot.slane %v871, 4
      %v874 = vshll.u32 %v862, 16
      %v876 = vrot.slane %v874, 5
      %v877 = vor.u32 %v873, %v876
      %v878 = vrot.slane %v877, 4
      %v880 = vshll.u32 %v863, 16
      %v882 = vrot.slane %v880, 5
      %v883 = vsel %vm279, %v878, %v882
      %v885 = vshrl.u32 %v864, 16
      %v887 = vrot.slane %v885, 4
      %v888 = vshll.u32 %v864, 16
      %v890 = vrot.slane %v888, 5
      %v891 = vor.u32 %v887, %v890
      %v892 = vrot.slane %v891, 4
      %v894 = vshll.u32 %v865, 16
      %v896 = vrot.slane %v894, 5
      %v897 = vsel %vm279, %v892, %v896
      %v899 = vshrl.u32 %v866, 16
      %v901 = vrot.slane %v899, 4
      %v902 = vshll.u32 %v866, 16
      %v904 = vrot.slane %v902, 5
      %v905 = vor.u32 %v901, %v904
      %v906 = vrot.slane %v905, 4
      %v908 = vshll.u32 %v867, 16
      %v910 = vrot.slane %v908, 5
      %v911 = vsel %vm279, %v906, %v910
      %v913 = vshrl.u32 %v868, 16
      %v915 = vrot.slane %v913, 4
      %v916 = vshll.u32 %v868, 16
      %v918 = vrot.slane %v916, 5
      %v919 = vor.u32 %v915, %v918
      %v920 = vrot.slane %v919, 4
      %v922 = vshll.u32 %v869, 16
      %v924 = vrot.slane %v922, 5
      %v925 = vsel %vm279, %v920, %v924
      %s926 = scalar_lea.vmem %s1, 256
      %v927 = vld [vmem:[%s926] sm:$0xf]
      %v928 = vld [vmem:[%s926 + $0x4] sm:$0xf]
      %v929 = vld [vmem:[%s926 + $0x8] sm:$0xf]
      %v930 = vld [vmem:[%s926 + $0xc] sm:$0xf]
      %v931 = vld [vmem:[%s926 + $0x10] sm:$0xf]
      %v932 = vld [vmem:[%s926 + $0x14] sm:$0xf]
      %v933 = vld [vmem:[%s926 + $0x18] sm:$0xf]
      %v934 = vld [vmem:[%s926 + $0x1c] sm:$0xf]
      %v935 = vld [vmem:[%s926 + $0x20] sm:$0xf]
      %v936 = vld [vmem:[%s926 + $0x24] sm:$0xf]
      %v937 = vld [vmem:[%s926 + $0x28] sm:$0xf]
      %v938 = vld [vmem:[%s926 + $0x2c] sm:$0xf]
      %v939 = vld [vmem:[%s926 + $0x30] sm:$0xf]
      %v940 = vld [vmem:[%s926 + $0x34] sm:$0xf]
      %v941 = vld [vmem:[%s926 + $0x38] sm:$0xf]
      %v942 = vld [vmem:[%s926 + $0x3c] sm:$0xf]
      %v943 = vunpack.c.l.b16 %v883
      %v944 = vunpack.c.l.b16 %v897
      %v945 = vunpack.c.l.b16 %v911
      %v946 = vunpack.c.l.b16 %v925
      %v947 = vpack.c.b16 %v944, %v943
      %v948 = vpack.c.b16 %v946, %v945
      %v967 = vunpack.c.l.b16 %v927
      %v968 = vunpack.c.l.b16 %v928
      %v969 = vunpack.c.l.b16 %v929
      %v970 = vunpack.c.l.b16 %v930
      %v971 = vunpack.c.l.b16 %v931
      %v972 = vunpack.c.l.b16 %v932
      %v973 = vunpack.c.l.b16 %v933
      %v974 = vunpack.c.l.b16 %v934
      %v975 = vunpack.c.l.b16 %v935
      %v976 = vunpack.c.l.b16 %v936
      %v977 = vunpack.c.l.b16 %v937
      %v978 = vunpack.c.l.b16 %v938
      %v979 = vunpack.c.l.b16 %v939
      %v980 = vunpack.c.l.b16 %v940
      %v981 = vunpack.c.l.b16 %v941
      %v982 = vunpack.c.l.b16 %v942
      %v983 = vpack.c.b16 %v968, %v967
      %v984 = vpack.c.b16 %v970, %v969
      %v985 = vpack.c.b16 %v972, %v971
      %v986 = vpack.c.b16 %v974, %v973
      %v987 = vpack.c.b16 %v976, %v975
      %v988 = vpack.c.b16 %v978, %v977
      %v989 = vpack.c.b16 %v980, %v979
      %v990 = vpack.c.b16 %v982, %v981
      %999 = vmatprep.subr.bf16.mxu0 0
      %1000 = vmatpush1.bf16.msra.mxu0 %v990
      %1001 = vmatprep.subr.bf16.mxu0 0
      %1002 = vmatpush1.bf16.msra.mxu0 %v989
      %1003 = vmatprep.subr.bf16.mxu0 0
      %1004 = vmatpush1.bf16.msra.mxu0 %v988
      %1005 = vmatprep.subr.bf16.mxu0 0
      %1006 = vmatpush1.bf16.msra.mxu0 %v987
      %1007 = vmatprep.subr.bf16.mxu0 0
      %1008 = vmatpush1.bf16.msra.mxu0 %v986
      %1009 = vmatprep.subr.bf16.mxu0 0
      %1010 = vmatpush1.bf16.msra.mxu0 %v985
      %1011 = vmatprep.subr.bf16.mxu0 0
      %1012 = vmatpush1.bf16.msra.mxu0 %v984
      %1013 = vmatprep.subr.bf16.mxu0 0
      %1014 = vmatpush1.bf16.msra.mxu0 %v983
      %1015 = vmatprep.subr.bf16.mxu0 0
      %1016 = vmatpush2.bf16.msra.mxu0 0
      %1017 = vmatprep.subr.bf16.mxu0 0
      %1018 = vmatpush2.bf16.msra.mxu0 0
      %1019 = vmatprep.subr.bf16.mxu0 0
      %1020 = vmatpush2.bf16.msra.mxu0 0
      %1021 = vmatprep.subr.bf16.mxu0 0
      %1022 = vmatpush2.bf16.msra.mxu0 0
      %1023 = vmatprep.subr.bf16.mxu0 0
      %1024 = vmatpush2.bf16.msra.mxu0 0
      %1025 = vmatprep.subr.bf16.mxu0 0
      %1026 = vmatpush2.bf16.msra.mxu0 0
      %1027 = vmatprep.subr.bf16.mxu0 0
      %1028 = vmatpush2.bf16.msra.mxu0 0
      %1029 = vmatprep.subr.bf16.mxu0 0
      %1030 = vmatpush2.bf16.msra.mxu0 0
      %1031 = vmatprep.mubr.bf16.mxu0 0
      %1032 = vmatmul.mubr.bf16.gmra.mxu0 %v947
      %v1033 = vpop.f32.mrf.mxu0
      %v1034 = vadd.f32 0.0, %v1033
      %v1035 = vpop.f32.mrf.mxu0
      %v1036 = vpop.f32.mrf.mxu0
      %v1037 = vadd.f32 0.0, %v1036
      %v1038 = vpop.f32.mrf.mxu0
      %1039 = vmatprep.mubr.bf16.mxu0 0
      %1040 = vmatmul.mubr.bf16.gmra.mxu0 %v948
      %v1041 = vpop.f32.mrf.mxu0
      %v1042 = vadd.f32 0.0, %v1041
      %v1043 = vpop.f32.mrf.mxu0
      %v1044 = vpop.f32.mrf.mxu0
      %v1045 = vadd.f32 0.0, %v1044
      %v1046 = vpop.f32.mrf.mxu0
      %1047 = vdwg.mxu0
      %v1048 = vadd.f32 %v858, %v1034
      %v1049 = vadd.f32 %v859, %v1037
      %v1050 = vadd.f32 %v860, %v1042
      %v1051 = vadd.f32 %v861, %v1045
      %v1052 = vld [vmem:[%s727] sm:$0xe]
      %v1053 = vld [vmem:[%s727 + $0x8] sm:$0xe]
      %v1054 = vld [vmem:[%s727 + $0x10] sm:$0xe]
      %v1055 = vld [vmem:[%s727 + $0x18] sm:$0xe]
      %v1064 = vrot.slane %v1052, 5
      %v1065 = vrot.slane %v1064, 4
      %v1066 = vrot.slane %v863, 5
      %v1067 = vsel %vm581, %v1065, %v1066
      %v1068 = vrot.slane %v1053, 5
      %v1069 = vrot.slane %v1068, 4
      %v1070 = vrot.slane %v865, 5
      %v1071 = vsel %vm581, %v1069, %v1070
      %v1072 = vrot.slane %v1054, 5
      %v1073 = vrot.slane %v1072, 4
      %v1074 = vrot.slane %v867, 5
      %v1075 = vsel %vm581, %v1073, %v1074
      %v1076 = vrot.slane %v1055, 5
      %v1077 = vrot.slane %v1076, 4
      %v1078 = vrot.slane %v869, 5
      %v1079 = vsel %vm581, %v1077, %v1078
      %s1080 = scalar_lea.vmem %s1, 320
      %v1081 = vld [vmem:[%s1080] sm:$0xf]
      %v1082 = vld [vmem:[%s1080 + $0x4] sm:$0xf]
      %v1083 = vld [vmem:[%s1080 + $0x8] sm:$0xf]
      %v1084 = vld [vmem:[%s1080 + $0xc] sm:$0xf]
      %v1085 = vld [vmem:[%s1080 + $0x10] sm:$0xf]
      %v1086 = vld [vmem:[%s1080 + $0x14] sm:$0xf]
      %v1087 = vld [vmem:[%s1080 + $0x18] sm:$0xf]
      %v1088 = vld [vmem:[%s1080 + $0x1c] sm:$0xf]
      %v1089 = vld [vmem:[%s1080 + $0x20] sm:$0xf]
      %v1090 = vld [vmem:[%s1080 + $0x24] sm:$0xf]
      %v1091 = vld [vmem:[%s1080 + $0x28] sm:$0xf]
      %v1092 = vld [vmem:[%s1080 + $0x2c] sm:$0xf]
      %v1093 = vld [vmem:[%s1080 + $0x30] sm:$0xf]
      %v1094 = vld [vmem:[%s1080 + $0x34] sm:$0xf]
      %v1095 = vld [vmem:[%s1080 + $0x38] sm:$0xf]
      %v1096 = vld [vmem:[%s1080 + $0x3c] sm:$0xf]
      %v1097 = vunpack.c.l.b16 %v1067
      %v1098 = vunpack.c.l.b16 %v1071
      %v1099 = vunpack.c.l.b16 %v1075
      %v1100 = vunpack.c.l.b16 %v1079
      %v1101 = vpack.c.b16 %v1098, %v1097
      %v1102 = vpack.c.b16 %v1100, %v1099
      %v1121 = vunpack.c.l.b16 %v1081
      %v1122 = vunpack.c.l.b16 %v1082
      %v1123 = vunpack.c.l.b16 %v1083
      %v1124 = vunpack.c.l.b16 %v1084
      %v1125 = vunpack.c.l.b16 %v1085
      %v1126 = vunpack.c.l.b16 %v1086
      %v1127 = vunpack.c.l.b16 %v1087
      %v1128 = vunpack.c.l.b16 %v1088
      %v1129 = vunpack.c.l.b16 %v1089
      %v1130 = vunpack.c.l.b16 %v1090
      %v1131 = vunpack.c.l.b16 %v1091
      %v1132 = vunpack.c.l.b16 %v1092
      %v1133 = vunpack.c.l.b16 %v1093
      %v1134 = vunpack.c.l.b16 %v1094
      %v1135 = vunpack.c.l.b16 %v1095
      %v1136 = vunpack.c.l.b16 %v1096
      %v1137 = vpack.c.b16 %v1122, %v1121
      %v1138 = vpack.c.b16 %v1124, %v1123
      %v1139 = vpack.c.b16 %v1126, %v1125
      %v1140 = vpack.c.b16 %v1128, %v1127
      %v1141 = vpack.c.b16 %v1130, %v1129
      %v1142 = vpack.c.b16 %v1132, %v1131
      %v1143 = vpack.c.b16 %v1134, %v1133
      %v1144 = vpack.c.b16 %v1136, %v1135
      %1153 = vmatprep.subr.bf16.mxu0 0
      %1154 = vmatpush1.bf16.msra.mxu0 %v1144
      %1155 = vmatprep.subr.bf16.mxu0 0
      %1156 = vmatpush1.bf16.msra.mxu0 %v1143
      %1157 = vmatprep.subr.bf16.mxu0 0
      %1158 = vmatpush1.bf16.msra.mxu0 %v1142
      %1159 = vmatprep.subr.bf16.mxu0 0
      %1160 = vmatpush1.bf16.msra.mxu0 %v1141
      %1161 = vmatprep.subr.bf16.mxu0 0
      %1162 = vmatpush1.bf16.msra.mxu0 %v1140
      %1163 = vmatprep.subr.bf16.mxu0 0
      %1164 = vmatpush1.bf16.msra.mxu0 %v1139
      %1165 = vmatprep.subr.bf16.mxu0 0
      %1166 = vmatpush1.bf16.msra.mxu0 %v1138
      %1167 = vmatprep.subr.bf16.mxu0 0
      %1168 = vmatpush1.bf16.msra.mxu0 %v1137
      %1169 = vmatprep.subr.bf16.mxu0 0
      %1170 = vmatpush2.bf16.msra.mxu0 0
      %1171 = vmatprep.subr.bf16.mxu0 0
      %1172 = vmatpush2.bf16.msra.mxu0 0
      %1173 = vmatprep.subr.bf16.mxu0 0
      %1174 = vmatpush2.bf16.msra.mxu0 0
      %1175 = vmatprep.subr.bf16.mxu0 0
      %1176 = vmatpush2.bf16.msra.mxu0 0
      %1177 = vmatprep.subr.bf16.mxu0 0
      %1178 = vmatpush2.bf16.msra.mxu0 0
      %1179 = vmatprep.subr.bf16.mxu0 0
      %1180 = vmatpush2.bf16.msra.mxu0 0
      %1181 = vmatprep.subr.bf16.mxu0 0
      %1182 = vmatpush2.bf16.msra.mxu0 0
      %1183 = vmatprep.subr.bf16.mxu0 0
      %1184 = vmatpush2.bf16.msra.mxu0 0
      %1185 = vmatprep.mubr.bf16.mxu0 0
      %1186 = vmatmul.mubr.bf16.gmra.mxu0 %v1101
      %v1187 = vpop.f32.mrf.mxu0
      %v1188 = vadd.f32 0.0, %v1187
      %v1189 = vpop.f32.mrf.mxu0
      %v1190 = vpop.f32.mrf.mxu0
      %v1191 = vadd.f32 0.0, %v1190
      %v1192 = vpop.f32.mrf.mxu0
      %1193 = vmatprep.mubr.bf16.mxu0 0
      %1194 = vmatmul.mubr.bf16.gmra.mxu0 %v1102
      %v1195 = vpop.f32.mrf.mxu0
      %v1196 = vadd.f32 0.0, %v1195
      %v1197 = vpop.f32.mrf.mxu0
      %v1198 = vpop.f32.mrf.mxu0
      %v1199 = vadd.f32 0.0, %v1198
      %v1200 = vpop.f32.mrf.mxu0
      %1201 = vdwg.mxu0
      %v1202 = vadd.f32 %v1048, %v1188
      %v1203 = vadd.f32 %v1049, %v1191
      %v1204 = vadd.f32 %v1050, %v1196
      %v1205 = vadd.f32 %v1051, %v1199
      %s1206 = sadd.s32 %s249, 2
      %s1207 = smul.u32 %s1206, 2
      %s1208 = smul.addr %s1207, 4
      %s1209 = scalar_lea.vmem %s223, %s1208
      %v1210 = vld [vmem:[%s1209] sm:$0xf]
      %v1211 = vld [vmem:[%s1209 + $0x8] sm:$0xf]
      %v1212 = vld [vmem:[%s1209 + $0x10] sm:$0xf]
      %v1213 = vld [vmem:[%s1209 + $0x18] sm:$0xf]
      %s1214 = scalar_lea.vmem %s1, 384
      %v1215 = vld [vmem:[%s1214] sm:$0xf]
      %v1216 = vld [vmem:[%s1214 + $0x4] sm:$0xf]
      %v1217 = vld [vmem:[%s1214 + $0x8] sm:$0xf]
      %v1218 = vld [vmem:[%s1214 + $0xc] sm:$0xf]
      %v1219 = vld [vmem:[%s1214 + $0x10] sm:$0xf]
      %v1220 = vld [vmem:[%s1214 + $0x14] sm:$0xf]
      %v1221 = vld [vmem:[%s1214 + $0x18] sm:$0xf]
      %v1222 = vld [vmem:[%s1214 + $0x1c] sm:$0xf]
      %v1223 = vld [vmem:[%s1214 + $0x20] sm:$0xf]
      %v1224 = vld [vmem:[%s1214 + $0x24] sm:$0xf]
      %v1225 = vld [vmem:[%s1214 + $0x28] sm:$0xf]
      %v1226 = vld [vmem:[%s1214 + $0x2c] sm:$0xf]
      %v1227 = vld [vmem:[%s1214 + $0x30] sm:$0xf]
      %v1228 = vld [vmem:[%s1214 + $0x34] sm:$0xf]
      %v1229 = vld [vmem:[%s1214 + $0x38] sm:$0xf]
      %v1230 = vld [vmem:[%s1214 + $0x3c] sm:$0xf]
      %v1235 = vunpack.c.l.b16 %v1210
      %v1236 = vunpack.c.l.b16 %v1211
      %v1237 = vunpack.c.l.b16 %v1212
      %v1238 = vunpack.c.l.b16 %v1213
      %v1239 = vpack.c.b16 %v1236, %v1235
      %v1240 = vpack.c.b16 %v1238, %v1237
      %v1259 = vunpack.c.l.b16 %v1215
      %v1260 = vunpack.c.l.b16 %v1216
      %v1261 = vunpack.c.l.b16 %v1217
      %v1262 = vunpack.c.l.b16 %v1218
      %v1263 = vunpack.c.l.b16 %v1219
      %v1264 = vunpack.c.l.b16 %v1220
      %v1265 = vunpack.c.l.b16 %v1221
      %v1266 = vunpack.c.l.b16 %v1222
      %v1267 = vunpack.c.l.b16 %v1223
      %v1268 = vunpack.c.l.b16 %v1224
      %v1269 = vunpack.c.l.b16 %v1225
      %v1270 = vunpack.c.l.b16 %v1226
      %v1271 = vunpack.c.l.b16 %v1227
      %v1272 = vunpack.c.l.b16 %v1228
      %v1273 = vunpack.c.l.b16 %v1229
      %v1274 = vunpack.c.l.b16 %v1230
      %v1275 = vpack.c.b16 %v1260, %v1259
      %v1276 = vpack.c.b16 %v1262, %v1261
      %v1277 = vpack.c.b16 %v1264, %v1263
      %v1278 = vpack.c.b16 %v1266, %v1265
      %v1279 = vpack.c.b16 %v1268, %v1267
      %v1280 = vpack.c.b16 %v1270, %v1269
      %v1281 = vpack.c.b16 %v1272, %v1271
      %v1282 = vpack.c.b16 %v1274, %v1273
      %1291 = vmatprep.subr.bf16.mxu0 0
      %1292 = vmatpush1.bf16.msra.mxu0 %v1282
      %1293 = vmatprep.subr.bf16.mxu0 0
      %1294 = vmatpush1.bf16.msra.mxu0 %v1281
      %1295 = vmatprep.subr.bf16.mxu0 0
      %1296 = vmatpush1.bf16.msra.mxu0 %v1280
      %1297 = vmatprep.subr.bf16.mxu0 0
      %1298 = vmatpush1.bf16.msra.mxu0 %v1279
      %1299 = vmatprep.subr.bf16.mxu0 0
      %1300 = vmatpush1.bf16.msra.mxu0 %v1278
      %1301 = vmatprep.subr.bf16.mxu0 0
      %1302 = vmatpush1.bf16.msra.mxu0 %v1277
      %1303 = vmatprep.subr.bf16.mxu0 0
      %1304 = vmatpush1.bf16.msra.mxu0 %v1276
      %1305 = vmatprep.subr.bf16.mxu0 0
      %1306 = vmatpush1.bf16.msra.mxu0 %v1275
      %1307 = vmatprep.subr.bf16.mxu0 0
      %1308 = vmatpush2.bf16.msra.mxu0 0
      %1309 = vmatprep.subr.bf16.mxu0 0
      %1310 = vmatpush2.bf16.msra.mxu0 0
      %1311 = vmatprep.subr.bf16.mxu0 0
      %1312 = vmatpush2.bf16.msra.mxu0 0
      %1313 = vmatprep.subr.bf16.mxu0 0
      %1314 = vmatpush2.bf16.msra.mxu0 0
      %1315 = vmatprep.subr.bf16.mxu0 0
      %1316 = vmatpush2.bf16.msra.mxu0 0
      %1317 = vmatprep.subr.bf16.mxu0 0
      %1318 = vmatpush2.bf16.msra.mxu0 0
      %1319 = vmatprep.subr.bf16.mxu0 0
      %1320 = vmatpush2.bf16.msra.mxu0 0
      %1321 = vmatprep.subr.bf16.mxu0 0
      %1322 = vmatpush2.bf16.msra.mxu0 0
      %1323 = vmatprep.mubr.bf16.mxu0 0
      %1324 = vmatmul.mubr.bf16.gmra.mxu0 %v1239
      %v1325 = vpop.f32.mrf.mxu0
      %v1326 = vadd.f32 0.0, %v1325
      %v1327 = vpop.f32.mrf.mxu0
      %v1328 = vpop.f32.mrf.mxu0
      %v1329 = vadd.f32 0.0, %v1328
      %v1330 = vpop.f32.mrf.mxu0
      %1331 = vmatprep.mubr.bf16.mxu0 0
      %1332 = vmatmul.mubr.bf16.gmra.mxu0 %v1240
      %v1333 = vpop.f32.mrf.mxu0
      %v1334 = vadd.f32 0.0, %v1333
      %v1335 = vpop.f32.mrf.mxu0
      %v1336 = vpop.f32.mrf.mxu0
      %v1337 = vadd.f32 0.0, %v1336
      %v1338 = vpop.f32.mrf.mxu0
      %1339 = vdwg.mxu0
      %v1340 = vadd.f32 %v1202, %v1326
      %v1341 = vadd.f32 %v1203, %v1329
      %v1342 = vadd.f32 %v1204, %v1334
      %v1343 = vadd.f32 %v1205, %v1337
      %v1344 = vld [vmem:[%s1209] sm:$0xf]
      %v1345 = vld [vmem:[%s1209 + $0x4] sm:$0x1]
      %v1346 = vld [vmem:[%s1209 + $0x8] sm:$0xf]
      %v1347 = vld [vmem:[%s1209 + $0xc] sm:$0x1]
      %v1348 = vld [vmem:[%s1209 + $0x10] sm:$0xf]
      %v1349 = vld [vmem:[%s1209 + $0x14] sm:$0x1]
      %v1350 = vld [vmem:[%s1209 + $0x18] sm:$0xf]
      %v1351 = vld [vmem:[%s1209 + $0x1c] sm:$0x1]
      %v1353 = vshrl.u32 %v1344, 16
      %v1355 = vrot.slane %v1353, 4
      %v1356 = vshll.u32 %v1344, 16
      %v1358 = vrot.slane %v1356, 5
      %v1359 = vor.u32 %v1355, %v1358
      %v1360 = vrot.slane %v1359, 4
      %v1362 = vshll.u32 %v1345, 16
      %v1364 = vrot.slane %v1362, 5
      %v1365 = vsel %vm279, %v1360, %v1364
      %v1367 = vshrl.u32 %v1346, 16
      %v1369 = vrot.slane %v1367, 4
      %v1370 = vshll.u32 %v1346, 16
      %v1372 = vrot.slane %v1370, 5
      %v1373 = vor.u32 %v1369, %v1372
      %v1374 = vrot.slane %v1373, 4
      %v1376 = vshll.u32 %v1347, 16
      %v1378 = vrot.slane %v1376, 5
      %v1379 = vsel %vm279, %v1374, %v1378
      %v1381 = vshrl.u32 %v1348, 16
      %v1383 = vrot.slane %v1381, 4
      %v1384 = vshll.u32 %v1348, 16
      %v1386 = vrot.slane %v1384, 5
      %v1387 = vor.u32 %v1383, %v1386
      %v1388 = vrot.slane %v1387, 4
      %v1390 = vshll.u32 %v1349, 16
      %v1392 = vrot.slane %v1390, 5
      %v1393 = vsel %vm279, %v1388, %v1392
      %v1395 = vshrl.u32 %v1350, 16
      %v1397 = vrot.slane %v1395, 4
      %v1398 = vshll.u32 %v1350, 16
      %v1400 = vrot.slane %v1398, 5
      %v1401 = vor.u32 %v1397, %v1400
      %v1402 = vrot.slane %v1401, 4
      %v1404 = vshll.u32 %v1351, 16
      %v1406 = vrot.slane %v1404, 5
      %v1407 = vsel %vm279, %v1402, %v1406
      %s1408 = scalar_lea.vmem %s1, 448
      %v1409 = vld [vmem:[%s1408] sm:$0xf]
      %v1410 = vld [vmem:[%s1408 + $0x4] sm:$0xf]
      %v1411 = vld [vmem:[%s1408 + $0x8] sm:$0xf]
      %v1412 = vld [vmem:[%s1408 + $0xc] sm:$0xf]
      %v1413 = vld [vmem:[%s1408 + $0x10] sm:$0xf]
      %v1414 = vld [vmem:[%s1408 + $0x14] sm:$0xf]
      %v1415 = vld [vmem:[%s1408 + $0x18] sm:$0xf]
      %v1416 = vld [vmem:[%s1408 + $0x1c] sm:$0xf]
      %v1417 = vld [vmem:[%s1408 + $0x20] sm:$0xf]
      %v1418 = vld [vmem:[%s1408 + $0x24] sm:$0xf]
      %v1419 = vld [vmem:[%s1408 + $0x28] sm:$0xf]
      %v1420 = vld [vmem:[%s1408 + $0x2c] sm:$0xf]
      %v1421 = vld [vmem:[%s1408 + $0x30] sm:$0xf]
      %v1422 = vld [vmem:[%s1408 + $0x34] sm:$0xf]
      %v1423 = vld [vmem:[%s1408 + $0x38] sm:$0xf]
      %v1424 = vld [vmem:[%s1408 + $0x3c] sm:$0xf]
      %v1425 = vunpack.c.l.b16 %v1365
      %v1426 = vunpack.c.l.b16 %v1379
      %v1427 = vunpack.c.l.b16 %v1393
      %v1428 = vunpack.c.l.b16 %v1407
      %v1429 = vpack.c.b16 %v1426, %v1425
      %v1430 = vpack.c.b16 %v1428, %v1427
      %v1449 = vunpack.c.l.b16 %v1409
      %v1450 = vunpack.c.l.b16 %v1410
      %v1451 = vunpack.c.l.b16 %v1411
      %v1452 = vunpack.c.l.b16 %v1412
      %v1453 = vunpack.c.l.b16 %v1413
      %v1454 = vunpack.c.l.b16 %v1414
      %v1455 = vunpack.c.l.b16 %v1415
      %v1456 = vunpack.c.l.b16 %v1416
      %v1457 = vunpack.c.l.b16 %v1417
      %v1458 = vunpack.c.l.b16 %v1418
      %v1459 = vunpack.c.l.b16 %v1419
      %v1460 = vunpack.c.l.b16 %v1420
      %v1461 = vunpack.c.l.b16 %v1421
      %v1462 = vunpack.c.l.b16 %v1422
      %v1463 = vunpack.c.l.b16 %v1423
      %v1464 = vunpack.c.l.b16 %v1424
      %v1465 = vpack.c.b16 %v1450, %v1449
      %v1466 = vpack.c.b16 %v1452, %v1451
      %v1467 = vpack.c.b16 %v1454, %v1453
      %v1468 = vpack.c.b16 %v1456, %v1455
      %v1469 = vpack.c.b16 %v1458, %v1457
      %v1470 = vpack.c.b16 %v1460, %v1459
      %v1471 = vpack.c.b16 %v1462, %v1461
      %v1472 = vpack.c.b16 %v1464, %v1463
      %1481 = vmatprep.subr.bf16.mxu0 0
      %1482 = vmatpush1.bf16.msra.mxu0 %v1472
      %1483 = vmatprep.subr.bf16.mxu0 0
      %1484 = vmatpush1.bf16.msra.mxu0 %v1471
      %1485 = vmatprep.subr.bf16.mxu0 0
      %1486 = vmatpush1.bf16.msra.mxu0 %v1470
      %1487 = vmatprep.subr.bf16.mxu0 0
      %1488 = vmatpush1.bf16.msra.mxu0 %v1469
      %1489 = vmatprep.subr.bf16.mxu0 0
      %1490 = vmatpush1.bf16.msra.mxu0 %v1468
      %1491 = vmatprep.subr.bf16.mxu0 0
      %1492 = vmatpush1.bf16.msra.mxu0 %v1467
      %1493 = vmatprep.subr.bf16.mxu0 0
      %1494 = vmatpush1.bf16.msra.mxu0 %v1466
      %1495 = vmatprep.subr.bf16.mxu0 0
      %1496 = vmatpush1.bf16.msra.mxu0 %v1465
      %1497 = vmatprep.subr.bf16.mxu0 0
      %1498 = vmatpush2.bf16.msra.mxu0 0
      %1499 = vmatprep.subr.bf16.mxu0 0
      %1500 = vmatpush2.bf16.msra.mxu0 0
      %1501 = vmatprep.subr.bf16.mxu0 0
      %1502 = vmatpush2.bf16.msra.mxu0 0
      %1503 = vmatprep.subr.bf16.mxu0 0
      %1504 = vmatpush2.bf16.msra.mxu0 0
      %1505 = vmatprep.subr.bf16.mxu0 0
      %1506 = vmatpush2.bf16.msra.mxu0 0
      %1507 = vmatprep.subr.bf16.mxu0 0
      %1508 = vmatpush2.bf16.msra.mxu0 0
      %1509 = vmatprep.subr.bf16.mxu0 0
      %1510 = vmatpush2.bf16.msra.mxu0 0
      %1511 = vmatprep.subr.bf16.mxu0 0
      %1512 = vmatpush2.bf16.msra.mxu0 0
      %1513 = vmatprep.mubr.bf16.mxu0 0
      %1514 = vmatmul.mubr.bf16.gmra.mxu0 %v1429
      %v1515 = vpop.f32.mrf.mxu0
      %v1516 = vadd.f32 0.0, %v1515
      %v1517 = vpop.f32.mrf.mxu0
      %v1518 = vpop.f32.mrf.mxu0
      %v1519 = vadd.f32 0.0, %v1518
      %v1520 = vpop.f32.mrf.mxu0
      %1521 = vmatprep.mubr.bf16.mxu0 0
      %1522 = vmatmul.mubr.bf16.gmra.mxu0 %v1430
      %v1523 = vpop.f32.mrf.mxu0
      %v1524 = vadd.f32 0.0, %v1523
      %v1525 = vpop.f32.mrf.mxu0
      %v1526 = vpop.f32.mrf.mxu0
      %v1527 = vadd.f32 0.0, %v1526
      %v1528 = vpop.f32.mrf.mxu0
      %1529 = vdwg.mxu0
      %v1530 = vadd.f32 %v1340, %v1516
      %v1531 = vadd.f32 %v1341, %v1519
      %v1532 = vadd.f32 %v1342, %v1524
      %v1533 = vadd.f32 %v1343, %v1527
      %v1534 = vld [vmem:[%s1209] sm:$0xe]
      %v1535 = vld [vmem:[%s1209 + $0x8] sm:$0xe]
      %v1536 = vld [vmem:[%s1209 + $0x10] sm:$0xe]
      %v1537 = vld [vmem:[%s1209 + $0x18] sm:$0xe]
      %v1546 = vrot.slane %v1534, 5
      %v1547 = vrot.slane %v1546, 4
      %v1548 = vrot.slane %v1345, 5
      %v1549 = vsel %vm581, %v1547, %v1548
      %v1550 = vrot.slane %v1535, 5
      %v1551 = vrot.slane %v1550, 4
      %v1552 = vrot.slane %v1347, 5
      %v1553 = vsel %vm581, %v1551, %v1552
      %v1554 = vrot.slane %v1536, 5
      %v1555 = vrot.slane %v1554, 4
      %v1556 = vrot.slane %v1349, 5
      %v1557 = vsel %vm581, %v1555, %v1556
      %v1558 = vrot.slane %v1537, 5
      %v1559 = vrot.slane %v1558, 4
      %v1560 = vrot.slane %v1351, 5
      %v1561 = vsel %vm581, %v1559, %v1560
      %s1562 = scalar_lea.vmem %s1, 512
      %v1563 = vld [vmem:[%s1562] sm:$0xf]
      %v1564 = vld [vmem:[%s1562 + $0x4] sm:$0xf]
      %v1565 = vld [vmem:[%s1562 + $0x8] sm:$0xf]
      %v1566 = vld [vmem:[%s1562 + $0xc] sm:$0xf]
      %v1567 = vld [vmem:[%s1562 + $0x10] sm:$0xf]
      %v1568 = vld [vmem:[%s1562 + $0x14] sm:$0xf]
      %v1569 = vld [vmem:[%s1562 + $0x18] sm:$0xf]
      %v1570 = vld [vmem:[%s1562 + $0x1c] sm:$0xf]
      %v1571 = vld [vmem:[%s1562 + $0x20] sm:$0xf]
      %v1572 = vld [vmem:[%s1562 + $0x24] sm:$0xf]
      %v1573 = vld [vmem:[%s1562 + $0x28] sm:$0xf]
      %v1574 = vld [vmem:[%s1562 + $0x2c] sm:$0xf]
      %v1575 = vld [vmem:[%s1562 + $0x30] sm:$0xf]
      %v1576 = vld [vmem:[%s1562 + $0x34] sm:$0xf]
      %v1577 = vld [vmem:[%s1562 + $0x38] sm:$0xf]
      %v1578 = vld [vmem:[%s1562 + $0x3c] sm:$0xf]
      %v1579 = vunpack.c.l.b16 %v1549
      %v1580 = vunpack.c.l.b16 %v1553
      %v1581 = vunpack.c.l.b16 %v1557
      %v1582 = vunpack.c.l.b16 %v1561
      %v1583 = vpack.c.b16 %v1580, %v1579
      %v1584 = vpack.c.b16 %v1582, %v1581
      %v1603 = vunpack.c.l.b16 %v1563
      %v1604 = vunpack.c.l.b16 %v1564
      %v1605 = vunpack.c.l.b16 %v1565
      %v1606 = vunpack.c.l.b16 %v1566
      %v1607 = vunpack.c.l.b16 %v1567
      %v1608 = vunpack.c.l.b16 %v1568
      %v1609 = vunpack.c.l.b16 %v1569
      %v1610 = vunpack.c.l.b16 %v1570
      %v1611 = vunpack.c.l.b16 %v1571
      %v1612 = vunpack.c.l.b16 %v1572
      %v1613 = vunpack.c.l.b16 %v1573
      %v1614 = vunpack.c.l.b16 %v1574
      %v1615 = vunpack.c.l.b16 %v1575
      %v1616 = vunpack.c.l.b16 %v1576
      %v1617 = vunpack.c.l.b16 %v1577
      %v1618 = vunpack.c.l.b16 %v1578
      %v1619 = vpack.c.b16 %v1604, %v1603
      %v1620 = vpack.c.b16 %v1606, %v1605
      %v1621 = vpack.c.b16 %v1608, %v1607
      %v1622 = vpack.c.b16 %v1610, %v1609
      %v1623 = vpack.c.b16 %v1612, %v1611
      %v1624 = vpack.c.b16 %v1614, %v1613
      %v1625 = vpack.c.b16 %v1616, %v1615
      %v1626 = vpack.c.b16 %v1618, %v1617
      %1635 = vmatprep.subr.bf16.mxu0 0
      %1636 = vmatpush1.bf16.msra.mxu0 %v1626
      %1637 = vmatprep.subr.bf16.mxu0 0
      %1638 = vmatpush1.bf16.msra.mxu0 %v1625
      %1639 = vmatprep.subr.bf16.mxu0 0
      %1640 = vmatpush1.bf16.msra.mxu0 %v1624
      %1641 = vmatprep.subr.bf16.mxu0 0
      %1642 = vmatpush1.bf16.msra.mxu0 %v1623
      %1643 = vmatprep.subr.bf16.mxu0 0
      %1644 = vmatpush1.bf16.msra.mxu0 %v1622
      %1645 = vmatprep.subr.bf16.mxu0 0
      %1646 = vmatpush1.bf16.msra.mxu0 %v1621
      %1647 = vmatprep.subr.bf16.mxu0 0
      %1648 = vmatpush1.bf16.msra.mxu0 %v1620
      %1649 = vmatprep.subr.bf16.mxu0 0
      %1650 = vmatpush1.bf16.msra.mxu0 %v1619
      %1651 = vmatprep.subr.bf16.mxu0 0
      %1652 = vmatpush2.bf16.msra.mxu0 0
      %1653 = vmatprep.subr.bf16.mxu0 0
      %1654 = vmatpush2.bf16.msra.mxu0 0
      %1655 = vmatprep.subr.bf16.mxu0 0
      %1656 = vmatpush2.bf16.msra.mxu0 0
      %1657 = vmatprep.subr.bf16.mxu0 0
      %1658 = vmatpush2.bf16.msra.mxu0 0
      %1659 = vmatprep.subr.bf16.mxu0 0
      %1660 = vmatpush2.bf16.msra.mxu0 0
      %1661 = vmatprep.subr.bf16.mxu0 0
      %1662 = vmatpush2.bf16.msra.mxu0 0
      %1663 = vmatprep.subr.bf16.mxu0 0
      %1664 = vmatpush2.bf16.msra.mxu0 0
      %1665 = vmatprep.subr.bf16.mxu0 0
      %1666 = vmatpush2.bf16.msra.mxu0 0
      %1667 = vmatprep.mubr.bf16.mxu0 0
      %1668 = vmatmul.mubr.bf16.gmra.mxu0 %v1583
      %v1669 = vpop.f32.mrf.mxu0
      %v1670 = vadd.f32 0.0, %v1669
      %v1671 = vpop.f32.mrf.mxu0
      %v1672 = vpop.f32.mrf.mxu0
      %v1673 = vadd.f32 0.0, %v1672
      %v1674 = vpop.f32.mrf.mxu0
      %1675 = vmatprep.mubr.bf16.mxu0 0
      %1676 = vmatmul.mubr.bf16.gmra.mxu0 %v1584
      %v1677 = vpop.f32.mrf.mxu0
      %v1678 = vadd.f32 0.0, %v1677
      %v1679 = vpop.f32.mrf.mxu0
      %v1680 = vpop.f32.mrf.mxu0
      %v1681 = vadd.f32 0.0, %v1680
      %v1682 = vpop.f32.mrf.mxu0
      %1683 = vdwg.mxu0
      %v1684 = vadd.f32 %v1530, %v1670
      %v1685 = vadd.f32 %v1531, %v1673
      %v1686 = vadd.f32 %v1532, %v1678
      %v1687 = vadd.f32 %v1533, %v1681
      %1688 = vst [vmem:[%s232] sm:$0xff] %v1684
      %1689 = vst [vmem:[%s232 + $0x8] sm:$0xff] %v1685
      %1690 = vst [vmem:[%s232 + $0x10] sm:$0xff] %v1686
      %1691 = vst [vmem:[%s232 + $0x18] sm:$0xff] %v1687
      %v1692 = vld [vmem:[%s237] sm:$0xff]
      %v1693 = vadd.f32 %v1684, %v1685
      %v1694 = vadd.f32 %v1693, %v1686
      %v1695 = vadd.f32 %v1694, %v1687
      %v1696 = vrot.slane %v1695, 4
      %v1697 = vadd.f32 %v1695, %v1696
      %v1698 = vrot.slane %v1697, 2
      %v1699 = vadd.f32 %v1697, %v1698
      %v1700 = vrot.slane %v1699, 1
      %v1701 = vadd.f32 %v1699, %v1700
      %v1702 = vadd.f32 %v1692, %v1701
      %1703 = vst [vmem:[%s237] sm:$0xff] %v1702
      %v1704 = vld [vmem:[%s241] sm:$0xff]
      %v1705 = vmul.f32 %v1684, %v1684
      %v1706 = vmul.f32 %v1685, %v1685
      %v1707 = vmul.f32 %v1686, %v1686
      %v1708 = vmul.f32 %v1687, %v1687
      %v1709 = vadd.f32 %v1705, %v1706
      %v1710 = vadd.f32 %v1709, %v1707
      %v1711 = vadd.f32 %v1710, %v1708
      %v1712 = vrot.slane %v1711, 4
      %v1713 = vadd.f32 %v1711, %v1712
      %v1714 = vrot.slane %v1713, 2
      %v1715 = vadd.f32 %v1713, %v1714
      %v1716 = vrot.slane %v1715, 1
      %v1717 = vadd.f32 %v1715, %v1716
      %v1718 = vadd.f32 %v1704, %v1717
      %1719 = vst [vmem:[%s241] sm:$0xff] %v1718
      %s1720 = smul.u32 4, %s21
      %p1721 = scmp.lt.s32.totalorder %s20, 1
      %s1722 = scalar_select %p1721, %s20, 1
      %p1723 = scmp.lt.s32.totalorder %s1720, 7
      %s1724 = scalar_select %p1723, %s1720, 7
      %s1725 = smul.addr %s1722, 8
      %s1726 = sadd.s32 %s1724, %s1725
      %s1727 = smul.addr %s1726, 8
      %s1728 = scalar_lea.vmem %s2, %s1727
      %p1729 = scmp.lt.s32.totalorder %s20, 1
      %s1730 = scalar_select %p1729, %s20, 1
      %s1731 = smul.addr %s1730, 8
      %s1732 = scalar_lea.vmem %s3, %s1731
      %p1733 = scmp.lt.s32.totalorder %s20, 1
      %s1734 = scalar_select %p1733, %s20, 1
      %s1735 = smul.addr %s1734, 8
      %s1736 = scalar_lea.vmem %s4, %s1735
      // Predicated region
      $region33: #{resnet_block_forward.8} parent=27 // pred_check
        %p1737 = pneg %p95
      $region34: #{resnet_block_forward.8} parent=27 // pred_check_branch
        %1739 = sbr.rel (%p1737) target = $region36
      $region35: #{resnet_block_forward.8} parent=27 // pred_region
        %s1740 = smul.u32 4, %s21
      $region36: #{resnet_block_forward.8} parent=27 // pred_fallthru
        _
      // Predicated region
      $region37: #{resnet_block_forward.8} parent=27 // pred_check
        %p1741 = pneg %p121
      $region38: #{resnet_block_forward.8} parent=27 // pred_check_branch
        %1743 = sbr.rel (%p1741) target = $region40
      $region39: #{resnet_block_forward.8} parent=27 // pred_region
        _
      $region40: #{resnet_block_forward.8} parent=27 // pred_fallthru
        _
      // Predicated region
      $region41: #{resnet_block_forward.8} parent=27 // pred_check
        %p1744 = pneg %p147
      $region42: #{resnet_block_forward.8} parent=27 // pred_check_branch
        %1746 = sbr.rel (%p1744) target = $region44
      $region43: #{resnet_block_forward.8} parent=27 // pred_region
        _
      $region44: #{resnet_block_forward.8} parent=27 // pred_fallthru
        _
    $region28: #{resnet_block_forward.8} parent=5 // pred_fallthru
      _
    %p1747 = scmp.le.s32.totalorder 2, %s11
    // Predicated region
    $region45: #{resnet_block_forward.8} parent=5 // pred_check
      %p1748 = pneg %p1747
    $region46: #{resnet_block_forward.8} parent=5 // pred_check_branch
      %1750 = sbr.rel (%p1748) target = $region48
    $region47: #{resnet_block_forward.8} parent=5 // pred_region
      %s1751 = ssub.s32 %s11, 2
      // Predicated region
      $region49: #{resnet_block_forward.8} parent=47 // pred_check
        %p1752 = pneg %p101
      $region50: #{resnet_block_forward.8} parent=47 // pred_check_branch
        %1754 = sbr.rel (%p1752) target = $region52
      $region51: #{resnet_block_forward.8} parent=47 // pred_region
        %s1755 = smul.u32 4, %s23
        %p1756 = scmp.lt.s32.totalorder %s22, 1
        %s1757 = scalar_select %p1756, %s22, 1
        %p1758 = scmp.lt.s32.totalorder %s1755, 7
        %s1759 = scalar_select %p1758, %s1755, 7
        %s1760 = smul.addr %s1757, 8
        %s1761 = sadd.s32 %s1759, %s1760
        %s1762 = smul.addr %s1761, 8
        %s1763 = scalar_lea.vmem %s2, %s1762
      $region52: #{resnet_block_forward.8} parent=47 // pred_fallthru
        _
      // Predicated region
      $region53: #{resnet_block_forward.8} parent=47 // pred_check
        %p1764 = pneg %p127
      $region54: #{resnet_block_forward.8} parent=47 // pred_check_branch
        %1766 = sbr.rel (%p1764) target = $region56
      $region55: #{resnet_block_forward.8} parent=47 // pred_region
        %p1767 = scmp.lt.s32.totalorder %s22, 1
        %s1768 = scalar_select %p1767, %s22, 1
        %s1769 = smul.addr %s1768, 8
        %s1770 = scalar_lea.vmem %s3, %s1769
      $region56: #{resnet_block_forward.8} parent=47 // pred_fallthru
        _
      // Predicated region
      $region57: #{resnet_block_forward.8} parent=47 // pred_check
        %p1771 = pneg %p153
      $region58: #{resnet_block_forward.8} parent=47 // pred_check_branch
        %1773 = sbr.rel (%p1771) target = $region60
      $region59: #{resnet_block_forward.8} parent=47 // pred_region
        %p1774 = scmp.lt.s32.totalorder %s22, 1
        %s1775 = scalar_select %p1774, %s22, 1
        %s1776 = smul.addr %s1775, 8
        %s1777 = scalar_lea.vmem %s4, %s1776
      $region60: #{resnet_block_forward.8} parent=47 // pred_fallthru
        _
    $region48: #{resnet_block_forward.8} parent=5 // pred_fallthru
      _
  $region6: #{resnet_block_forward.8} parent=0 // loop_footer
    %s15 = sadd.s32 1, %s11
  $region7: #{resnet_block_forward.8} parent=0 // loop_footer_branch
    %10 = sbr.rel target = $region3
  $region8: #{resnet_block_forward.8} parent=0 // loop_exit
    _

// kernel: resnet_block_forward.11
$region0: #{resnet_block_forward.11}
  #allocation0 [shape = 'u32[]', space=smem, size = 0x4, offset = 0x4, fixed_abs, tag = 'smem constant byte address 0x4 - core index']
  #allocation1 [shape = 'u32[144,128]{1,0:T(1,128)}', space=vmem, size = 0x12000, scoped, tag = 'internal scratch']
  %s0 = inlined_call_operand.vmem [shape: f32[2,4,4,512], index: 0, kind: input, shape index: {}]
  %s1 = inlined_call_operand.vmem [shape: f32[1,128], index: 1, kind: input, shape index: {}]
  %s2 = inlined_call_operand.vmem [shape: f32[1,128], index: 2, kind: input, shape index: {}]
  %s3 = inlined_call_operand.vmem [shape: f32[1,128], index: 3, kind: input, shape index: {}]
  %s4 = inlined_call_operand.vmem [shape: f32[1,128], index: 4, kind: input, shape index: {}]
  %s5 = inlined_call_operand.vmem [shape: f32[2,4,4,128], index: 5, kind: output, shape index: {}]
  %s6 = sld [smem:[#allocation0]]
  $region53: #{resnet_block_forward.11} parent=0
    _
  %s8 = ssub.s32 1, %s6
  %s9 = scalar_select 0, %s8, %s6
  loop: start=0, step=1, limit=4
  $region2: #{resnet_block_forward.11} parent=0 // loop_pre_header
    _
  $region3: #{resnet_block_forward.11} parent=0 // loop_header
    %s11 = sphi 0, %s15
    %p12 = scmp.ge.s32.totalorder %s11, 4
    %s18 = sphi 0, %s30
    %s19 = sphi 0, %s26
    %s20 = sphi 0, %s18
    %s21 = sphi 0, %s19
    %s22 = sphi 0, %s20
    %s23 = sphi 0, %s21
    %s35 = sphi 0, %s37
    %s38 = sphi 0, %s35
    %s39 = sphi 0, %s38
    %s55 = sphi 0, %s39
    %s59 = sphi 0, %s59
    %s61 = sphi 0, %s59
    %s62 = sphi 0, %s61
    %s76 = sphi 0, %s62
    %s80 = sphi 0, %s80
    %s82 = sphi 0, %s80
    %s83 = sphi 0, %s82
    %s97 = sphi 0, %s83
    %s101 = sphi 0, %s101
    %s103 = sphi 0, %s101
    %s104 = sphi 0, %s103
    %s118 = sphi 0, %s104
    %s122 = sphi 0, %s122
    %s124 = sphi 0, %s122
    %s125 = sphi 0, %s124
    %s139 = sphi 0, %s125
    %s147 = sphi 0, %s149
    %s150 = sphi 0, %s147
    %s151 = sphi 0, %s150
    %s167 = sphi 0, %s151
  $region4: #{resnet_block_forward.11} parent=0 // loop_header_branch
    %14 = sbr.rel (%p12) target = $region8
  $region5: #{resnet_block_forward.11} parent=0 // loop_body
    %s16 = ssub.s32 %s11, 1
    %s17 = ssub.s32 %s11, 2
    %s24 = sadd.s32 1, %s19
    %p25 = scmp.ge.s32.totalorder %s24, 1
    %s26 = scalar_select %p25, 0, %s24
    %s27 = sadd.s32 1, %s18
    %s28 = scalar_select %p25, %s27, %s18
    %p29 = scmp.ge.s32.totalorder %s28, 2
    %s30 = scalar_select %p29, 0, %s28
    %s31 = ssub.s32 %s18, %s30
    %s32 = ssub.s32 %s19, %s26
    %s33 = sor.u32 %s31, %s32
    %p34 = scmp.eq.s32.totalorder %s33, 0
    %s36 = sadd.s32 %s35, 1
    %s37 = scalar_select %p34, %s35, %s36
    %p40 = pneg %p34
    %p41 = scmp.eq.s32.totalorder %s11, 1
    %p42 = por %p40, %p41
    %p43 = scmp.ne.s32.totalorder %s35, %s38
    %p44 = scmp.eq.s32.totalorder %s11, 0
    %p45 = por %p43, %p44
    %p46 = scmp.ne.s32.totalorder %s35, %s38
    %p47 = scmp.eq.s32.totalorder %s16, 1
    %p48 = por %p46, %p47
    %p49 = scmp.ne.s32.totalorder %s38, %s39
    %p50 = scmp.eq.s32.totalorder %s16, 0
    %p51 = por %p49, %p50
    %p52 = scmp.ne.s32.totalorder %s38, %s39
    %p53 = scmp.eq.s32.totalorder %s17, 1
    %p54 = por %p52, %p53
    %p56 = scmp.ne.s32.totalorder %s39, %s55
    %p57 = scmp.eq.s32.totalorder %s17, 0
    %p58 = por %p56, %p57
    %s60 = sadd.s32 %s59, 1
    %p63 = scmp.eq.s32.totalorder %s11, 1
    %p64 = scmp.ne.s32.totalorder %s59, %s61
    %p65 = scmp.eq.s32.totalorder %s11, 0
    %p66 = por %p64, %p65
    %p67 = scmp.ne.s32.totalorder %s59, %s61
    %p68 = scmp.eq.s32.totalorder %s16, 1
    %p69 = por %p67, %p68
    %p70 = scmp.ne.s32.totalorder %s61, %s62
    %p71 = scmp.eq.s32.totalorder %s16, 0
    %p72 = por %p70, %p71
    %p73 = scmp.ne.s32.totalorder %s61, %s62
    %p74 = scmp.eq.s32.totalorder %s17, 1
    %p75 = por %p73, %p74
    %p77 = scmp.ne.s32.totalorder %s62, %s76
    %p78 = scmp.eq.s32.totalorder %s17, 0
    %p79 = por %p77, %p78
    %s81 = sadd.s32 %s80, 1
    %p84 = scmp.eq.s32.totalorder %s11, 1
    %p85 = scmp.ne.s32.totalorder %s80, %s82
    %p86 = scmp.eq.s32.totalorder %s11, 0
    %p87 = por %p85, %p86
    %p88 = scmp.ne.s32.totalorder %s80, %s82
    %p89 = scmp.eq.s32.totalorder %s16, 1
    %p90 = por %p88, %p89
    %p91 = scmp.ne.s32.totalorder %s82, %s83
    %p92 = scmp.eq.s32.totalorder %s16, 0
    %p93 = por %p91, %p92
    %p94 = scmp.ne.s32.totalorder %s82, %s83
    %p95 = scmp.eq.s32.totalorder %s17, 1
    %p96 = por %p94, %p95
    %p98 = scmp.ne.s32.totalorder %s83, %s97
    %p99 = scmp.eq.s32.totalorder %s17, 0
    %p100 = por %p98, %p99
    %s102 = sadd.s32 %s101, 1
    %p105 = scmp.eq.s32.totalorder %s11, 1
    %p106 = scmp.ne.s32.totalorder %s101, %s103
    %p107 = scmp.eq.s32.totalorder %s11, 0
    %p108 = por %p106, %p107
    %p109 = scmp.ne.s32.totalorder %s101, %s103
    %p110 = scmp.eq.s32.totalorder %s16, 1
    %p111 = por %p109, %p110
    %p112 = scmp.ne.s32.totalorder %s103, %s104
    %p113 = scmp.eq.s32.totalorder %s16, 0
    %p114 = por %p112, %p113
    %p115 = scmp.ne.s32.totalorder %s103, %s104
    %p116 = scmp.eq.s32.totalorder %s17, 1
    %p117 = por %p115, %p116
    %p119 = scmp.ne.s32.totalorder %s104, %s118
    %p120 = scmp.eq.s32.totalorder %s17, 0
    %p121 = por %p119, %p120
    %s123 = sadd.s32 %s122, 1
    %p126 = scmp.eq.s32.totalorder %s11, 1
    %p127 = scmp.ne.s32.totalorder %s122, %s124
    %p128 = scmp.eq.s32.totalorder %s11, 0
    %p129 = por %p127, %p128
    %p130 = scmp.ne.s32.totalorder %s122, %s124
    %p131 = scmp.eq.s32.totalorder %s16, 1
    %p132 = por %p130, %p131
    %p133 = scmp.ne.s32.totalorder %s124, %s125
    %p134 = scmp.eq.s32.totalorder %s16, 0
    %p135 = por %p133, %p134
    %p136 = scmp.ne.s32.totalorder %s124, %s125
    %p137 = scmp.eq.s32.totalorder %s17, 1
    %p138 = por %p136, %p137
    %p140 = scmp.ne.s32.totalorder %s125, %s139
    %p141 = scmp.eq.s32.totalorder %s17, 0
    %p142 = por %p140, %p141
    %s143 = ssub.s32 %s18, %s30
    %s144 = ssub.s32 %s19, %s26
    %s145 = sor.u32 %s143, %s144
    %p146 = scmp.eq.s32.totalorder %s145, 0
    %s148 = sadd.s32 %s147, 1
    %s149 = scalar_select %p146, %s147, %s148
    %p152 = pneg %p146
    %p153 = scmp.eq.s32.totalorder %s11, 1
    %p154 = por %p152, %p153
    %p155 = scmp.ne.s32.totalorder %s147, %s150
    %p156 = scmp.eq.s32.totalorder %s11, 0
    %p157 = por %p155, %p156
    %p158 = scmp.ne.s32.totalorder %s147, %s150
    %p159 = scmp.eq.s32.totalorder %s16, 1
    %p160 = por %p158, %p159
    %p161 = scmp.ne.s32.totalorder %s150, %s151
    %p162 = scmp.eq.s32.totalorder %s16, 0
    %p163 = por %p161, %p162
    %p164 = scmp.ne.s32.totalorder %s150, %s151
    %p165 = scmp.eq.s32.totalorder %s17, 1
    %p166 = por %p164, %p165
    %p168 = scmp.ne.s32.totalorder %s151, %s167
    %p169 = scmp.eq.s32.totalorder %s17, 0
    %p170 = por %p168, %p169
    %p171 = scmp.le.s32.totalorder 1, %s11
    %p172 = scmp.lt.s32.totalorder %s11, 3
    %p173 = pnand %p171, %p172
    %p174 = pneg %p173
    // Predicated region
    $region9: #{resnet_block_forward.11} parent=5 // pred_check
      _
    $region10: #{resnet_block_forward.11} parent=5 // pred_check_branch
      %176 = sbr.rel (%p173) target = $region12
    $region11: #{resnet_block_forward.11} parent=5 // pred_region
      %s177 = ssub.s32 %s11, 1
      // Predicated region
      $region13: #{resnet_block_forward.11} parent=11 // pred_check
        %p178 = pneg %p72
      $region14: #{resnet_block_forward.11} parent=11 // pred_check_branch
        %180 = sbr.rel (%p178) target = $region16
      $region15: #{resnet_block_forward.11} parent=11 // pred_region
        _
      $region16: #{resnet_block_forward.11} parent=11 // pred_fallthru
        _
      // Predicated region
      $region17: #{resnet_block_forward.11} parent=11 // pred_check
        %p181 = pneg %p93
      $region18: #{resnet_block_forward.11} parent=11 // pred_check_branch
        %183 = sbr.rel (%p181) target = $region20
      $region19: #{resnet_block_forward.11} parent=11 // pred_region
        _
      $region20: #{resnet_block_forward.11} parent=11 // pred_fallthru
        _
      // Predicated region
      $region21: #{resnet_block_forward.11} parent=11 // pred_check
        %p184 = pneg %p114
      $region22: #{resnet_block_forward.11} parent=11 // pred_check_branch
        %186 = sbr.rel (%p184) target = $region24
      $region23: #{resnet_block_forward.11} parent=11 // pred_region
        _
      $region24: #{resnet_block_forward.11} parent=11 // pred_fallthru
        _
      // Predicated region
      $region25: #{resnet_block_forward.11} parent=11 // pred_check
        %p187 = pneg %p135
      $region26: #{resnet_block_forward.11} parent=11 // pred_check_branch
        %189 = sbr.rel (%p187) target = $region28
      $region27: #{resnet_block_forward.11} parent=11 // pred_region
        _
      $region28: #{resnet_block_forward.11} parent=11 // pred_fallthru
        _
    $region12: #{resnet_block_forward.11} parent=5 // pred_fallthru
      _
    %p190 = scmp.lt.s32.totalorder %s11, 2
    // Predicated region
    $region29: #{resnet_block_forward.11} parent=5 // pred_check
      %p191 = pneg %p190
    $region30: #{resnet_block_forward.11} parent=5 // pred_check_branch
      %193 = sbr.rel (%p191) target = $region32
    $region31: #{resnet_block_forward.11} parent=5 // pred_region
      // Predicated region
      $region33: #{resnet_block_forward.11} parent=31 // pred_check
        %p194 = pneg %p45
      $region34: #{resnet_block_forward.11} parent=31 // pred_check_branch
        %196 = sbr.rel (%p194) target = $region36
      $region35: #{resnet_block_forward.11} parent=31 // pred_region
        %s197 = smul.u32 4, %s19
        %p198 = scmp.lt.s32.totalorder %s18, 1
        %s199 = scalar_select %p198, %s18, 1
        %p200 = scmp.lt.s32.totalorder %s197, 3
        %s201 = scalar_select %p200, %s197, 3
        %s202 = smul.addr %s201, 4
        %s203 = smul.addr %s199, 16
        %s204 = sadd.s32 %s202, %s203
        %s205 = smul.addr %s204, 4
        %s206 = scalar_lea.vmem %s0, %s205
        %s207 = smul.u32 4, %s19
      $region36: #{resnet_block_forward.11} parent=31 // pred_fallthru
        _
    $region32: #{resnet_block_forward.11} parent=5 // pred_fallthru
      _
    %p208 = scmp.le.s32.totalorder 1, %s11
    %p209 = scmp.lt.s32.totalorder %s11, 3
    %p210 = pnand %p208, %p209
    %p211 = pneg %p210
    // Predicated region
    $region37: #{resnet_block_forward.11} parent=5 // pred_check
      _
    $region38: #{resnet_block_forward.11} parent=5 // pred_check_branch
      %213 = sbr.rel (%p210) target = $region40
    $region39: #{resnet_block_forward.11} parent=5 // pred_region
      %s214 = ssub.s32 %s11, 1
      %s215 = smul.u32 4, %s21
      %p216 = scmp.lt.s32.totalorder %s20, 1
      %s217 = scalar_select %p216, %s20, 1
      %p218 = scmp.lt.s32.totalorder %s215, 3
      %s219 = scalar_select %p218, %s215, 3
      %s220 = smul.addr %s219, 4
      %s221 = smul.addr %s217, 16
      %s222 = sadd.s32 %s220, %s221
      %s223 = smul.addr %s222, 4
      %s224 = scalar_lea.vmem %s0, %s223
      %p225 = pneg %p51
      %p226 = pneg %p48
      %p227 = pneg %p72
      %p228 = pneg %p69
      %p229 = pneg %p93
      %p230 = pneg %p90
      %p231 = pneg %p114
      %p232 = pneg %p111
      %p233 = pneg %p135
      %p234 = pneg %p132
      %p235 = pneg %p163
      %p236 = pneg %p160
      %s237 = smul.u32 4, %s21
      %p238 = scmp.lt.s32.totalorder %s20, 1
      %s239 = scalar_select %p238, %s20, 1
      %p240 = scmp.lt.s32.totalorder %s237, 3
      %s241 = scalar_select %p240, %s237, 3
      %s242 = smul.addr %s239, 4
      %s243 = sadd.s32 %s241, %s242
      %s244 = smul.addr %s243, 4
      %s245 = scalar_lea.vmem %s5, %s244
      %s246 = smul.u32 4, %s21
      %p247 = scmp.lt.s32.totalorder %s20, 1
      %s248 = scalar_select %p247, %s20, 1
      %p249 = scmp.lt.s32.totalorder %s246, 3
      %s250 = scalar_select %p249, %s246, 3
      %s251 = smul.addr %s250, 4
      %s252 = smul.addr %s248, 16
      %s253 = sadd.s32 %s251, %s252
      %s254 = smul.addr %s253, 4
      %s255 = scalar_lea.vmem %s0, %s254
      %s256 = smul.u32 4, %s21
      %s257 = smul.u32 4, %s21
      %p258 = scmp.lt.s32.totalorder %s20, 1
      %s259 = scalar_select %p258, %s20, 1
      %p260 = scmp.lt.s32.totalorder %s257, 3
      %s261 = scalar_select %p260, %s257, 3
      %s262 = smul.addr %s259, 4
      %s263 = sadd.s32 %s261, %s262
      %s264 = smul.addr %s263, 4
      %s265 = scalar_lea.vmem %s5, %s264
      %s266 = smul.u32 4, %s21
      %v267 = vld [vmem:[%s2] sm:$0x1]
      %v268 = vadd.f32 %v267, 1e-05
      %v269 = vrsqrt.pop %v268
      %v270 = vld [vmem:[%s1] sm:$0x1]
      %v271 = vld [vmem:[%s3] sm:$0x1]
      %v272 = vld [vmem:[%s4] sm:$0x1]
      %v273 = vld [vmem:[%s255] sm:$0xf]
      %v274 = vld [vmem:[%s255 + $0x10] sm:$0xf]
      %v275 = vld [vmem:[%s255 + $0x20] sm:$0xf]
      %v276 = vld [vmem:[%s255 + $0x30] sm:$0xf]
      %v278 = vlaneseq
      %v279 = vshrl.u32 %v278, 7
      %v280 = vsub.s32 0, %v279
      %v281 = vrot.slane %v270, %v280
      %v283 = vsub.f32 %v273, %v281
      %v284 = vsub.f32 %v274, %v281
      %v285 = vsub.f32 %v275, %v281
      %v286 = vsub.f32 %v276, %v281
      %v288 = vlaneseq
      %v289 = vshrl.u32 %v288, 7
      %v290 = vsub.s32 0, %v289
      %v291 = vrot.slane %v269, %v290
      %v293 = vmul.f32 %v283, %v291
      %v294 = vmul.f32 %v284, %v291
      %v295 = vmul.f32 %v285, %v291
      %v296 = vmul.f32 %v286, %v291
      %v298 = vlaneseq
      %v299 = vshrl.u32 %v298, 7
      %v300 = vsub.s32 0, %v299
      %v301 = vrot.slane %v271, %v300
      %v303 = vmul.f32 %v293, %v301
      %v304 = vmul.f32 %v294, %v301
      %v305 = vmul.f32 %v295, %v301
      %v306 = vmul.f32 %v296, %v301
      %v308 = vlaneseq
      %v309 = vshrl.u32 %v308, 7
      %v310 = vsub.s32 0, %v309
      %v311 = vrot.slane %v272, %v310
      %v313 = vadd.f32 %v303, %v311
      %v314 = vadd.f32 %v304, %v311
      %v315 = vadd.f32 %v305, %v311
      %v316 = vadd.f32 %v306, %v311
      %v317 = vmax.f32 %v313, 0.0
      %v318 = vmax.f32 %v314, 0.0
      %v319 = vmax.f32 %v315, 0.0
      %v320 = vmax.f32 %v316, 0.0
      %v321 = vld [vmem:[%s255 + $0x4] sm:$0xf]
      %v322 = vld [vmem:[%s255 + $0x14] sm:$0xf]
      %v323 = vld [vmem:[%s255 + $0x24] sm:$0xf]
      %v324 = vld [vmem:[%s255 + $0x34] sm:$0xf]
      %v325 = vsub.f32 %v321, %v281
      %v326 = vsub.f32 %v322, %v281
      %v327 = vsub.f32 %v323, %v281
      %v328 = vsub.f32 %v324, %v281
      %v329 = vmul.f32 %v325, %v291
      %v330 = vmul.f32 %v326, %v291
      %v331 = vmul.f32 %v327, %v291
      %v332 = vmul.f32 %v328, %v291
      %v333 = vmul.f32 %v329, %v301
      %v334 = vmul.f32 %v330, %v301
      %v335 = vmul.f32 %v331, %v301
      %v336 = vmul.f32 %v332, %v301
      %v337 = vadd.f32 %v333, %v311
      %v338 = vadd.f32 %v334, %v311
      %v339 = vadd.f32 %v335, %v311
      %v340 = vadd.f32 %v336, %v311
      %v341 = vmax.f32 %v337, 0.0
      %v342 = vmax.f32 %v338, 0.0
      %v343 = vmax.f32 %v339, 0.0
      %v344 = vmax.f32 %v340, 0.0
      %v345 = vmax.f32 %v317, %v341
      %v346 = vmax.f32 %v318, %v342
      %v347 = vmax.f32 %v319, %v343
      %v348 = vmax.f32 %v320, %v344
      %v349 = vld [vmem:[%s255 + $0x8] sm:$0xf]
      %v350 = vld [vmem:[%s255 + $0x18] sm:$0xf]
      %v351 = vld [vmem:[%s255 + $0x28] sm:$0xf]
      %v352 = vld [vmem:[%s255 + $0x38] sm:$0xf]
      %v353 = vsub.f32 %v349, %v281
      %v354 = vsub.f32 %v350, %v281
      %v355 = vsub.f32 %v351, %v281
      %v356 = vsub.f32 %v352, %v281
      %v357 = vmul.f32 %v353, %v291
      %v358 = vmul.f32 %v354, %v291
      %v359 = vmul.f32 %v355, %v291
      %v360 = vmul.f32 %v356, %v291
      %v361 = vmul.f32 %v357, %v301
      %v362 = vmul.f32 %v358, %v301
      %v363 = vmul.f32 %v359, %v301
      %v364 = vmul.f32 %v360, %v301
      %v365 = vadd.f32 %v361, %v311
      %v366 = vadd.f32 %v362, %v311
      %v367 = vadd.f32 %v363, %v311
      %v368 = vadd.f32 %v364, %v311
      %v369 = vmax.f32 %v365, 0.0
      %v370 = vmax.f32 %v366, 0.0
      %v371 = vmax.f32 %v367, 0.0
      %v372 = vmax.f32 %v368, 0.0
      %v373 = vmax.f32 %v345, %v369
      %v374 = vmax.f32 %v346, %v370
      %v375 = vmax.f32 %v347, %v371
      %v376 = vmax.f32 %v348, %v372
      %v377 = vld [vmem:[%s255 + $0xc] sm:$0xf]
      %v378 = vld [vmem:[%s255 + $0x1c] sm:$0xf]
      %v379 = vld [vmem:[%s255 + $0x2c] sm:$0xf]
      %v380 = vld [vmem:[%s255 + $0x3c] sm:$0xf]
      %v381 = vsub.f32 %v377, %v281
      %v382 = vsub.f32 %v378, %v281
      %v383 = vsub.f32 %v379, %v281
      %v384 = vsub.f32 %v380, %v281
      %v385 = vmul.f32 %v381, %v291
      %v386 = vmul.f32 %v382, %v291
      %v387 = vmul.f32 %v383, %v291
      %v388 = vmul.f32 %v384, %v291
      %v389 = vmul.f32 %v385, %v301
      %v390 = vmul.f32 %v386, %v301
      %v391 = vmul.f32 %v387, %v301
      %v392 = vmul.f32 %v388, %v301
      %v393 = vadd.f32 %v389, %v311
      %v394 = vadd.f32 %v390, %v311
      %v395 = vadd.f32 %v391, %v311
      %v396 = vadd.f32 %v392, %v311
      %v397 = vmax.f32 %v393, 0.0
      %v398 = vmax.f32 %v394, 0.0
      %v399 = vmax.f32 %v395, 0.0
      %v400 = vmax.f32 %v396, 0.0
      %v401 = vmax.f32 %v373, %v397
      %v402 = vmax.f32 %v374, %v398
      %v403 = vmax.f32 %v375, %v399
      %v404 = vmax.f32 %v376, %v400
      %405 = vst [vmem:[%s265] sm:$0xf] %v401
      %406 = vst [vmem:[%s265 + $0x4] sm:$0xf] %v402
      %407 = vst [vmem:[%s265 + $0x8] sm:$0xf] %v403
      %408 = vst [vmem:[%s265 + $0xc] sm:$0xf] %v404
      %s409 = smul.u32 4, %s21
      %p410 = scmp.lt.s32.totalorder %s20, 1
      %s411 = scalar_select %p410, %s20, 1
      %p412 = scmp.lt.s32.totalorder %s409, 3
      %s413 = scalar_select %p412, %s409, 3
      %s414 = smul.addr %s411, 4
      %s415 = sadd.s32 %s413, %s414
      %s416 = smul.addr %s415, 4
      %s417 = scalar_lea.vmem %s5, %s416
      // Predicated region
      $region41: #{resnet_block_forward.11} parent=39 // pred_check
        %p418 = pneg %p160
      $region42: #{resnet_block_forward.11} parent=39 // pred_check_branch
        %420 = sbr.rel (%p418) target = $region44
      $region43: #{resnet_block_forward.11} parent=39 // pred_region
        %s421 = smul.u32 4, %s21
      $region44: #{resnet_block_forward.11} parent=39 // pred_fallthru
        _
    $region40: #{resnet_block_forward.11} parent=5 // pred_fallthru
      _
    %p422 = scmp.le.s32.totalorder 2, %s11
    // Predicated region
    $region45: #{resnet_block_forward.11} parent=5 // pred_check
      %p423 = pneg %p422
    $region46: #{resnet_block_forward.11} parent=5 // pred_check_branch
      %425 = sbr.rel (%p423) target = $region48
    $region47: #{resnet_block_forward.11} parent=5 // pred_region
      %s426 = ssub.s32 %s11, 2
      // Predicated region
      $region49: #{resnet_block_forward.11} parent=47 // pred_check
        %p427 = pneg %p166
      $region50: #{resnet_block_forward.11} parent=47 // pred_check_branch
        %429 = sbr.rel (%p427) target = $region52
      $region51: #{resnet_block_forward.11} parent=47 // pred_region
        %s430 = smul.u32 4, %s23
        %p431 = scmp.lt.s32.totalorder %s22, 1
        %s432 = scalar_select %p431, %s22, 1
        %p433 = scmp.lt.s32.totalorder %s430, 3
        %s434 = scalar_select %p433, %s430, 3
        %s435 = smul.addr %s432, 4
        %s436 = sadd.s32 %s434, %s435
        %s437 = smul.addr %s436, 4
        %s438 = scalar_lea.vmem %s5, %s437
      $region52: #{resnet_block_forward.11} parent=47 // pred_fallthru
        _
    $region48: #{resnet_block_forward.11} parent=5 // pred_fallthru
      _
  $region6: #{resnet_block_forward.11} parent=0 // loop_footer
    %s15 = sadd.s32 1, %s11
  $region7: #{resnet_block_forward.11} parent=0 // loop_footer_branch
    %10 = sbr.rel target = $region3
  $region8: #{resnet_block_forward.11} parent=0 // loop_exit
    _

</llo_original>
